<compile_context>
chip_gen: v5e
topology: v5e:2x2
jax: 0.10.0
libtpu: 0.0.40
codegen_flags: <defaults>
</compile_context>

<pallas_src>
import numpy as np

import jax
import jax.numpy as jnp
from jax.experimental import pallas as pl
from jax.experimental.pallas import tpu as pltpu


_ORDER_MAP = (0, 2, 4, 6, 1, 3, 5, 7)                       # AWQ gemm_pack nibble order
_INV_ORDER = tuple(_ORDER_MAP.index(j) for j in range(8))   # slot holding column j of a group
_SHIFTS = tuple(4 * s for s in _INV_ORDER)                  # [0, 16, 4, 20, 8, 24, 12, 28]


def _round_up(a, b):
    return ((a + b - 1) // b) * b


# ----------------------- load-time repack (offline, host side) -----------------------

def awq_prepack_for_tpu(qweight, scales, qzeros=None, bias=None, *, group_size, w_bit=4):
    """One-time repack of AWQ gemm_pack buffers into the TPU kernel's layout.

    New packing: int32 word g holds natural output columns {j*N8 + g : j in 0..7},
    with column j*N8+g in the nibble at bit 4*j.  The kernel's plane-major output is
    then a free reshape away from natural column order (no output transpose pass).
    """
    assert w_bit == 4, "only 4-bit gemm_pack is supported"
    qw = np.ascontiguousarray(np.asarray(qweight)).view(np.uint32)
    K, N8 = qw.shape
    N = 8 * N8
    assert K % group_size == 0
    Gr = K // group_size

    # gemm_pack -> natural column order (column 8*g + j sits at shift _SHIFTS[j] of word g)
    w_nat = np.empty((K, N), np.uint32)
    for j in range(8):
        w_nat[:, j::8] = (qw >> np.uint32(_SHIFTS[j])) & np.uint32(0xF)

    # natural -> plane-major packing (column j*N8 + g at shift 4*j of word g)
    qw_tpu = np.zeros((K, N8), np.uint32)
    for j in range(8):
        qw_tpu |= w_nat[:, j * N8:(j + 1) * N8] << np.uint32(4 * j)
    qw_tpu = jnp.asarray(qw_tpu.view(np.int32))

    scales3 = jnp.asarray(scales, jnp.float32).reshape(Gr, 8, N8)

    if qzeros is not None:
        qz = np.ascontiguousarray(np.asarray(qzeros)).view(np.uint32)
        z_nat = np.empty((Gr, N), np.float32)
        for j in range(8):
            z_nat[:, j::8] = ((qz >> np.uint32(_SHIFTS[j])) & np.uint32(0xF)).astype(np.float32)
        zeros3 = jnp.asarray(z_nat.reshape(Gr, 8, N8))
    else:
        # TODO(synk): some AWQ exports that omit qzeros imply a symmetric zero point of 8;
        # this follows the module buffers literally (missing qzeros -> zero point 0).
        zeros3 = jnp.zeros((Gr, 8, N8), jnp.float32)

    if bias is not None:
        bias3 = jnp.asarray(bias, jnp.float32).reshape(1, 8, N8)
    else:
        bias3 = jnp.zeros((1, 8, N8), jnp.float32)

    return qw_tpu, scales3, zeros3, bias3


# ----------------------------------- kernel -----------------------------------------

def _make_awq_kernel(groups_per_step, group_size, decode):
    gs = group_size

    def kernel(x_ref, qw_ref, s_ref, z_ref, b_ref, o_ref, acc_ref):
        k_step = pl.program_id(2)

        @pl.when(k_step == 0)
        def _init():
            acc_ref[...] = jnp.zeros_like(acc_ref)

        x = x_ref[...]            # (TM, TK)   activation dtype (bf16 / f32)
        packed = qw_ref[...]      # (TK, TNg)  int32, 8 nibble planes

        if decode:
            # Small-M / VALU-bound regime: factor the affine dequant out of the
            # per-weight path:  x @ ((q - z) * s) = (x @ q) * s - rowsum(x) * (z * s).
            # Only shift/mask/convert stays on the (TK, TNg) weight tile; the
            # corrections are (TM, TNg)-sized.
            xs = x.astype(jnp.float32)
            rowsums = [jnp.sum(xs[:, g * gs:(g + 1) * gs], axis=1, keepdims=True)
                       for g in range(groups_per_step)]
            for j in range(8):                                   # static nibble planes
                r = None
                for g in range(groups_per_step):                 # static group unroll
                    q = ((packed[g * gs:(g + 1) * gs, :] >> (4 * j)) & 0xF).astype(x.dtype)
                    pdot = jnp.dot(x[:, g * gs:(g + 1) * gs], q,
                                   preferred_element_type=jnp.float32)
                    s_gj = s_ref[g, j, :]                         # (TNg,) f32
                    zs_gj = z_ref[g, j, :] * s_gj
                    term = pdot * s_gj - rowsums[g] * zs_gj
                    r = term if r is None else r + term
                acc_ref[j] += r                                   # dense (TM, TNg) update
        else:
            # Large-M / MXU-bound regime: dequant per weight in the activation dtype
            # (bf16 on v6e/v7x) and feed ONE full-depth (TK) matmul per plane so the
            # 256-deep MXU on v6e/v7x runs at full rate.
            for j in range(8):
                parts = []
                for g in range(groups_per_step):
                    q = ((packed[g * gs:(g + 1) * gs, :] >> (4 * j)) & 0xF).astype(x.dtype)
                    zb = z_ref[g, j, :].astype(x.dtype)
                    sb = s_ref[g, j, :].astype(x.dtype)
                    parts.append((q - zb) * sb)
                w = parts[0] if groups_per_step == 1 else jnp.concatenate(parts, axis=0)
                acc_ref[j] += jnp.dot(x, w, preferred_element_type=jnp.float32)

        @pl.when(k_step == pl.num_programs(2) - 1)
        def _finish():
            # single relayout to the (TM, 8, TNg) output block, once per output tile
            for j in range(8):
                o_ref[:, j, :] = (acc_ref[j] + b_ref[0, j, :]).astype(o_ref.dtype)

    return kernel


# ----------------------------------- wrapper -----------------------------------------

def awq_real_quant_linear(x, qw_tpu, scales3, zeros3, bias3, *, group_size):
    """y = x @ dequant(qweight, scales, qzeros) + bias with prepacked AWQ buffers."""
    K = x.shape[-1]
    Kw, N8 = qw_tpu.shape
    assert Kw == K, "qweight must be (in_features, out_features // 8)"
    N = 8 * N8

    out_dtype = x.dtype
    x2 = x.reshape(-1, K)
    M = x2.shape[0]

    # ---- K tiling: 1-4 quant groups per step; TK must be a 128-lane multiple ----
    gps = None
    for cand in (4, 2, 1):
        TK = cand * group_size
        if K % TK:
            continue
        if TK % 128 and TK != K:
            continue
        if TK > 512 and cand != 1:
            continue
        gps = cand
        break
    assert gps is not None, (
        f"unsupported group_size/in_features combination (group_size={group_size}, K={K})")
    TK = gps * group_size

    # ---- M tiling: pad M up to the tile instead of shrinking the tile ----
    if M >= 512:
        TM = 256
    elif M >= 128:
        TM = 128
    else:
        TM = max(16, _round_up(M, 16))
    Mp = _round_up(M, TM)
    if Mp != M:
        x2 = jnp.pad(x2, ((0, Mp - M), (0, 0)))
    grid_m = Mp // TM

    # ---- N tiling: big lane-dense tiles; keep >=2 N tiles when there is only one
    #      M tile so both of v7x's TensorCores get parallel grid blocks ----
    cands = [c for c in (512, 256, 128) if N8 % c == 0]
    TNg = cands[0] if cands else N8
    if grid_m == 1:
        for c in cands:
            if N8 // c >= 2:
                TNg = c
                break
    grid = (grid_m, N8 // TNg, K // TK)

    decode = 2 * TM <= group_size   # fully-factored dequant only pays off for small M
    kernel = _make_awq_kernel(gps, group_size, decode)

    out3 = pl.pallas_call(
        kernel,
        out_shape=jax.ShapeDtypeStruct((Mp, 8, N8), out_dtype),
        grid_spec=pltpu.PrefetchScalarGridSpec(
            num_scalar_prefetch=0,
            grid=grid,
            in_specs=[
                pl.BlockSpec((TM, TK), lambda i, n, k: (i, k)),          # activations
                # TODO(synk): on v5e, consider pipeline_mode=pl.Buffered(3) here if the
                # qweight DMA becomes exposed once VALU work drops.
                pl.BlockSpec((TK, TNg), lambda i, n, k: (k, n)),         # packed int4 weights
                pl.BlockSpec((gps, 8, TNg), lambda i, n, k: (k, 0, n)),  # per-group scales
                pl.BlockSpec((gps, 8, TNg), lambda i, n, k: (k, 0, n)),  # per-group zeros
                pl.BlockSpec((1, 8, TNg), lambda i, n, k: (0, 0, n)),    # bias (plane-major)
            ],
            out_specs=pl.BlockSpec((TM, 8, TNg), lambda i, n, k: (i, 0, n)),
            scratch_shapes=[pltpu.VMEM((8, TM, TNg), jnp.float32)],      # plane-leading acc
        ),
        compiler_params=pltpu.CompilerParams(
            dimension_semantics=("parallel", "parallel", "arbitrary"),
            vmem_limit_bytes=48 * 1024 * 1024),
    )(x2, qw_tpu, scales3, zeros3, bias3)

    # plane-major packing was chosen so natural column order is a FREE reshape
    y = out3.reshape(Mp, N)[:M]
    return y.reshape(*x.shape[:-1], N)


# ---------------------------- test helpers (gemm_pack reference) ----------------------------

def _pack_cols_int4(vals, order_map):
    """Pack (R, C) ints in [0,15] into (R, C//8) int32, exactly like gemm_pack."""
    vals = np.asarray(vals)
    R, C = vals.shape
    packed = np.zeros((R, C // 8), dtype=np.uint32)
    for i in range(8):
        packed |= vals[:, order_map[i]::8].astype(np.uint32) << np.uint32(4 * i)
    return jnp.asarray(packed.view(np.int32))


def _reference_awq_linear(x, qweight, scales, qzeros, bias, group_size):
    """Pure-JAX reference on the ORIGINAL gemm_pack buffers: full dequant + f32 matmul."""
    K, N8 = qweight.shape
    N = 8 * N8
    w_int = jnp.stack([(qweight >> s) & 0xF for s in _SHIFTS], axis=-1)
    w_int = w_int.reshape(K, N).astype(jnp.float32)
    z_int = jnp.stack([(qzeros >> s) & 0xF for s in _SHIFTS], axis=-1)
    z_int = z_int.reshape(K // group_size, N).astype(jnp.float32)
    s = scales.astype(jnp.float32)
    w = (w_int - jnp.repeat(z_int, group_size, axis=0)) * jnp.repeat(s, group_size, axis=0)
    y = x.reshape(-1, K).astype(jnp.float32) @ w
    if bias is not None:
        y = y + bias.astype(jnp.float32)
    return y.reshape(*x.shape[:-1], N)


if __name__ == "__main__":
    key = jax.random.PRNGKey(0)
    k_x, k_w, k_z, k_s, k_b, k_x2 = jax.random.split(key, 6)

    in_features, out_features, group_size = 256, 1024, 128
    n_groups = in_features // group_size

    # integer (0..15) weights / zeros in natural layout, then pack like gemm_pack
    w_int = jax.random.randint(k_w, (in_features, out_features), 0, 16, dtype=jnp.int32)
    z_int = jax.random.randint(k_z, (n_groups, out_features), 0, 16, dtype=jnp.int32)
    scales = (0.01 + 0.02 * jax.random.uniform(
        k_s, (n_groups, out_features), dtype=jnp.float32)).astype(jnp.float16)
    bias = (0.1 * jax.random.normal(k_b, (out_features,), dtype=jnp.float32)).astype(jnp.bfloat16)

    qweight = _pack_cols_int4(np.asarray(w_int), _ORDER_MAP)   # (K, N//8) int32, gemm_pack
    qzeros = _pack_cols_int4(np.asarray(z_int), _ORDER_MAP)    # (K//G, N//8) int32, gemm_pack

    # one-time (load-time) repack into the TPU kernel's plane-major layout
    qw_tpu, scales3, zeros3, bias3 = awq_prepack_for_tpu(
        qweight, scales, qzeros, bias, group_size=group_size, w_bit=4)

    # decode-shaped (small M -> factored-dequant path) and prefill-shaped (larger M ->
    # full-depth-MXU path) calls, both checked against the gemm_pack reference.
    for name, (batch, seq), kx in (("decode", (2, 8), k_x), ("prefill", (2, 64), k_x2)):
        x = jax.random.normal(kx, (batch, seq, in_features),
                              dtype=jnp.float32).astype(jnp.bfloat16)
        out = awq_real_quant_linear(x, qw_tpu, scales3, zeros3, bias3,
                                    group_size=group_size)
        out = jax.block_until_ready(out)

        ref = _reference_awq_linear(x, qweight, scales, qzeros, bias, group_size)

        assert out.shape == (batch, seq, out_features)
        assert out.dtype == x.dtype
        err = float(jnp.max(jnp.abs(out.astype(jnp.float32) - ref)))
        scale_ref = float(jnp.max(jnp.abs(ref))) + 1e-6
        assert err / scale_ref <= 2e-2, f"{name}: max relative error {err / scale_ref}"

    print("KERNEL_OK")
</pallas_src>

<mosaic_0001>
module attributes {stable_mosaic.version = 11 : i64} {
  func.func @kernel(%arg0: i32, %arg1: i32, %arg2: i32, %arg3: memref<16x256xbf16, #tpu.memory_space<vmem>>, %arg4: memref<256x128xi32, #tpu.memory_space<vmem>>, %arg5: memref<2x8x128xf32, #tpu.memory_space<vmem>>, %arg6: memref<2x8x128xf32, #tpu.memory_space<vmem>>, %arg7: memref<1x8x128xf32, #tpu.memory_space<vmem>>, %arg8: memref<16x8x128xbf16, #tpu.memory_space<vmem>>, %arg9: memref<8x16x128xf32, #tpu.memory_space<vmem>>) attributes {dimension_semantics = [#tpu.dimension_semantics<parallel>, #tpu.dimension_semantics<parallel>, #tpu.dimension_semantics<arbitrary>], iteration_bounds = array<i64: 1, 1, 1>, scalar_prefetch = 0 : i64, scratch_operands = 1 : i64, tpu.core_type = #tpu.core_type<tc>, window_params = [{transform_indices = @transform_0, window_bounds = array<i64: 16, 256>}, {transform_indices = @transform_1, window_bounds = array<i64: 256, 128>}, {transform_indices = @transform_2, window_bounds = array<i64: 2, 8, 128>}, {transform_indices = @transform_3, window_bounds = array<i64: 2, 8, 128>}, {transform_indices = @transform_4, window_bounds = array<i64: 1, 8, 128>}, {transform_indices = @transform_5, window_bounds = array<i64: 16, 8, 128>}]} {
    %c0_i32 = arith.constant 0 : i32
    %0 = arith.cmpi eq, %arg2, %c0_i32 : i32
    %1 = arith.extui %0 : i1 to i32
    %c0_i32_0 = arith.constant 0 : i32
    %2 = arith.cmpi ne, %1, %c0_i32_0 : i32
    scf.if %2 {
      %cst_184 = arith.constant 0.000000e+00 : f32
      %407 = vector.broadcast %cst_184 : f32 to vector<8x16x128xf32>
      %c0_185 = arith.constant 0 : index
      %c0_186 = arith.constant 0 : index
      %c0_187 = arith.constant 0 : index
      %408 = vector.load %arg9[%c0_185, %c0_186, %c0_187] : memref<8x16x128xf32, #tpu.memory_space<vmem>>, vector<8x16x128xf32>
      tpu.vector_store %arg9[%c0_185, %c0_186, %c0_187], %407 {strides = array<i32>} : memref<8x16x128xf32, #tpu.memory_space<vmem>>, vector<8x16x128xf32>,
    } else {
    }
    %c0 = arith.constant 0 : index
    %c0_1 = arith.constant 0 : index
    %3 = vector.load %arg3[%c0, %c0_1] : memref<16x256xbf16, #tpu.memory_space<vmem>>, vector<16x256xbf16>
    %c0_2 = arith.constant 0 : index
    %c0_3 = arith.constant 0 : index
    %4 = vector.load %arg4[%c0_2, %c0_3] : memref<256x128xi32, #tpu.memory_space<vmem>>, vector<256x128xi32>
    %5 = arith.extf %3 : vector<16x256xbf16> to vector<16x256xf32>
    %6 = vector.extract_strided_slice %5 {offsets = [0, 0], sizes = [16, 128], strides = [1, 1]} : vector<16x256xf32> to vector<16x128xf32>
    %cst = arith.constant dense<0.000000e+00> : vector<16xf32>
    %7 = vector.multi_reduction <add>, %6, %cst [1] : vector<16x128xf32> to vector<16xf32>
    %8 = vector.shape_cast %7 : vector<16xf32> to vector<16x1xf32>
    %9 = vector.extract_strided_slice %5 {offsets = [0, 128], sizes = [16, 128], strides = [1, 1]} : vector<16x256xf32> to vector<16x128xf32>
    %cst_4 = arith.constant dense<0.000000e+00> : vector<16xf32>
    %10 = vector.multi_reduction <add>, %9, %cst_4 [1] : vector<16x128xf32> to vector<16xf32>
    %11 = vector.shape_cast %10 : vector<16xf32> to vector<16x1xf32>
    %12 = vector.extract_strided_slice %4 {offsets = [0, 0], sizes = [128, 128], strides = [1, 1]} : vector<256x128xi32> to vector<128x128xi32>
    %c0_i32_5 = arith.constant 0 : i32
    %13 = vector.broadcast %c0_i32_5 : i32 to vector<128x128xi32>
    %14 = arith.shrsi %12, %13 : vector<128x128xi32>
    %c15_i32 = arith.constant 15 : i32
    %15 = vector.broadcast %c15_i32 : i32 to vector<128x128xi32>
    %16 = arith.andi %14, %15 : vector<128x128xi32>
    %17 = arith.sitofp %16 : vector<128x128xi32> to vector<128x128xbf16>
    %18 = vector.extract_strided_slice %3 {offsets = [0, 0], sizes = [16, 128], strides = [1, 1]} : vector<16x256xbf16> to vector<16x128xbf16>
    %cst_6 = arith.constant dense<0.000000e+00> : vector<16x128xf32>
    %19 = tpu.matmul %18, %17, %cst_6 {dimension_numbers = #tpu.dot_dimension_numbers<[1], [0], [0], [1], [0, 0, 1, 1], [], []>} : vector<16x128xbf16>, vector<128x128xbf16>, vector<16x128xf32> -> vector<16x128xf32>
    %c0_7 = arith.constant 0 : index
    %c0_8 = arith.constant 0 : index
    %c0_9 = arith.constant 0 : index
    %20 = vector.load %arg5[%c0_7, %c0_8, %c0_9] : memref<2x8x128xf32, #tpu.memory_space<vmem>>, vector<1x1x128xf32>
    %21 = vector.shape_cast %20 : vector<1x1x128xf32> to vector<128xf32>
    %c0_10 = arith.constant 0 : index
    %c0_11 = arith.constant 0 : index
    %c0_12 = arith.constant 0 : index
    %22 = vector.load %arg6[%c0_10, %c0_11, %c0_12] : memref<2x8x128xf32, #tpu.memory_space<vmem>>, vector<1x1x128xf32>
    %23 = vector.shape_cast %22 : vector<1x1x128xf32> to vector<128xf32>
    %24 = arith.mulf %23, %21 : vector<128xf32>
    %25 = vector.shape_cast %21 : vector<128xf32> to vector<1x128xf32>
    %26 = vector.broadcast %25 : vector<1x128xf32> to vector<16x128xf32>
    %27 = arith.mulf %19, %26 : vector<16x128xf32>
    %28 = vector.shape_cast %24 : vector<128xf32> to vector<1x128xf32>
    %29 = vector.broadcast %8 : vector<16x1xf32> to vector<16x128xf32>
    %30 = vector.broadcast %28 : vector<1x128xf32> to vector<16x128xf32>
    %31 = arith.mulf %29, %30 : vector<16x128xf32>
    %32 = arith.subf %27, %31 : vector<16x128xf32>
    %33 = vector.extract_strided_slice %4 {offsets = [128, 0], sizes = [128, 128], strides = [1, 1]} : vector<256x128xi32> to vector<128x128xi32>
    %c0_i32_13 = arith.constant 0 : i32
    %34 = vector.broadcast %c0_i32_13 : i32 to vector<128x128xi32>
    %35 = arith.shrsi %33, %34 : vector<128x128xi32>
    %c15_i32_14 = arith.constant 15 : i32
    %36 = vector.broadcast %c15_i32_14 : i32 to vector<128x128xi32>
    %37 = arith.andi %35, %36 : vector<128x128xi32>
    %38 = arith.sitofp %37 : vector<128x128xi32> to vector<128x128xbf16>
    %39 = vector.extract_strided_slice %3 {offsets = [0, 128], sizes = [16, 128], strides = [1, 1]} : vector<16x256xbf16> to vector<16x128xbf16>
    %cst_15 = arith.constant dense<0.000000e+00> : vector<16x128xf32>
    %40 = tpu.matmul %39, %38, %cst_15 {dimension_numbers = #tpu.dot_dimension_numbers<[1], [0], [0], [1], [0, 0, 1, 1], [], []>} : vector<16x128xbf16>, vector<128x128xbf16>, vector<16x128xf32> -> vector<16x128xf32>
    %c1 = arith.constant 1 : index
    %c0_16 = arith.constant 0 : index
    %c0_17 = arith.constant 0 : index
    %41 = vector.load %arg5[%c1, %c0_16, %c0_17] : memref<2x8x128xf32, #tpu.memory_space<vmem>>, vector<1x1x128xf32>
    %42 = vector.shape_cast %41 : vector<1x1x128xf32> to vector<128xf32>
    %c1_18 = arith.constant 1 : index
    %c0_19 = arith.constant 0 : index
    %c0_20 = arith.constant 0 : index
    %43 = vector.load %arg6[%c1_18, %c0_19, %c0_20] : memref<2x8x128xf32, #tpu.memory_space<vmem>>, vector<1x1x128xf32>
    %44 = vector.shape_cast %43 : vector<1x1x128xf32> to vector<128xf32>
    %45 = arith.mulf %44, %42 : vector<128xf32>
    %46 = vector.shape_cast %42 : vector<128xf32> to vector<1x128xf32>
    %47 = vector.broadcast %46 : vector<1x128xf32> to vector<16x128xf32>
    %48 = arith.mulf %40, %47 : vector<16x128xf32>
    %49 = vector.shape_cast %45 : vector<128xf32> to vector<1x128xf32>
    %50 = vector.broadcast %11 : vector<16x1xf32> to vector<16x128xf32>
    %51 = vector.broadcast %49 : vector<1x128xf32> to vector<16x128xf32>
    %52 = arith.mulf %50, %51 : vector<16x128xf32>
    %53 = arith.subf %48, %52 : vector<16x128xf32>
    %54 = arith.addf %32, %53 : vector<16x128xf32>
    %c0_21 = arith.constant 0 : index
    %c0_22 = arith.constant 0 : index
    %c0_23 = arith.constant 0 : index
    %55 = vector.load %arg9[%c0_21, %c0_22, %c0_23] : memref<8x16x128xf32, #tpu.memory_space<vmem>>, vector<1x16x128xf32>
    %56 = vector.shape_cast %55 : vector<1x16x128xf32> to vector<16x128xf32>
    %57 = arith.addf %56, %54 : vector<16x128xf32>
    %c0_24 = arith.constant 0 : index
    %c0_25 = arith.constant 0 : index
    %c0_26 = arith.constant 0 : index
    %58 = vector.load %arg9[%c0_24, %c0_25, %c0_26] : memref<8x16x128xf32, #tpu.memory_space<vmem>>, vector<1x16x128xf32>
    %59 = vector.shape_cast %58 : vector<1x16x128xf32> to vector<16x128xf32>
    %60 = vector.shape_cast %57 : vector<16x128xf32> to vector<1x16x128xf32>
    tpu.vector_store %arg9[%c0_24, %c0_25, %c0_26], %60 {strides = array<i32>} : memref<8x16x128xf32, #tpu.memory_space<vmem>>, vector<1x16x128xf32>,
    %61 = vector.extract_strided_slice %4 {offsets = [0, 0], sizes = [128, 128], strides = [1, 1]} : vector<256x128xi32> to vector<128x128xi32>
    %c4_i32 = arith.constant 4 : i32
    %62 = vector.broadcast %c4_i32 : i32 to vector<128x128xi32>
    %63 = arith.shrsi %61, %62 : vector<128x128xi32>
    %c15_i32_27 = arith.constant 15 : i32
    %64 = vector.broadcast %c15_i32_27 : i32 to vector<128x128xi32>
    %65 = arith.andi %63, %64 : vector<128x128xi32>
    %66 = arith.sitofp %65 : vector<128x128xi32> to vector<128x128xbf16>
    %67 = vector.extract_strided_slice %3 {offsets = [0, 0], sizes = [16, 128], strides = [1, 1]} : vector<16x256xbf16> to vector<16x128xbf16>
    %cst_28 = arith.constant dense<0.000000e+00> : vector<16x128xf32>
    %68 = tpu.matmul %67, %66, %cst_28 {dimension_numbers = #tpu.dot_dimension_numbers<[1], [0], [0], [1], [0, 0, 1, 1], [], []>} : vector<16x128xbf16>, vector<128x128xbf16>, vector<16x128xf32> -> vector<16x128xf32>
    %c0_29 = arith.constant 0 : index
    %c1_30 = arith.constant 1 : index
    %c0_31 = arith.constant 0 : index
    %69 = vector.load %arg5[%c0_29, %c1_30, %c0_31] : memref<2x8x128xf32, #tpu.memory_space<vmem>>, vector<1x1x128xf32>
    %70 = vector.shape_cast %69 : vector<1x1x128xf32> to vector<128xf32>
    %c0_32 = arith.constant 0 : index
    %c1_33 = arith.constant 1 : index
    %c0_34 = arith.constant 0 : index
    %71 = vector.load %arg6[%c0_32, %c1_33, %c0_34] : memref<2x8x128xf32, #tpu.memory_space<vmem>>, vector<1x1x128xf32>
    %72 = vector.shape_cast %71 : vector<1x1x128xf32> to vector<128xf32>
    %73 = arith.mulf %72, %70 : vector<128xf32>
    %74 = vector.shape_cast %70 : vector<128xf32> to vector<1x128xf32>
    %75 = vector.broadcast %74 : vector<1x128xf32> to vector<16x128xf32>
    %76 = arith.mulf %68, %75 : vector<16x128xf32>
    %77 = vector.shape_cast %73 : vector<128xf32> to vector<1x128xf32>
    %78 = vector.broadcast %8 : vector<16x1xf32> to vector<16x128xf32>
    %79 = vector.broadcast %77 : vector<1x128xf32> to vector<16x128xf32>
    %80 = arith.mulf %78, %79 : vector<16x128xf32>
    %81 = arith.subf %76, %80 : vector<16x128xf32>
    %82 = vector.extract_strided_slice %4 {offsets = [128, 0], sizes = [128, 128], strides = [1, 1]} : vector<256x128xi32> to vector<128x128xi32>
    %c4_i32_35 = arith.constant 4 : i32
    %83 = vector.broadcast %c4_i32_35 : i32 to vector<128x128xi32>
    %84 = arith.shrsi %82, %83 : vector<128x128xi32>
    %c15_i32_36 = arith.constant 15 : i32
    %85 = vector.broadcast %c15_i32_36 : i32 to vector<128x128xi32>
    %86 = arith.andi %84, %85 : vector<128x128xi32>
    %87 = arith.sitofp %86 : vector<128x128xi32> to vector<128x128xbf16>
    %88 = vector.extract_strided_slice %3 {offsets = [0, 128], sizes = [16, 128], strides = [1, 1]} : vector<16x256xbf16> to vector<16x128xbf16>
    %cst_37 = arith.constant dense<0.000000e+00> : vector<16x128xf32>
    %89 = tpu.matmul %88, %87, %cst_37 {dimension_numbers = #tpu.dot_dimension_numbers<[1], [0], [0], [1], [0, 0, 1, 1], [], []>} : vector<16x128xbf16>, vector<128x128xbf16>, vector<16x128xf32> -> vector<16x128xf32>
    %c1_38 = arith.constant 1 : index
    %c1_39 = arith.constant 1 : index
    %c0_40 = arith.constant 0 : index
    %90 = vector.load %arg5[%c1_38, %c1_39, %c0_40] : memref<2x8x128xf32, #tpu.memory_space<vmem>>, vector<1x1x128xf32>
    %91 = vector.shape_cast %90 : vector<1x1x128xf32> to vector<128xf32>
    %c1_41 = arith.constant 1 : index
    %c1_42 = arith.constant 1 : index
    %c0_43 = arith.constant 0 : index
    %92 = vector.load %arg6[%c1_41, %c1_42, %c0_43] : memref<2x8x128xf32, #tpu.memory_space<vmem>>, vector<1x1x128xf32>
    %93 = vector.shape_cast %92 : vector<1x1x128xf32> to vector<128xf32>
    %94 = arith.mulf %93, %91 : vector<128xf32>
    %95 = vector.shape_cast %91 : vector<128xf32> to vector<1x128xf32>
    %96 = vector.broadcast %95 : vector<1x128xf32> to vector<16x128xf32>
    %97 = arith.mulf %89, %96 : vector<16x128xf32>
    %98 = vector.shape_cast %94 : vector<128xf32> to vector<1x128xf32>
    %99 = vector.broadcast %11 : vector<16x1xf32> to vector<16x128xf32>
    %100 = vector.broadcast %98 : vector<1x128xf32> to vector<16x128xf32>
    %101 = arith.mulf %99, %100 : vector<16x128xf32>
    %102 = arith.subf %97, %101 : vector<16x128xf32>
    %103 = arith.addf %81, %102 : vector<16x128xf32>
    %c1_44 = arith.constant 1 : index
    %c0_45 = arith.constant 0 : index
    %c0_46 = arith.constant 0 : index
    %104 = vector.load %arg9[%c1_44, %c0_45, %c0_46] : memref<8x16x128xf32, #tpu.memory_space<vmem>>, vector<1x16x128xf32>
    %105 = vector.shape_cast %104 : vector<1x16x128xf32> to vector<16x128xf32>
    %106 = arith.addf %105, %103 : vector<16x128xf32>
    %c1_47 = arith.constant 1 : index
    %c0_48 = arith.constant 0 : index
    %c0_49 = arith.constant 0 : index
    %107 = vector.load %arg9[%c1_47, %c0_48, %c0_49] : memref<8x16x128xf32, #tpu.memory_space<vmem>>, vector<1x16x128xf32>
    %108 = vector.shape_cast %107 : vector<1x16x128xf32> to vector<16x128xf32>
    %109 = vector.shape_cast %106 : vector<16x128xf32> to vector<1x16x128xf32>
    tpu.vector_store %arg9[%c1_47, %c0_48, %c0_49], %109 {strides = array<i32>} : memref<8x16x128xf32, #tpu.memory_space<vmem>>, vector<1x16x128xf32>,
    %110 = vector.extract_strided_slice %4 {offsets = [0, 0], sizes = [128, 128], strides = [1, 1]} : vector<256x128xi32> to vector<128x128xi32>
    %c8_i32 = arith.constant 8 : i32
    %111 = vector.broadcast %c8_i32 : i32 to vector<128x128xi32>
    %112 = arith.shrsi %110, %111 : vector<128x128xi32>
    %c15_i32_50 = arith.constant 15 : i32
    %113 = vector.broadcast %c15_i32_50 : i32 to vector<128x128xi32>
    %114 = arith.andi %112, %113 : vector<128x128xi32>
    %115 = arith.sitofp %114 : vector<128x128xi32> to vector<128x128xbf16>
    %116 = vector.extract_strided_slice %3 {offsets = [0, 0], sizes = [16, 128], strides = [1, 1]} : vector<16x256xbf16> to vector<16x128xbf16>
    %cst_51 = arith.constant dense<0.000000e+00> : vector<16x128xf32>
    %117 = tpu.matmul %116, %115, %cst_51 {dimension_numbers = #tpu.dot_dimension_numbers<[1], [0], [0], [1], [0, 0, 1, 1], [], []>} : vector<16x128xbf16>, vector<128x128xbf16>, vector<16x128xf32> -> vector<16x128xf32>
    %c0_52 = arith.constant 0 : index
    %c2 = arith.constant 2 : index
    %c0_53 = arith.constant 0 : index
    %118 = vector.load %arg5[%c0_52, %c2, %c0_53] : memref<2x8x128xf32, #tpu.memory_space<vmem>>, vector<1x1x128xf32>
    %119 = vector.shape_cast %118 : vector<1x1x128xf32> to vector<128xf32>
    %c0_54 = arith.constant 0 : index
    %c2_55 = arith.constant 2 : index
    %c0_56 = arith.constant 0 : index
    %120 = vector.load %arg6[%c0_54, %c2_55, %c0_56] : memref<2x8x128xf32, #tpu.memory_space<vmem>>, vector<1x1x128xf32>
    %121 = vector.shape_cast %120 : vector<1x1x128xf32> to vector<128xf32>
    %122 = arith.mulf %121, %119 : vector<128xf32>
    %123 = vector.shape_cast %119 : vector<128xf32> to vector<1x128xf32>
    %124 = vector.broadcast %123 : vector<1x128xf32> to vector<16x128xf32>
    %125 = arith.mulf %117, %124 : vector<16x128xf32>
    %126 = vector.shape_cast %122 : vector<128xf32> to vector<1x128xf32>
    %127 = vector.broadcast %8 : vector<16x1xf32> to vector<16x128xf32>
    %128 = vector.broadcast %126 : vector<1x128xf32> to vector<16x128xf32>
    %129 = arith.mulf %127, %128 : vector<16x128xf32>
    %130 = arith.subf %125, %129 : vector<16x128xf32>
    %131 = vector.extract_strided_slice %4 {offsets = [128, 0], sizes = [128, 128], strides = [1, 1]} : vector<256x128xi32> to vector<128x128xi32>
    %c8_i32_57 = arith.constant 8 : i32
    %132 = vector.broadcast %c8_i32_57 : i32 to vector<128x128xi32>
    %133 = arith.shrsi %131, %132 : vector<128x128xi32>
    %c15_i32_58 = arith.constant 15 : i32
    %134 = vector.broadcast %c15_i32_58 : i32 to vector<128x128xi32>
    %135 = arith.andi %133, %134 : vector<128x128xi32>
    %136 = arith.sitofp %135 : vector<128x128xi32> to vector<128x128xbf16>
    %137 = vector.extract_strided_slice %3 {offsets = [0, 128], sizes = [16, 128], strides = [1, 1]} : vector<16x256xbf16> to vector<16x128xbf16>
    %cst_59 = arith.constant dense<0.000000e+00> : vector<16x128xf32>
    %138 = tpu.matmul %137, %136, %cst_59 {dimension_numbers = #tpu.dot_dimension_numbers<[1], [0], [0], [1], [0, 0, 1, 1], [], []>} : vector<16x128xbf16>, vector<128x128xbf16>, vector<16x128xf32> -> vector<16x128xf32>
    %c1_60 = arith.constant 1 : index
    %c2_61 = arith.constant 2 : index
    %c0_62 = arith.constant 0 : index
    %139 = vector.load %arg5[%c1_60, %c2_61, %c0_62] : memref<2x8x128xf32, #tpu.memory_space<vmem>>, vector<1x1x128xf32>
    %140 = vector.shape_cast %139 : vector<1x1x128xf32> to vector<128xf32>
    %c1_63 = arith.constant 1 : index
    %c2_64 = arith.constant 2 : index
    %c0_65 = arith.constant 0 : index
    %141 = vector.load %arg6[%c1_63, %c2_64, %c0_65] : memref<2x8x128xf32, #tpu.memory_space<vmem>>, vector<1x1x128xf32>
    %142 = vector.shape_cast %141 : vector<1x1x128xf32> to vector<128xf32>
    %143 = arith.mulf %142, %140 : vector<128xf32>
    %144 = vector.shape_cast %140 : vector<128xf32> to vector<1x128xf32>
    %145 = vector.broadcast %144 : vector<1x128xf32> to vector<16x128xf32>
    %146 = arith.mulf %138, %145 : vector<16x128xf32>
    %147 = vector.shape_cast %143 : vector<128xf32> to vector<1x128xf32>
    %148 = vector.broadcast %11 : vector<16x1xf32> to vector<16x128xf32>
    %149 = vector.broadcast %147 : vector<1x128xf32> to vector<16x128xf32>
    %150 = arith.mulf %148, %149 : vector<16x128xf32>
    %151 = arith.subf %146, %150 : vector<16x128xf32>
    %152 = arith.addf %130, %151 : vector<16x128xf32>
    %c2_66 = arith.constant 2 : index
    %c0_67 = arith.constant 0 : index
    %c0_68 = arith.constant 0 : index
    %153 = vector.load %arg9[%c2_66, %c0_67, %c0_68] : memref<8x16x128xf32, #tpu.memory_space<vmem>>, vector<1x16x128xf32>
    %154 = vector.shape_cast %153 : vector<1x16x128xf32> to vector<16x128xf32>
    %155 = arith.addf %154, %152 : vector<16x128xf32>
    %c2_69 = arith.constant 2 : index
    %c0_70 = arith.constant 0 : index
    %c0_71 = arith.constant 0 : index
    %156 = vector.load %arg9[%c2_69, %c0_70, %c0_71] : memref<8x16x128xf32, #tpu.memory_space<vmem>>, vector<1x16x128xf32>
    %157 = vector.shape_cast %156 : vector<1x16x128xf32> to vector<16x128xf32>
    %158 = vector.shape_cast %155 : vector<16x128xf32> to vector<1x16x128xf32>
    tpu.vector_store %arg9[%c2_69, %c0_70, %c0_71], %158 {strides = array<i32>} : memref<8x16x128xf32, #tpu.memory_space<vmem>>, vector<1x16x128xf32>,
    %159 = vector.extract_strided_slice %4 {offsets = [0, 0], sizes = [128, 128], strides = [1, 1]} : vector<256x128xi32> to vector<128x128xi32>
    %c12_i32 = arith.constant 12 : i32
    %160 = vector.broadcast %c12_i32 : i32 to vector<128x128xi32>
    %161 = arith.shrsi %159, %160 : vector<128x128xi32>
    %c15_i32_72 = arith.constant 15 : i32
    %162 = vector.broadcast %c15_i32_72 : i32 to vector<128x128xi32>
    %163 = arith.andi %161, %162 : vector<128x128xi32>
    %164 = arith.sitofp %163 : vector<128x128xi32> to vector<128x128xbf16>
    %165 = vector.extract_strided_slice %3 {offsets = [0, 0], sizes = [16, 128], strides = [1, 1]} : vector<16x256xbf16> to vector<16x128xbf16>
    %cst_73 = arith.constant dense<0.000000e+00> : vector<16x128xf32>
    %166 = tpu.matmul %165, %164, %cst_73 {dimension_numbers = #tpu.dot_dimension_numbers<[1], [0], [0], [1], [0, 0, 1, 1], [], []>} : vector<16x128xbf16>, vector<128x128xbf16>, vector<16x128xf32> -> vector<16x128xf32>
    %c0_74 = arith.constant 0 : index
    %c3 = arith.constant 3 : index
    %c0_75 = arith.constant 0 : index
    %167 = vector.load %arg5[%c0_74, %c3, %c0_75] : memref<2x8x128xf32, #tpu.memory_space<vmem>>, vector<1x1x128xf32>
    %168 = vector.shape_cast %167 : vector<1x1x128xf32> to vector<128xf32>
    %c0_76 = arith.constant 0 : index
    %c3_77 = arith.constant 3 : index
    %c0_78 = arith.constant 0 : index
    %169 = vector.load %arg6[%c0_76, %c3_77, %c0_78] : memref<2x8x128xf32, #tpu.memory_space<vmem>>, vector<1x1x128xf32>
    %170 = vector.shape_cast %169 : vector<1x1x128xf32> to vector<128xf32>
    %171 = arith.mulf %170, %168 : vector<128xf32>
    %172 = vector.shape_cast %168 : vector<128xf32> to vector<1x128xf32>
    %173 = vector.broadcast %172 : vector<1x128xf32> to vector<16x128xf32>
    %174 = arith.mulf %166, %173 : vector<16x128xf32>
    %175 = vector.shape_cast %171 : vector<128xf32> to vector<1x128xf32>
    %176 = vector.broadcast %8 : vector<16x1xf32> to vector<16x128xf32>
    %177 = vector.broadcast %175 : vector<1x128xf32> to vector<16x128xf32>
    %178 = arith.mulf %176, %177 : vector<16x128xf32>
    %179 = arith.subf %174, %178 : vector<16x128xf32>
    %180 = vector.extract_strided_slice %4 {offsets = [128, 0], sizes = [128, 128], strides = [1, 1]} : vector<256x128xi32> to vector<128x128xi32>
    %c12_i32_79 = arith.constant 12 : i32
    %181 = vector.broadcast %c12_i32_79 : i32 to vector<128x128xi32>
    %182 = arith.shrsi %180, %181 : vector<128x128xi32>
    %c15_i32_80 = arith.constant 15 : i32
    %183 = vector.broadcast %c15_i32_80 : i32 to vector<128x128xi32>
    %184 = arith.andi %182, %183 : vector<128x128xi32>
    %185 = arith.sitofp %184 : vector<128x128xi32> to vector<128x128xbf16>
    %186 = vector.extract_strided_slice %3 {offsets = [0, 128], sizes = [16, 128], strides = [1, 1]} : vector<16x256xbf16> to vector<16x128xbf16>
    %cst_81 = arith.constant dense<0.000000e+00> : vector<16x128xf32>
    %187 = tpu.matmul %186, %185, %cst_81 {dimension_numbers = #tpu.dot_dimension_numbers<[1], [0], [0], [1], [0, 0, 1, 1], [], []>} : vector<16x128xbf16>, vector<128x128xbf16>, vector<16x128xf32> -> vector<16x128xf32>
    %c1_82 = arith.constant 1 : index
    %c3_83 = arith.constant 3 : index
    %c0_84 = arith.constant 0 : index
    %188 = vector.load %arg5[%c1_82, %c3_83, %c0_84] : memref<2x8x128xf32, #tpu.memory_space<vmem>>, vector<1x1x128xf32>
    %189 = vector.shape_cast %188 : vector<1x1x128xf32> to vector<128xf32>
    %c1_85 = arith.constant 1 : index
    %c3_86 = arith.constant 3 : index
    %c0_87 = arith.constant 0 : index
    %190 = vector.load %arg6[%c1_85, %c3_86, %c0_87] : memref<2x8x128xf32, #tpu.memory_space<vmem>>, vector<1x1x128xf32>
    %191 = vector.shape_cast %190 : vector<1x1x128xf32> to vector<128xf32>
    %192 = arith.mulf %191, %189 : vector<128xf32>
    %193 = vector.shape_cast %189 : vector<128xf32> to vector<1x128xf32>
    %194 = vector.broadcast %193 : vector<1x128xf32> to vector<16x128xf32>
    %195 = arith.mulf %187, %194 : vector<16x128xf32>
    %196 = vector.shape_cast %192 : vector<128xf32> to vector<1x128xf32>
    %197 = vector.broadcast %11 : vector<16x1xf32> to vector<16x128xf32>
    %198 = vector.broadcast %196 : vector<1x128xf32> to vector<16x128xf32>
    %199 = arith.mulf %197, %198 : vector<16x128xf32>
    %200 = arith.subf %195, %199 : vector<16x128xf32>
    %201 = arith.addf %179, %200 : vector<16x128xf32>
    %c3_88 = arith.constant 3 : index
    %c0_89 = arith.constant 0 : index
    %c0_90 = arith.constant 0 : index
    %202 = vector.load %arg9[%c3_88, %c0_89, %c0_90] : memref<8x16x128xf32, #tpu.memory_space<vmem>>, vector<1x16x128xf32>
    %203 = vector.shape_cast %202 : vector<1x16x128xf32> to vector<16x128xf32>
    %204 = arith.addf %203, %201 : vector<16x128xf32>
    %c3_91 = arith.constant 3 : index
    %c0_92 = arith.constant 0 : index
    %c0_93 = arith.constant 0 : index
    %205 = vector.load %arg9[%c3_91, %c0_92, %c0_93] : memref<8x16x128xf32, #tpu.memory_space<vmem>>, vector<1x16x128xf32>
    %206 = vector.shape_cast %205 : vector<1x16x128xf32> to vector<16x128xf32>
    %207 = vector.shape_cast %204 : vector<16x128xf32> to vector<1x16x128xf32>
    tpu.vector_store %arg9[%c3_91, %c0_92, %c0_93], %207 {strides = array<i32>} : memref<8x16x128xf32, #tpu.memory_space<vmem>>, vector<1x16x128xf32>,
    %208 = vector.extract_strided_slice %4 {offsets = [0, 0], sizes = [128, 128], strides = [1, 1]} : vector<256x128xi32> to vector<128x128xi32>
    %c16_i32 = arith.constant 16 : i32
    %209 = vector.broadcast %c16_i32 : i32 to vector<128x128xi32>
    %210 = arith.shrsi %208, %209 : vector<128x128xi32>
    %c15_i32_94 = arith.constant 15 : i32
    %211 = vector.broadcast %c15_i32_94 : i32 to vector<128x128xi32>
    %212 = arith.andi %210, %211 : vector<128x128xi32>
    %213 = arith.sitofp %212 : vector<128x128xi32> to vector<128x128xbf16>
    %214 = vector.extract_strided_slice %3 {offsets = [0, 0], sizes = [16, 128], strides = [1, 1]} : vector<16x256xbf16> to vector<16x128xbf16>
    %cst_95 = arith.constant dense<0.000000e+00> : vector<16x128xf32>
    %215 = tpu.matmul %214, %213, %cst_95 {dimension_numbers = #tpu.dot_dimension_numbers<[1], [0], [0], [1], [0, 0, 1, 1], [], []>} : vector<16x128xbf16>, vector<128x128xbf16>, vector<16x128xf32> -> vector<16x128xf32>
    %c0_96 = arith.constant 0 : index
    %c4 = arith.constant 4 : index
    %c0_97 = arith.constant 0 : index
    %216 = vector.load %arg5[%c0_96, %c4, %c0_97] : memref<2x8x128xf32, #tpu.memory_space<vmem>>, vector<1x1x128xf32>
    %217 = vector.shape_cast %216 : vector<1x1x128xf32> to vector<128xf32>
    %c0_98 = arith.constant 0 : index
    %c4_99 = arith.constant 4 : index
    %c0_100 = arith.constant 0 : index
    %218 = vector.load %arg6[%c0_98, %c4_99, %c0_100] : memref<2x8x128xf32, #tpu.memory_space<vmem>>, vector<1x1x128xf32>
    %219 = vector.shape_cast %218 : vector<1x1x128xf32> to vector<128xf32>
    %220 = arith.mulf %219, %217 : vector<128xf32>
    %221 = vector.shape_cast %217 : vector<128xf32> to vector<1x128xf32>
    %222 = vector.broadcast %221 : vector<1x128xf32> to vector<16x128xf32>
    %223 = arith.mulf %215, %222 : vector<16x128xf32>
    %224 = vector.shape_cast %220 : vector<128xf32> to vector<1x128xf32>
    %225 = vector.broadcast %8 : vector<16x1xf32> to vector<16x128xf32>
    %226 = vector.broadcast %224 : vector<1x128xf32> to vector<16x128xf32>
    %227 = arith.mulf %225, %226 : vector<16x128xf32>
    %228 = arith.subf %223, %227 : vector<16x128xf32>
    %229 = vector.extract_strided_slice %4 {offsets = [128, 0], sizes = [128, 128], strides = [1, 1]} : vector<256x128xi32> to vector<128x128xi32>
    %c16_i32_101 = arith.constant 16 : i32
    %230 = vector.broadcast %c16_i32_101 : i32 to vector<128x128xi32>
    %231 = arith.shrsi %229, %230 : vector<128x128xi32>
    %c15_i32_102 = arith.constant 15 : i32
    %232 = vector.broadcast %c15_i32_102 : i32 to vector<128x128xi32>
    %233 = arith.andi %231, %232 : vector<128x128xi32>
    %234 = arith.sitofp %233 : vector<128x128xi32> to vector<128x128xbf16>
    %235 = vector.extract_strided_slice %3 {offsets = [0, 128], sizes = [16, 128], strides = [1, 1]} : vector<16x256xbf16> to vector<16x128xbf16>
    %cst_103 = arith.constant dense<0.000000e+00> : vector<16x128xf32>
    %236 = tpu.matmul %235, %234, %cst_103 {dimension_numbers = #tpu.dot_dimension_numbers<[1], [0], [0], [1], [0, 0, 1, 1], [], []>} : vector<16x128xbf16>, vector<128x128xbf16>, vector<16x128xf32> -> vector<16x128xf32>
    %c1_104 = arith.constant 1 : index
    %c4_105 = arith.constant 4 : index
    %c0_106 = arith.constant 0 : index
    %237 = vector.load %arg5[%c1_104, %c4_105, %c0_106] : memref<2x8x128xf32, #tpu.memory_space<vmem>>, vector<1x1x128xf32>
    %238 = vector.shape_cast %237 : vector<1x1x128xf32> to vector<128xf32>
    %c1_107 = arith.constant 1 : index
    %c4_108 = arith.constant 4 : index
    %c0_109 = arith.constant 0 : index
    %239 = vector.load %arg6[%c1_107, %c4_108, %c0_109] : memref<2x8x128xf32, #tpu.memory_space<vmem>>, vector<1x1x128xf32>
    %240 = vector.shape_cast %239 : vector<1x1x128xf32> to vector<128xf32>
    %241 = arith.mulf %240, %238 : vector<128xf32>
    %242 = vector.shape_cast %238 : vector<128xf32> to vector<1x128xf32>
    %243 = vector.broadcast %242 : vector<1x128xf32> to vector<16x128xf32>
    %244 = arith.mulf %236, %243 : vector<16x128xf32>
    %245 = vector.shape_cast %241 : vector<128xf32> to vector<1x128xf32>
    %246 = vector.broadcast %11 : vector<16x1xf32> to vector<16x128xf32>
    %247 = vector.broadcast %245 : vector<1x128xf32> to vector<16x128xf32>
    %248 = arith.mulf %246, %247 : vector<16x128xf32>
    %249 = arith.subf %244, %248 : vector<16x128xf32>
    %250 = arith.addf %228, %249 : vector<16x128xf32>
    %c4_110 = arith.constant 4 : index
    %c0_111 = arith.constant 0 : index
    %c0_112 = arith.constant 0 : index
    %251 = vector.load %arg9[%c4_110, %c0_111, %c0_112] : memref<8x16x128xf32, #tpu.memory_space<vmem>>, vector<1x16x128xf32>
    %252 = vector.shape_cast %251 : vector<1x16x128xf32> to vector<16x128xf32>
    %253 = arith.addf %252, %250 : vector<16x128xf32>
    %c4_113 = arith.constant 4 : index
    %c0_114 = arith.constant 0 : index
    %c0_115 = arith.constant 0 : index
    %254 = vector.load %arg9[%c4_113, %c0_114, %c0_115] : memref<8x16x128xf32, #tpu.memory_space<vmem>>, vector<1x16x128xf32>
    %255 = vector.shape_cast %254 : vector<1x16x128xf32> to vector<16x128xf32>
    %256 = vector.shape_cast %253 : vector<16x128xf32> to vector<1x16x128xf32>
    tpu.vector_store %arg9[%c4_113, %c0_114, %c0_115], %256 {strides = array<i32>} : memref<8x16x128xf32, #tpu.memory_space<vmem>>, vector<1x16x128xf32>,
    %257 = vector.extract_strided_slice %4 {offsets = [0, 0], sizes = [128, 128], strides = [1, 1]} : vector<256x128xi32> to vector<128x128xi32>
    %c20_i32 = arith.constant 20 : i32
    %258 = vector.broadcast %c20_i32 : i32 to vector<128x128xi32>
    %259 = arith.shrsi %257, %258 : vector<128x128xi32>
    %c15_i32_116 = arith.constant 15 : i32
    %260 = vector.broadcast %c15_i32_116 : i32 to vector<128x128xi32>
    %261 = arith.andi %259, %260 : vector<128x128xi32>
    %262 = arith.sitofp %261 : vector<128x128xi32> to vector<128x128xbf16>
    %263 = vector.extract_strided_slice %3 {offsets = [0, 0], sizes = [16, 128], strides = [1, 1]} : vector<16x256xbf16> to vector<16x128xbf16>
    %cst_117 = arith.constant dense<0.000000e+00> : vector<16x128xf32>
    %264 = tpu.matmul %263, %262, %cst_117 {dimension_numbers = #tpu.dot_dimension_numbers<[1], [0], [0], [1], [0, 0, 1, 1], [], []>} : vector<16x128xbf16>, vector<128x128xbf16>, vector<16x128xf32> -> vector<16x128xf32>
    %c0_118 = arith.constant 0 : index
    %c5 = arith.constant 5 : index
    %c0_119 = arith.constant 0 : index
    %265 = vector.load %arg5[%c0_118, %c5, %c0_119] : memref<2x8x128xf32, #tpu.memory_space<vmem>>, vector<1x1x128xf32>
    %266 = vector.shape_cast %265 : vector<1x1x128xf32> to vector<128xf32>
    %c0_120 = arith.constant 0 : index
    %c5_121 = arith.constant 5 : index
    %c0_122 = arith.constant 0 : index
    %267 = vector.load %arg6[%c0_120, %c5_121, %c0_122] : memref<2x8x128xf32, #tpu.memory_space<vmem>>, vector<1x1x128xf32>
    %268 = vector.shape_cast %267 : vector<1x1x128xf32> to vector<128xf32>
    %269 = arith.mulf %268, %266 : vector<128xf32>
    %270 = vector.shape_cast %266 : vector<128xf32> to vector<1x128xf32>
    %271 = vector.broadcast %270 : vector<1x128xf32> to vector<16x128xf32>
    %272 = arith.mulf %264, %271 : vector<16x128xf32>
    %273 = vector.shape_cast %269 : vector<128xf32> to vector<1x128xf32>
    %274 = vector.broadcast %8 : vector<16x1xf32> to vector<16x128xf32>
    %275 = vector.broadcast %273 : vector<1x128xf32> to vector<16x128xf32>
    %276 = arith.mulf %274, %275 : vector<16x128xf32>
    %277 = arith.subf %272, %276 : vector<16x128xf32>
    %278 = vector.extract_strided_slice %4 {offsets = [128, 0], sizes = [128, 128], strides = [1, 1]} : vector<256x128xi32> to vector<128x128xi32>
    %c20_i32_123 = arith.constant 20 : i32
    %279 = vector.broadcast %c20_i32_123 : i32 to vector<128x128xi32>
    %280 = arith.shrsi %278, %279 : vector<128x128xi32>
    %c15_i32_124 = arith.constant 15 : i32
    %281 = vector.broadcast %c15_i32_124 : i32 to vector<128x128xi32>
    %282 = arith.andi %280, %281 : vector<128x128xi32>
    %283 = arith.sitofp %282 : vector<128x128xi32> to vector<128x128xbf16>
    %284 = vector.extract_strided_slice %3 {offsets = [0, 128], sizes = [16, 128], strides = [1, 1]} : vector<16x256xbf16> to vector<16x128xbf16>
    %cst_125 = arith.constant dense<0.000000e+00> : vector<16x128xf32>
    %285 = tpu.matmul %284, %283, %cst_125 {dimension_numbers = #tpu.dot_dimension_numbers<[1], [0], [0], [1], [0, 0, 1, 1], [], []>} : vector<16x128xbf16>, vector<128x128xbf16>, vector<16x128xf32> -> vector<16x128xf32>
    %c1_126 = arith.constant 1 : index
    %c5_127 = arith.constant 5 : index
    %c0_128 = arith.constant 0 : index
    %286 = vector.load %arg5[%c1_126, %c5_127, %c0_128] : memref<2x8x128xf32, #tpu.memory_space<vmem>>, vector<1x1x128xf32>
    %287 = vector.shape_cast %286 : vector<1x1x128xf32> to vector<128xf32>
    %c1_129 = arith.constant 1 : index
    %c5_130 = arith.constant 5 : index
    %c0_131 = arith.constant 0 : index
    %288 = vector.load %arg6[%c1_129, %c5_130, %c0_131] : memref<2x8x128xf32, #tpu.memory_space<vmem>>, vector<1x1x128xf32>
    %289 = vector.shape_cast %288 : vector<1x1x128xf32> to vector<128xf32>
    %290 = arith.mulf %289, %287 : vector<128xf32>
    %291 = vector.shape_cast %287 : vector<128xf32> to vector<1x128xf32>
    %292 = vector.broadcast %291 : vector<1x128xf32> to vector<16x128xf32>
    %293 = arith.mulf %285, %292 : vector<16x128xf32>
    %294 = vector.shape_cast %290 : vector<128xf32> to vector<1x128xf32>
    %295 = vector.broadcast %11 : vector<16x1xf32> to vector<16x128xf32>
    %296 = vector.broadcast %294 : vector<1x128xf32> to vector<16x128xf32>
    %297 = arith.mulf %295, %296 : vector<16x128xf32>
    %298 = arith.subf %293, %297 : vector<16x128xf32>
    %299 = arith.addf %277, %298 : vector<16x128xf32>
    %c5_132 = arith.constant 5 : index
    %c0_133 = arith.constant 0 : index
    %c0_134 = arith.constant 0 : index
    %300 = vector.load %arg9[%c5_132, %c0_133, %c0_134] : memref<8x16x128xf32, #tpu.memory_space<vmem>>, vector<1x16x128xf32>
    %301 = vector.shape_cast %300 : vector<1x16x128xf32> to vector<16x128xf32>
    %302 = arith.addf %301, %299 : vector<16x128xf32>
    %c5_135 = arith.constant 5 : index
    %c0_136 = arith.constant 0 : index
    %c0_137 = arith.constant 0 : index
    %303 = vector.load %arg9[%c5_135, %c0_136, %c0_137] : memref<8x16x128xf32, #tpu.memory_space<vmem>>, vector<1x16x128xf32>
    %304 = vector.shape_cast %303 : vector<1x16x128xf32> to vector<16x128xf32>
    %305 = vector.shape_cast %302 : vector<16x128xf32> to vector<1x16x128xf32>
    tpu.vector_store %arg9[%c5_135, %c0_136, %c0_137], %305 {strides = array<i32>} : memref<8x16x128xf32, #tpu.memory_space<vmem>>, vector<1x16x128xf32>,
    %306 = vector.extract_strided_slice %4 {offsets = [0, 0], sizes = [128, 128], strides = [1, 1]} : vector<256x128xi32> to vector<128x128xi32>
    %c24_i32 = arith.constant 24 : i32
    %307 = vector.broadcast %c24_i32 : i32 to vector<128x128xi32>
    %308 = arith.shrsi %306, %307 : vector<128x128xi32>
    %c15_i32_138 = arith.constant 15 : i32
    %309 = vector.broadcast %c15_i32_138 : i32 to vector<128x128xi32>
    %310 = arith.andi %308, %309 : vector<128x128xi32>
    %311 = arith.sitofp %310 : vector<128x128xi32> to vector<128x128xbf16>
    %312 = vector.extract_strided_slice %3 {offsets = [0, 0], sizes = [16, 128], strides = [1, 1]} : vector<16x256xbf16> to vector<16x128xbf16>
    %cst_139 = arith.constant dense<0.000000e+00> : vector<16x128xf32>
    %313 = tpu.matmul %312, %311, %cst_139 {dimension_numbers = #tpu.dot_dimension_numbers<[1], [0], [0], [1], [0, 0, 1, 1], [], []>} : vector<16x128xbf16>, vector<128x128xbf16>, vector<16x128xf32> -> vector<16x128xf32>
    %c0_140 = arith.constant 0 : index
    %c6 = arith.constant 6 : index
    %c0_141 = arith.constant 0 : index
    %314 = vector.load %arg5[%c0_140, %c6, %c0_141] : memref<2x8x128xf32, #tpu.memory_space<vmem>>, vector<1x1x128xf32>
    %315 = vector.shape_cast %314 : vector<1x1x128xf32> to vector<128xf32>
    %c0_142 = arith.constant 0 : index
    %c6_143 = arith.constant 6 : index
    %c0_144 = arith.constant 0 : index
    %316 = vector.load %arg6[%c0_142, %c6_143, %c0_144] : memref<2x8x128xf32, #tpu.memory_space<vmem>>, vector<1x1x128xf32>
    %317 = vector.shape_cast %316 : vector<1x1x128xf32> to vector<128xf32>
    %318 = arith.mulf %317, %315 : vector<128xf32>
    %319 = vector.shape_cast %315 : vector<128xf32> to vector<1x128xf32>
    %320 = vector.broadcast %319 : vector<1x128xf32> to vector<16x128xf32>
    %321 = arith.mulf %313, %320 : vector<16x128xf32>
    %322 = vector.shape_cast %318 : vector<128xf32> to vector<1x128xf32>
    %323 = vector.broadcast %8 : vector<16x1xf32> to vector<16x128xf32>
    %324 = vector.broadcast %322 : vector<1x128xf32> to vector<16x128xf32>
    %325 = arith.mulf %323, %324 : vector<16x128xf32>
    %326 = arith.subf %321, %325 : vector<16x128xf32>
    %327 = vector.extract_strided_slice %4 {offsets = [128, 0], sizes = [128, 128], strides = [1, 1]} : vector<256x128xi32> to vector<128x128xi32>
    %c24_i32_145 = arith.constant 24 : i32
    %328 = vector.broadcast %c24_i32_145 : i32 to vector<128x128xi32>
    %329 = arith.shrsi %327, %328 : vector<128x128xi32>
    %c15_i32_146 = arith.constant 15 : i32
    %330 = vector.broadcast %c15_i32_146 : i32 to vector<128x128xi32>
    %331 = arith.andi %329, %330 : vector<128x128xi32>
    %332 = arith.sitofp %331 : vector<128x128xi32> to vector<128x128xbf16>
    %333 = vector.extract_strided_slice %3 {offsets = [0, 128], sizes = [16, 128], strides = [1, 1]} : vector<16x256xbf16> to vector<16x128xbf16>
    %cst_147 = arith.constant dense<0.000000e+00> : vector<16x128xf32>
    %334 = tpu.matmul %333, %332, %cst_147 {dimension_numbers = #tpu.dot_dimension_numbers<[1], [0], [0], [1], [0, 0, 1, 1], [], []>} : vector<16x128xbf16>, vector<128x128xbf16>, vector<16x128xf32> -> vector<16x128xf32>
    %c1_148 = arith.constant 1 : index
    %c6_149 = arith.constant 6 : index
    %c0_150 = arith.constant 0 : index
    %335 = vector.load %arg5[%c1_148, %c6_149, %c0_150] : memref<2x8x128xf32, #tpu.memory_space<vmem>>, vector<1x1x128xf32>
    %336 = vector.shape_cast %335 : vector<1x1x128xf32> to vector<128xf32>
    %c1_151 = arith.constant 1 : index
    %c6_152 = arith.constant 6 : index
    %c0_153 = arith.constant 0 : index
    %337 = vector.load %arg6[%c1_151, %c6_152, %c0_153] : memref<2x8x128xf32, #tpu.memory_space<vmem>>, vector<1x1x128xf32>
    %338 = vector.shape_cast %337 : vector<1x1x128xf32> to vector<128xf32>
    %339 = arith.mulf %338, %336 : vector<128xf32>
    %340 = vector.shape_cast %336 : vector<128xf32> to vector<1x128xf32>
    %341 = vector.broadcast %340 : vector<1x128xf32> to vector<16x128xf32>
    %342 = arith.mulf %334, %341 : vector<16x128xf32>
    %343 = vector.shape_cast %339 : vector<128xf32> to vector<1x128xf32>
    %344 = vector.broadcast %11 : vector<16x1xf32> to vector<16x128xf32>
    %345 = vector.broadcast %343 : vector<1x128xf32> to vector<16x128xf32>
    %346 = arith.mulf %344, %345 : vector<16x128xf32>
    %347 = arith.subf %342, %346 : vector<16x128xf32>
    %348 = arith.addf %326, %347 : vector<16x128xf32>
    %c6_154 = arith.constant 6 : index
    %c0_155 = arith.constant 0 : index
    %c0_156 = arith.constant 0 : index
    %349 = vector.load %arg9[%c6_154, %c0_155, %c0_156] : memref<8x16x128xf32, #tpu.memory_space<vmem>>, vector<1x16x128xf32>
    %350 = vector.shape_cast %349 : vector<1x16x128xf32> to vector<16x128xf32>
    %351 = arith.addf %350, %348 : vector<16x128xf32>
    %c6_157 = arith.constant 6 : index
    %c0_158 = arith.constant 0 : index
    %c0_159 = arith.constant 0 : index
    %352 = vector.load %arg9[%c6_157, %c0_158, %c0_159] : memref<8x16x128xf32, #tpu.memory_space<vmem>>, vector<1x16x128xf32>
    %353 = vector.shape_cast %352 : vector<1x16x128xf32> to vector<16x128xf32>
    %354 = vector.shape_cast %351 : vector<16x128xf32> to vector<1x16x128xf32>
    tpu.vector_store %arg9[%c6_157, %c0_158, %c0_159], %354 {strides = array<i32>} : memref<8x16x128xf32, #tpu.memory_space<vmem>>, vector<1x16x128xf32>,
    %355 = vector.extract_strided_slice %4 {offsets = [0, 0], sizes = [128, 128], strides = [1, 1]} : vector<256x128xi32> to vector<128x128xi32>
    %c28_i32 = arith.constant 28 : i32
    %356 = vector.broadcast %c28_i32 : i32 to vector<128x128xi32>
    %357 = arith.shrsi %355, %356 : vector<128x128xi32>
    %c15_i32_160 = arith.constant 15 : i32
    %358 = vector.broadcast %c15_i32_160 : i32 to vector<128x128xi32>
    %359 = arith.andi %357, %358 : vector<128x128xi32>
    %360 = arith.sitofp %359 : vector<128x128xi32> to vector<128x128xbf16>
    %361 = vector.extract_strided_slice %3 {offsets = [0, 0], sizes = [16, 128], strides = [1, 1]} : vector<16x256xbf16> to vector<16x128xbf16>
    %cst_161 = arith.constant dense<0.000000e+00> : vector<16x128xf32>
    %362 = tpu.matmul %361, %360, %cst_161 {dimension_numbers = #tpu.dot_dimension_numbers<[1], [0], [0], [1], [0, 0, 1, 1], [], []>} : vector<16x128xbf16>, vector<128x128xbf16>, vector<16x128xf32> -> vector<16x128xf32>
    %c0_162 = arith.constant 0 : index
    %c7 = arith.constant 7 : index
    %c0_163 = arith.constant 0 : index
    %363 = vector.load %arg5[%c0_162, %c7, %c0_163] : memref<2x8x128xf32, #tpu.memory_space<vmem>>, vector<1x1x128xf32>
    %364 = vector.shape_cast %363 : vector<1x1x128xf32> to vector<128xf32>
    %c0_164 = arith.constant 0 : index
    %c7_165 = arith.constant 7 : index
    %c0_166 = arith.constant 0 : index
    %365 = vector.load %arg6[%c0_164, %c7_165, %c0_166] : memref<2x8x128xf32, #tpu.memory_space<vmem>>, vector<1x1x128xf32>
    %366 = vector.shape_cast %365 : vector<1x1x128xf32> to vector<128xf32>
    %367 = arith.mulf %366, %364 : vector<128xf32>
    %368 = vector.shape_cast %364 : vector<128xf32> to vector<1x128xf32>
    %369 = vector.broadcast %368 : vector<1x128xf32> to vector<16x128xf32>
    %370 = arith.mulf %362, %369 : vector<16x128xf32>
    %371 = vector.shape_cast %367 : vector<128xf32> to vector<1x128xf32>
    %372 = vector.broadcast %8 : vector<16x1xf32> to vector<16x128xf32>
    %373 = vector.broadcast %371 : vector<1x128xf32> to vector<16x128xf32>
    %374 = arith.mulf %372, %373 : vector<16x128xf32>
    %375 = arith.subf %370, %374 : vector<16x128xf32>
    %376 = vector.extract_strided_slice %4 {offsets = [128, 0], sizes = [128, 128], strides = [1, 1]} : vector<256x128xi32> to vector<128x128xi32>
    %c28_i32_167 = arith.constant 28 : i32
    %377 = vector.broadcast %c28_i32_167 : i32 to vector<128x128xi32>
    %378 = arith.shrsi %376, %377 : vector<128x128xi32>
    %c15_i32_168 = arith.constant 15 : i32
    %379 = vector.broadcast %c15_i32_168 : i32 to vector<128x128xi32>
    %380 = arith.andi %378, %379 : vector<128x128xi32>
    %381 = arith.sitofp %380 : vector<128x128xi32> to vector<128x128xbf16>
    %382 = vector.extract_strided_slice %3 {offsets = [0, 128], sizes = [16, 128], strides = [1, 1]} : vector<16x256xbf16> to vector<16x128xbf16>
    %cst_169 = arith.constant dense<0.000000e+00> : vector<16x128xf32>
    %383 = tpu.matmul %382, %381, %cst_169 {dimension_numbers = #tpu.dot_dimension_numbers<[1], [0], [0], [1], [0, 0, 1, 1], [], []>} : vector<16x128xbf16>, vector<128x128xbf16>, vector<16x128xf32> -> vector<16x128xf32>
    %c1_170 = arith.constant 1 : index
    %c7_171 = arith.constant 7 : index
    %c0_172 = arith.constant 0 : index
    %384 = vector.load %arg5[%c1_170, %c7_171, %c0_172] : memref<2x8x128xf32, #tpu.memory_space<vmem>>, vector<1x1x128xf32>
    %385 = vector.shape_cast %384 : vector<1x1x128xf32> to vector<128xf32>
    %c1_173 = arith.constant 1 : index
    %c7_174 = arith.constant 7 : index
    %c0_175 = arith.constant 0 : index
    %386 = vector.load %arg6[%c1_173, %c7_174, %c0_175] : memref<2x8x128xf32, #tpu.memory_space<vmem>>, vector<1x1x128xf32>
    %387 = vector.shape_cast %386 : vector<1x1x128xf32> to vector<128xf32>
    %388 = arith.mulf %387, %385 : vector<128xf32>
    %389 = vector.shape_cast %385 : vector<128xf32> to vector<1x128xf32>
    %390 = vector.broadcast %389 : vector<1x128xf32> to vector<16x128xf32>
    %391 = arith.mulf %383, %390 : vector<16x128xf32>
    %392 = vector.shape_cast %388 : vector<128xf32> to vector<1x128xf32>
    %393 = vector.broadcast %11 : vector<16x1xf32> to vector<16x128xf32>
    %394 = vector.broadcast %392 : vector<1x128xf32> to vector<16x128xf32>
    %395 = arith.mulf %393, %394 : vector<16x128xf32>
    %396 = arith.subf %391, %395 : vector<16x128xf32>
    %397 = arith.addf %375, %396 : vector<16x128xf32>
    %c7_176 = arith.constant 7 : index
    %c0_177 = arith.constant 0 : index
    %c0_178 = arith.constant 0 : index
    %398 = vector.load %arg9[%c7_176, %c0_177, %c0_178] : memref<8x16x128xf32, #tpu.memory_space<vmem>>, vector<1x16x128xf32>
    %399 = vector.shape_cast %398 : vector<1x16x128xf32> to vector<16x128xf32>
    %400 = arith.addf %399, %397 : vector<16x128xf32>
    %c7_179 = arith.constant 7 : index
    %c0_180 = arith.constant 0 : index
    %c0_181 = arith.constant 0 : index
    %401 = vector.load %arg9[%c7_179, %c0_180, %c0_181] : memref<8x16x128xf32, #tpu.memory_space<vmem>>, vector<1x16x128xf32>
    %402 = vector.shape_cast %401 : vector<1x16x128xf32> to vector<16x128xf32>
    %403 = vector.shape_cast %400 : vector<16x128xf32> to vector<1x16x128xf32>
    tpu.vector_store %arg9[%c7_179, %c0_180, %c0_181], %403 {strides = array<i32>} : memref<8x16x128xf32, #tpu.memory_space<vmem>>, vector<1x16x128xf32>,
    %c0_i32_182 = arith.constant 0 : i32
    %404 = arith.cmpi eq, %arg2, %c0_i32_182 : i32
    %405 = arith.extui %404 : i1 to i32
    %c0_i32_183 = arith.constant 0 : i32
    %406 = arith.cmpi ne, %405, %c0_i32_183 : i32
    scf.if %406 {
      %c0_184 = arith.constant 0 : index
      %c0_185 = arith.constant 0 : index
      %c0_186 = arith.constant 0 : index
      %407 = vector.load %arg9[%c0_184, %c0_185, %c0_186] : memref<8x16x128xf32, #tpu.memory_space<vmem>>, vector<1x16x128xf32>
      %408 = vector.shape_cast %407 : vector<1x16x128xf32> to vector<16x128xf32>
      %c0_187 = arith.constant 0 : index
      %c0_188 = arith.constant 0 : index
      %c0_189 = arith.constant 0 : index
      %409 = vector.load %arg7[%c0_187, %c0_188, %c0_189] : memref<1x8x128xf32, #tpu.memory_space<vmem>>, vector<1x1x128xf32>
      %410 = vector.shape_cast %409 : vector<1x1x128xf32> to vector<128xf32>
      %411 = vector.shape_cast %410 : vector<128xf32> to vector<1x128xf32>
      %412 = vector.broadcast %411 : vector<1x128xf32> to vector<16x128xf32>
      %413 = arith.addf %408, %412 : vector<16x128xf32>
      %414 = arith.truncf %413 : vector<16x128xf32> to vector<16x128xbf16>
      %c0_190 = arith.constant 0 : index
      %c0_191 = arith.constant 0 : index
      %c0_192 = arith.constant 0 : index
      %415 = vector.load %arg8[%c0_190, %c0_191, %c0_192] : memref<16x8x128xbf16, #tpu.memory_space<vmem>>, vector<16x1x128xbf16>
      %416 = vector.shape_cast %415 : vector<16x1x128xbf16> to vector<16x128xbf16>
      %417 = vector.shape_cast %414 : vector<16x128xbf16> to vector<16x1x128xbf16>
      tpu.vector_store %arg8[%c0_190, %c0_191, %c0_192], %417 {strides = array<i32>} : memref<16x8x128xbf16, #tpu.memory_space<vmem>>, vector<16x1x128xbf16>,
      %c1_193 = arith.constant 1 : index
      %c0_194 = arith.constant 0 : index
      %c0_195 = arith.constant 0 : index
      %418 = vector.load %arg9[%c1_193, %c0_194, %c0_195] : memref<8x16x128xf32, #tpu.memory_space<vmem>>, vector<1x16x128xf32>
      %419 = vector.shape_cast %418 : vector<1x16x128xf32> to vector<16x128xf32>
      %c0_196 = arith.constant 0 : index
      %c1_197 = arith.constant 1 : index
      %c0_198 = arith.constant 0 : index
      %420 = vector.load %arg7[%c0_196, %c1_197, %c0_198] : memref<1x8x128xf32, #tpu.memory_space<vmem>>, vector<1x1x128xf32>
      %421 = vector.shape_cast %420 : vector<1x1x128xf32> to vector<128xf32>
      %422 = vector.shape_cast %421 : vector<128xf32> to vector<1x128xf32>
      %423 = vector.broadcast %422 : vector<1x128xf32> to vector<16x128xf32>
      %424 = arith.addf %419, %423 : vector<16x128xf32>
      %425 = arith.truncf %424 : vector<16x128xf32> to vector<16x128xbf16>
      %c0_199 = arith.constant 0 : index
      %c1_200 = arith.constant 1 : index
      %c0_201 = arith.constant 0 : index
      %426 = vector.load %arg8[%c0_199, %c1_200, %c0_201] : memref<16x8x128xbf16, #tpu.memory_space<vmem>>, vector<16x1x128xbf16>
      %427 = vector.shape_cast %426 : vector<16x1x128xbf16> to vector<16x128xbf16>
      %428 = vector.shape_cast %425 : vector<16x128xbf16> to vector<16x1x128xbf16>
      tpu.vector_store %arg8[%c0_199, %c1_200, %c0_201], %428 {strides = array<i32>} : memref<16x8x128xbf16, #tpu.memory_space<vmem>>, vector<16x1x128xbf16>,
      %c2_202 = arith.constant 2 : index
      %c0_203 = arith.constant 0 : index
      %c0_204 = arith.constant 0 : index
      %429 = vector.load %arg9[%c2_202, %c0_203, %c0_204] : memref<8x16x128xf32, #tpu.memory_space<vmem>>, vector<1x16x128xf32>
      %430 = vector.shape_cast %429 : vector<1x16x128xf32> to vector<16x128xf32>
      %c0_205 = arith.constant 0 : index
      %c2_206 = arith.constant 2 : index
      %c0_207 = arith.constant 0 : index
      %431 = vector.load %arg7[%c0_205, %c2_206, %c0_207] : memref<1x8x128xf32, #tpu.memory_space<vmem>>, vector<1x1x128xf32>
      %432 = vector.shape_cast %431 : vector<1x1x128xf32> to vector<128xf32>
      %433 = vector.shape_cast %432 : vector<128xf32> to vector<1x128xf32>
      %434 = vector.broadcast %433 : vector<1x128xf32> to vector<16x128xf32>
      %435 = arith.addf %430, %434 : vector<16x128xf32>
      %436 = arith.truncf %435 : vector<16x128xf32> to vector<16x128xbf16>
      %c0_208 = arith.constant 0 : index
      %c2_209 = arith.constant 2 : index
      %c0_210 = arith.constant 0 : index
      %437 = vector.load %arg8[%c0_208, %c2_209, %c0_210] : memref<16x8x128xbf16, #tpu.memory_space<vmem>>, vector<16x1x128xbf16>
      %438 = vector.shape_cast %437 : vector<16x1x128xbf16> to vector<16x128xbf16>
      %439 = vector.shape_cast %436 : vector<16x128xbf16> to vector<16x1x128xbf16>
      tpu.vector_store %arg8[%c0_208, %c2_209, %c0_210], %439 {strides = array<i32>} : memref<16x8x128xbf16, #tpu.memory_space<vmem>>, vector<16x1x128xbf16>,
      %c3_211 = arith.constant 3 : index
      %c0_212 = arith.constant 0 : index
      %c0_213 = arith.constant 0 : index
      %440 = vector.load %arg9[%c3_211, %c0_212, %c0_213] : memref<8x16x128xf32, #tpu.memory_space<vmem>>, vector<1x16x128xf32>
      %441 = vector.shape_cast %440 : vector<1x16x128xf32> to vector<16x128xf32>
      %c0_214 = arith.constant 0 : index
      %c3_215 = arith.constant 3 : index
      %c0_216 = arith.constant 0 : index
      %442 = vector.load %arg7[%c0_214, %c3_215, %c0_216] : memref<1x8x128xf32, #tpu.memory_space<vmem>>, vector<1x1x128xf32>
      %443 = vector.shape_cast %442 : vector<1x1x128xf32> to vector<128xf32>
      %444 = vector.shape_cast %443 : vector<128xf32> to vector<1x128xf32>
      %445 = vector.broadcast %444 : vector<1x128xf32> to vector<16x128xf32>
      %446 = arith.addf %441, %445 : vector<16x128xf32>
      %447 = arith.truncf %446 : vector<16x128xf32> to vector<16x128xbf16>
      %c0_217 = arith.constant 0 : index
      %c3_218 = arith.constant 3 : index
      %c0_219 = arith.constant 0 : index
      %448 = vector.load %arg8[%c0_217, %c3_218, %c0_219] : memref<16x8x128xbf16, #tpu.memory_space<vmem>>, vector<16x1x128xbf16>
      %449 = vector.shape_cast %448 : vector<16x1x128xbf16> to vector<16x128xbf16>
      %450 = vector.shape_cast %447 : vector<16x128xbf16> to vector<16x1x128xbf16>
      tpu.vector_store %arg8[%c0_217, %c3_218, %c0_219], %450 {strides = array<i32>} : memref<16x8x128xbf16, #tpu.memory_space<vmem>>, vector<16x1x128xbf16>,
      %c4_220 = arith.constant 4 : index
      %c0_221 = arith.constant 0 : index
      %c0_222 = arith.constant 0 : index
      %451 = vector.load %arg9[%c4_220, %c0_221, %c0_222] : memref<8x16x128xf32, #tpu.memory_space<vmem>>, vector<1x16x128xf32>
      %452 = vector.shape_cast %451 : vector<1x16x128xf32> to vector<16x128xf32>
      %c0_223 = arith.constant 0 : index
      %c4_224 = arith.constant 4 : index
      %c0_225 = arith.constant 0 : index
      %453 = vector.load %arg7[%c0_223, %c4_224, %c0_225] : memref<1x8x128xf32, #tpu.memory_space<vmem>>, vector<1x1x128xf32>
      %454 = vector.shape_cast %453 : vector<1x1x128xf32> to vector<128xf32>
      %455 = vector.shape_cast %454 : vector<128xf32> to vector<1x128xf32>
      %456 = vector.broadcast %455 : vector<1x128xf32> to vector<16x128xf32>
      %457 = arith.addf %452, %456 : vector<16x128xf32>
      %458 = arith.truncf %457 : vector<16x128xf32> to vector<16x128xbf16>
      %c0_226 = arith.constant 0 : index
      %c4_227 = arith.constant 4 : index
      %c0_228 = arith.constant 0 : index
      %459 = vector.load %arg8[%c0_226, %c4_227, %c0_228] : memref<16x8x128xbf16, #tpu.memory_space<vmem>>, vector<16x1x128xbf16>
      %460 = vector.shape_cast %459 : vector<16x1x128xbf16> to vector<16x128xbf16>
      %461 = vector.shape_cast %458 : vector<16x128xbf16> to vector<16x1x128xbf16>
      tpu.vector_store %arg8[%c0_226, %c4_227, %c0_228], %461 {strides = array<i32>} : memref<16x8x128xbf16, #tpu.memory_space<vmem>>, vector<16x1x128xbf16>,
      %c5_229 = arith.constant 5 : index
      %c0_230 = arith.constant 0 : index
      %c0_231 = arith.constant 0 : index
      %462 = vector.load %arg9[%c5_229, %c0_230, %c0_231] : memref<8x16x128xf32, #tpu.memory_space<vmem>>, vector<1x16x128xf32>
      %463 = vector.shape_cast %462 : vector<1x16x128xf32> to vector<16x128xf32>
      %c0_232 = arith.constant 0 : index
      %c5_233 = arith.constant 5 : index
      %c0_234 = arith.constant 0 : index
      %464 = vector.load %arg7[%c0_232, %c5_233, %c0_234] : memref<1x8x128xf32, #tpu.memory_space<vmem>>, vector<1x1x128xf32>
      %465 = vector.shape_cast %464 : vector<1x1x128xf32> to vector<128xf32>
      %466 = vector.shape_cast %465 : vector<128xf32> to vector<1x128xf32>
      %467 = vector.broadcast %466 : vector<1x128xf32> to vector<16x128xf32>
      %468 = arith.addf %463, %467 : vector<16x128xf32>
      %469 = arith.truncf %468 : vector<16x128xf32> to vector<16x128xbf16>
      %c0_235 = arith.constant 0 : index
      %c5_236 = arith.constant 5 : index
      %c0_237 = arith.constant 0 : index
      %470 = vector.load %arg8[%c0_235, %c5_236, %c0_237] : memref<16x8x128xbf16, #tpu.memory_space<vmem>>, vector<16x1x128xbf16>
      %471 = vector.shape_cast %470 : vector<16x1x128xbf16> to vector<16x128xbf16>
      %472 = vector.shape_cast %469 : vector<16x128xbf16> to vector<16x1x128xbf16>
      tpu.vector_store %arg8[%c0_235, %c5_236, %c0_237], %472 {strides = array<i32>} : memref<16x8x128xbf16, #tpu.memory_space<vmem>>, vector<16x1x128xbf16>,
      %c6_238 = arith.constant 6 : index
      %c0_239 = arith.constant 0 : index
      %c0_240 = arith.constant 0 : index
      %473 = vector.load %arg9[%c6_238, %c0_239, %c0_240] : memref<8x16x128xf32, #tpu.memory_space<vmem>>, vector<1x16x128xf32>
      %474 = vector.shape_cast %473 : vector<1x16x128xf32> to vector<16x128xf32>
      %c0_241 = arith.constant 0 : index
      %c6_242 = arith.constant 6 : index
      %c0_243 = arith.constant 0 : index
      %475 = vector.load %arg7[%c0_241, %c6_242, %c0_243] : memref<1x8x128xf32, #tpu.memory_space<vmem>>, vector<1x1x128xf32>
      %476 = vector.shape_cast %475 : vector<1x1x128xf32> to vector<128xf32>
      %477 = vector.shape_cast %476 : vector<128xf32> to vector<1x128xf32>
      %478 = vector.broadcast %477 : vector<1x128xf32> to vector<16x128xf32>
      %479 = arith.addf %474, %478 : vector<16x128xf32>
      %480 = arith.truncf %479 : vector<16x128xf32> to vector<16x128xbf16>
      %c0_244 = arith.constant 0 : index
      %c6_245 = arith.constant 6 : index
      %c0_246 = arith.constant 0 : index
      %481 = vector.load %arg8[%c0_244, %c6_245, %c0_246] : memref<16x8x128xbf16, #tpu.memory_space<vmem>>, vector<16x1x128xbf16>
      %482 = vector.shape_cast %481 : vector<16x1x128xbf16> to vector<16x128xbf16>
      %483 = vector.shape_cast %480 : vector<16x128xbf16> to vector<16x1x128xbf16>
      tpu.vector_store %arg8[%c0_244, %c6_245, %c0_246], %483 {strides = array<i32>} : memref<16x8x128xbf16, #tpu.memory_space<vmem>>, vector<16x1x128xbf16>,
      %c7_247 = arith.constant 7 : index
      %c0_248 = arith.constant 0 : index
      %c0_249 = arith.constant 0 : index
      %484 = vector.load %arg9[%c7_247, %c0_248, %c0_249] : memref<8x16x128xf32, #tpu.memory_space<vmem>>, vector<1x16x128xf32>
      %485 = vector.shape_cast %484 : vector<1x16x128xf32> to vector<16x128xf32>
      %c0_250 = arith.constant 0 : index
      %c7_251 = arith.constant 7 : index
      %c0_252 = arith.constant 0 : index
      %486 = vector.load %arg7[%c0_250, %c7_251, %c0_252] : memref<1x8x128xf32, #tpu.memory_space<vmem>>, vector<1x1x128xf32>
      %487 = vector.shape_cast %486 : vector<1x1x128xf32> to vector<128xf32>
      %488 = vector.shape_cast %487 : vector<128xf32> to vector<1x128xf32>
      %489 = vector.broadcast %488 : vector<1x128xf32> to vector<16x128xf32>
      %490 = arith.addf %485, %489 : vector<16x128xf32>
      %491 = arith.truncf %490 : vector<16x128xf32> to vector<16x128xbf16>
      %c0_253 = arith.constant 0 : index
      %c7_254 = arith.constant 7 : index
      %c0_255 = arith.constant 0 : index
      %492 = vector.load %arg8[%c0_253, %c7_254, %c0_255] : memref<16x8x128xbf16, #tpu.memory_space<vmem>>, vector<16x1x128xbf16>
      %493 = vector.shape_cast %492 : vector<16x1x128xbf16> to vector<16x128xbf16>
      %494 = vector.shape_cast %491 : vector<16x128xbf16> to vector<16x1x128xbf16>
      tpu.vector_store %arg8[%c0_253, %c7_254, %c0_255], %494 {strides = array<i32>} : memref<16x8x128xbf16, #tpu.memory_space<vmem>>, vector<16x1x128xbf16>,
    } else {
    }
    return
  }
  func.func @transform_0(%arg0: i32, %arg1: i32, %arg2: i32) -> (i32, i32) {
    %c0_i32 = arith.constant 0 : i32
    return %arg0, %arg2 : i32, i32
  }
  func.func @transform_1(%arg0: i32, %arg1: i32, %arg2: i32) -> (i32, i32) {
    %c0_i32 = arith.constant 0 : i32
    return %arg2, %arg1 : i32, i32
  }
  func.func @transform_2(%arg0: i32, %arg1: i32, %arg2: i32) -> (i32, i32, i32) {
    %c0_i32 = arith.constant 0 : i32
    %c0_i32_0 = arith.constant 0 : i32
    return %arg2, %c0_i32, %arg1 : i32, i32, i32
  }
  func.func @transform_3(%arg0: i32, %arg1: i32, %arg2: i32) -> (i32, i32, i32) {
    %c0_i32 = arith.constant 0 : i32
    %c0_i32_0 = arith.constant 0 : i32
    return %arg2, %c0_i32, %arg1 : i32, i32, i32
  }
  func.func @transform_4(%arg0: i32, %arg1: i32, %arg2: i32) -> (i32, i32, i32) {
    %c0_i32 = arith.constant 0 : i32
    %c0_i32_0 = arith.constant 0 : i32
    %c0_i32_1 = arith.constant 0 : i32
    return %c0_i32, %c0_i32_0, %arg1 : i32, i32, i32
  }
  func.func @transform_5(%arg0: i32, %arg1: i32, %arg2: i32) -> (i32, i32, i32) {
    %c0_i32 = arith.constant 0 : i32
    %c0_i32_0 = arith.constant 0 : i32
    return %arg0, %c0_i32, %arg1 : i32, i32, i32
  }
}

</mosaic_0001>

<llo_original>
// kernel: tpu_custom_call.1
$region0: #{tpu_custom_call.1}
  #allocation0 [shape = 'u32[]', space=smem, size = 0x4, offset = 0x4, fixed_abs, tag = 'smem constant byte address 0x4 - core index']
  #allocation1 [shape = 'u32[72,128]{1,0:T(1,128)}', space=vmem, size = 0x9000, scoped, tag = 'internal scratch']
  #allocation2 [shape = 'f32[8,16,128]{2,1,0:T(8,128)}', space=vmem, size = 0x10000, scoped, tag = 'scratch operand']
  %s0 = inlined_call_operand.hbm [shape: bf16[16,256], index: 0, kind: input, shape index: {}]
  %s1 = inlined_call_operand.hbm [shape: s32[256,128], index: 1, kind: input, shape index: {}]
  %s2 = inlined_call_operand.hbm [shape: f32[2,8,128], index: 2, kind: input, shape index: {}]
  %s3 = inlined_call_operand.hbm [shape: f32[2,8,128], index: 3, kind: input, shape index: {}]
  %s4 = inlined_call_operand.hbm [shape: f32[1,8,128], index: 4, kind: input, shape index: {}]
  %s5 = inlined_call_operand.hbm [shape: bf16[16,8,128], index: 5, kind: output, shape index: {}]
  %s6 = sld [smem:[#allocation0]]
  $region58: #{tpu_custom_call.1} parent=0
    _
  %s8 = ssub.s32 1, %s6
  %s9 = scalar_select 0, %s8, %s6
  $region1: #{tpu_custom_call.1} parent=0
    #allocation3 [shape = 'u8[8192]{0}', space=vmem, size = 0x2000, scoped, tag = 'input window, operand 0, single buffered']
    #allocation4 [shape = 's32[1]{0}', space=sflag, size = 0x4, scoped, tag = 'scoped memory for tpu_custom_call.1']
    #allocation5 [shape = 's32[1]{0}', space=sflag, size = 0x4, scoped, tag = 'scoped memory for tpu_custom_call.1']
    #allocation6 [shape = 'u8[131072]{0}', space=vmem, size = 0x20000, scoped, tag = 'input window, operand 1, single buffered']
    #allocation7 [shape = 's32[1]{0}', space=sflag, size = 0x4, scoped, tag = 'scoped memory for tpu_custom_call.1']
    #allocation8 [shape = 'u8[8192]{0}', space=vmem, size = 0x2000, scoped, tag = 'input window, operand 2, single buffered']
    #allocation9 [shape = 'u8[8192]{0}', space=vmem, size = 0x2000, scoped, tag = 'input window, operand 3, single buffered']
    #allocation10 [shape = 's32[1]{0}', space=sflag, size = 0x4, scoped, tag = 'scoped memory for tpu_custom_call.1']
    #allocation11 [shape = 'u8[4096]{0}', space=vmem, size = 0x1000, scoped, tag = 'input window, operand 4, single buffered']
    #allocation12 [shape = 'u8[32768]{0}', space=vmem, size = 0x8000, scoped, tag = 'output window, operand 0, single buffered']
    %10 = vsyncpa [#allocation4], 0
    %11 = vsyncpa [#allocation7], 0
    %12 = vsyncpa [#allocation10], 0
    %13 = vsyncpa [#allocation5], 0
    // Predicated region
    $region2: #{tpu_custom_call.1} parent=1 // pred_check
      _
    $region3: #{tpu_custom_call.1} parent=1 // pred_check_branch
      %15 = sbr.rel (0) target = $region5
    $region4: #{tpu_custom_call.1} parent=1 // pred_region
      %17 = vsyncadd [#allocation4], 0
      %s18 = sshll.u32 %s0, 4
      %s19 = int_to_ptr.hbm [resolvable:$true] %s18
      %s20 = sshll.u32 [#allocation3], 4
      %s21 = int_to_ptr.vmem [resolvable:$true] %s20
      %26 = dma.hbm_to_vmem [thread:$0]  %s19, 256, %s21, [#allocation4], 128, 128, 8
    $region5: #{tpu_custom_call.1} parent=1 // pred_fallthru
      _
    // Predicated region
    $region6: #{tpu_custom_call.1} parent=1 // pred_check
      _
    $region7: #{tpu_custom_call.1} parent=1 // pred_check_branch
      %28 = sbr.rel (0) target = $region9
    $region8: #{tpu_custom_call.1} parent=1 // pred_region
      %30 = vsyncadd [#allocation7], 0
      %s31 = sshll.u32 %s1, 4
      %s32 = int_to_ptr.hbm [resolvable:$true] %s31
      %s33 = sshll.u32 [#allocation6], 4
      %s34 = int_to_ptr.vmem [resolvable:$true] %s33
      %39 = dma.hbm_to_vmem [thread:$0]  %s32, 4096, %s34, [#allocation7], 128, 128, 8
    $region9: #{tpu_custom_call.1} parent=1 // pred_fallthru
      _
    // Predicated region
    $region10: #{tpu_custom_call.1} parent=1 // pred_check
      _
    $region11: #{tpu_custom_call.1} parent=1 // pred_check_branch
      %41 = sbr.rel (0) target = $region13
    $region12: #{tpu_custom_call.1} parent=1 // pred_region
      %43 = vsyncadd [#allocation7], 0
      %s44 = sshll.u32 %s2, 4
      %s45 = int_to_ptr.hbm [resolvable:$true] %s44
      %s46 = sshll.u32 [#allocation8], 4
      %s47 = int_to_ptr.vmem [resolvable:$true] %s46
      %52 = dma.hbm_to_vmem [thread:$0]  %s45, 256, %s47, [#allocation7], 128, 128, 8
    $region13: #{tpu_custom_call.1} parent=1 // pred_fallthru
      _
    // Predicated region
    $region14: #{tpu_custom_call.1} parent=1 // pred_check
      _
    $region15: #{tpu_custom_call.1} parent=1 // pred_check_branch
      %54 = sbr.rel (0) target = $region17
    $region16: #{tpu_custom_call.1} parent=1 // pred_region
      %56 = vsyncadd [#allocation10], 0
      %s57 = sshll.u32 %s3, 4
      %s58 = int_to_ptr.hbm [resolvable:$true] %s57
      %s59 = sshll.u32 [#allocation9], 4
      %s60 = int_to_ptr.vmem [resolvable:$true] %s59
      %65 = dma.hbm_to_vmem [thread:$0]  %s58, 256, %s60, [#allocation10], 128, 128, 8
    $region17: #{tpu_custom_call.1} parent=1 // pred_fallthru
      _
    // Predicated region
    $region18: #{tpu_custom_call.1} parent=1 // pred_check
      _
    $region19: #{tpu_custom_call.1} parent=1 // pred_check_branch
      %67 = sbr.rel (0) target = $region21
    $region20: #{tpu_custom_call.1} parent=1 // pred_region
      %69 = vsyncadd [#allocation10], 0
      %s71 = sshll.u32 %s4, 4
      %s72 = int_to_ptr.hbm [resolvable:$true] %s71
      %s73 = sshll.u32 [#allocation11], 4
      %s74 = int_to_ptr.vmem [resolvable:$true] %s73
      %76 = dma.hbm_to_vmem [thread:$0]  %s72, 128, %s74, [#allocation10]
    $region21: #{tpu_custom_call.1} parent=1 // pred_fallthru
      _
    // Predicated region
    $region22: #{tpu_custom_call.1} parent=1 // pred_check
      _
    $region23: #{tpu_custom_call.1} parent=1 // pred_check_branch
      %78 = sbr.rel (0) target = $region25
    $region24: #{tpu_custom_call.1} parent=1 // pred_region
      %80 = dma.done [#allocation4], 256
    $region25: #{tpu_custom_call.1} parent=1 // pred_fallthru
      _
    // Predicated region
    $region26: #{tpu_custom_call.1} parent=1 // pred_check
      _
    $region27: #{tpu_custom_call.1} parent=1 // pred_check_branch
      %82 = sbr.rel (0) target = $region29
    $region28: #{tpu_custom_call.1} parent=1 // pred_region
      %84 = dma.done [#allocation7], 4096
    $region29: #{tpu_custom_call.1} parent=1 // pred_fallthru
      _
    // Predicated region
    $region30: #{tpu_custom_call.1} parent=1 // pred_check
      _
    $region31: #{tpu_custom_call.1} parent=1 // pred_check_branch
      %86 = sbr.rel (0) target = $region33
    $region32: #{tpu_custom_call.1} parent=1 // pred_region
      %88 = dma.done [#allocation7], 256
    $region33: #{tpu_custom_call.1} parent=1 // pred_fallthru
      _
    // Predicated region
    $region34: #{tpu_custom_call.1} parent=1 // pred_check
      _
    $region35: #{tpu_custom_call.1} parent=1 // pred_check_branch
      %90 = sbr.rel (0) target = $region37
    $region36: #{tpu_custom_call.1} parent=1 // pred_region
      %92 = dma.done [#allocation10], 256
    $region37: #{tpu_custom_call.1} parent=1 // pred_fallthru
      _
    // Predicated region
    $region38: #{tpu_custom_call.1} parent=1 // pred_check
      _
    $region39: #{tpu_custom_call.1} parent=1 // pred_check_branch
      %94 = sbr.rel (0) target = $region41
    $region40: #{tpu_custom_call.1} parent=1 // pred_region
      %96 = dma.done [#allocation10], 128
    $region41: #{tpu_custom_call.1} parent=1 // pred_fallthru
      _
    %p97 = scmp.eq.s32.totalorder 0, 0
    // Predicated region
    $region42: #{tpu_custom_call.1} parent=1 // pred_check
      %p98 = pneg %p97
    $region43: #{tpu_custom_call.1} parent=1 // pred_check_branch
      %100 = sbr.rel (%p98) target = $region45
    $region44: #{tpu_custom_call.1} parent=1 // pred_region
      %101 = vst [vmem:[#allocation2] sm:$0xff] 0.0
      %102 = vst [vmem:[#allocation2 + $0x8] sm:$0xff] 0.0
      %103 = vst [vmem:[#allocation2 + $0x10] sm:$0xff] 0.0
      %104 = vst [vmem:[#allocation2 + $0x18] sm:$0xff] 0.0
      %105 = vst [vmem:[#allocation2 + $0x20] sm:$0xff] 0.0
      %106 = vst [vmem:[#allocation2 + $0x28] sm:$0xff] 0.0
      %107 = vst [vmem:[#allocation2 + $0x30] sm:$0xff] 0.0
      %108 = vst [vmem:[#allocation2 + $0x38] sm:$0xff] 0.0
      %109 = vst [vmem:[#allocation2 + $0x40] sm:$0xff] 0.0
      %110 = vst [vmem:[#allocation2 + $0x48] sm:$0xff] 0.0
      %111 = vst [vmem:[#allocation2 + $0x50] sm:$0xff] 0.0
      %112 = vst [vmem:[#allocation2 + $0x58] sm:$0xff] 0.0
      %113 = vst [vmem:[#allocation2 + $0x60] sm:$0xff] 0.0
      %114 = vst [vmem:[#allocation2 + $0x68] sm:$0xff] 0.0
      %115 = vst [vmem:[#allocation2 + $0x70] sm:$0xff] 0.0
      %116 = vst [vmem:[#allocation2 + $0x78] sm:$0xff] 0.0
    $region45: #{tpu_custom_call.1} parent=1 // pred_fallthru
      _
    %v117 = vld [vmem:[#allocation3] sm:$0xff]
    %v118 = vld [vmem:[#allocation3 + $0x8] sm:$0xff]
    %v119 = vld [vmem:[#allocation6] sm:$0xff]
    %v120 = vld [vmem:[#allocation6 + $0x8] sm:$0xff]
    %v121 = vld [vmem:[#allocation6 + $0x10] sm:$0xff]
    %v122 = vld [vmem:[#allocation6 + $0x18] sm:$0xff]
    %v123 = vld [vmem:[#allocation6 + $0x20] sm:$0xff]
    %v124 = vld [vmem:[#allocation6 + $0x28] sm:$0xff]
    %v125 = vld [vmem:[#allocation6 + $0x30] sm:$0xff]
    %v126 = vld [vmem:[#allocation6 + $0x38] sm:$0xff]
    %v127 = vld [vmem:[#allocation6 + $0x40] sm:$0xff]
    %v128 = vld [vmem:[#allocation6 + $0x48] sm:$0xff]
    %v129 = vld [vmem:[#allocation6 + $0x50] sm:$0xff]
    %v130 = vld [vmem:[#allocation6 + $0x58] sm:$0xff]
    %v131 = vld [vmem:[#allocation6 + $0x60] sm:$0xff]
    %v132 = vld [vmem:[#allocation6 + $0x68] sm:$0xff]
    %v133 = vld [vmem:[#allocation6 + $0x70] sm:$0xff]
    %v134 = vld [vmem:[#allocation6 + $0x78] sm:$0xff]
    %v135 = vld [vmem:[#allocation6 + $0x80] sm:$0xff]
    %v136 = vld [vmem:[#allocation6 + $0x88] sm:$0xff]
    %v137 = vld [vmem:[#allocation6 + $0x90] sm:$0xff]
    %v138 = vld [vmem:[#allocation6 + $0x98] sm:$0xff]
    %v139 = vld [vmem:[#allocation6 + $0xa0] sm:$0xff]
    %v140 = vld [vmem:[#allocation6 + $0xa8] sm:$0xff]
    %v141 = vld [vmem:[#allocation6 + $0xb0] sm:$0xff]
    %v142 = vld [vmem:[#allocation6 + $0xb8] sm:$0xff]
    %v143 = vld [vmem:[#allocation6 + $0xc0] sm:$0xff]
    %v144 = vld [vmem:[#allocation6 + $0xc8] sm:$0xff]
    %v145 = vld [vmem:[#allocation6 + $0xd0] sm:$0xff]
    %v146 = vld [vmem:[#allocation6 + $0xd8] sm:$0xff]
    %v147 = vld [vmem:[#allocation6 + $0xe0] sm:$0xff]
    %v148 = vld [vmem:[#allocation6 + $0xe8] sm:$0xff]
    %v149 = vld [vmem:[#allocation6 + $0xf0] sm:$0xff]
    %v150 = vld [vmem:[#allocation6 + $0xf8] sm:$0xff]
    %v151 = vunpack.c.l.bf16 %v117
    %v152 = vunpack.c.h.bf16 %v117
    %v153 = vunpack.c.l.bf16 %v118
    %v154 = vunpack.c.h.bf16 %v118
    %155 = vadd.xlane.f32.xlu0 %v151
    %v156 = vpop.xlane.xlu0 %155
    %157 = vadd.xlane.f32.xlu0 %v153
    %v158 = vpop.xlane.xlu0 %157
    %159 = vadd.xlane.f32.xlu0 %v152
    %v160 = vpop.xlane.xlu0 %159
    %161 = vadd.xlane.f32.xlu0 %v154
    %v162 = vpop.xlane.xlu0 %161
    %v163 = vand.u32 %v119, 15
    %v164 = vand.u32 %v120, 15
    %v165 = vand.u32 %v121, 15
    %v166 = vand.u32 %v122, 15
    %v167 = vand.u32 %v123, 15
    %v168 = vand.u32 %v124, 15
    %v169 = vand.u32 %v125, 15
    %v170 = vand.u32 %v126, 15
    %v171 = vand.u32 %v127, 15
    %v172 = vand.u32 %v128, 15
    %v173 = vand.u32 %v129, 15
    %v174 = vand.u32 %v130, 15
    %v175 = vand.u32 %v131, 15
    %v176 = vand.u32 %v132, 15
    %v177 = vand.u32 %v133, 15
    %v178 = vand.u32 %v134, 15
    %v179 = vcvt.s32.f32 %v163
    %v180 = vcvt.s32.f32 %v164
    %v181 = vcvt.s32.f32 %v165
    %v182 = vcvt.s32.f32 %v166
    %v183 = vcvt.s32.f32 %v167
    %v184 = vcvt.s32.f32 %v168
    %v185 = vcvt.s32.f32 %v169
    %v186 = vcvt.s32.f32 %v170
    %v187 = vcvt.s32.f32 %v171
    %v188 = vcvt.s32.f32 %v172
    %v189 = vcvt.s32.f32 %v173
    %v190 = vcvt.s32.f32 %v174
    %v191 = vcvt.s32.f32 %v175
    %v192 = vcvt.s32.f32 %v176
    %v193 = vcvt.s32.f32 %v177
    %v194 = vcvt.s32.f32 %v178
    %v195 = vpack.c.bf16 %v180, %v179
    %v196 = vpack.c.bf16 %v182, %v181
    %v197 = vpack.c.bf16 %v184, %v183
    %v198 = vpack.c.bf16 %v186, %v185
    %v199 = vpack.c.bf16 %v188, %v187
    %v200 = vpack.c.bf16 %v190, %v189
    %v201 = vpack.c.bf16 %v192, %v191
    %v202 = vpack.c.bf16 %v194, %v193
    %v205 = vunpack.c.l.b16 %v117
    %v206 = vunpack.c.l.b16 %v118
    %v207 = vpack.c.b16 %v206, %v205
    %209 = vmatpush.bf16.msra.mxu0 %v202
    %210 = vmatpush.bf16.msra.mxu0 %v201
    %211 = vmatpush.bf16.msra.mxu0 %v200
    %212 = vmatpush.bf16.msra.mxu0 %v199
    %213 = vmatpush.bf16.msra.mxu0 %v198
    %214 = vmatpush.bf16.msra.mxu0 %v197
    %215 = vmatpush.bf16.msra.mxu0 %v196
    %216 = vmatpush.bf16.msra.mxu0 %v195
    %217 = vmatmul.bf16.gmra.mxu0 %v207
    %v218 = vpop.f32.mrf.mxu0
    %v219 = vadd.f32 0.0, %v218
    %v220 = vpop.f32.mrf.mxu0
    %v221 = vadd.f32 0.0, %v220
    %222 = vdwg.mxu0
    %v223 = vld [vmem:[#allocation8] sm:$0x1]
    %v224 = vld [vmem:[#allocation9] sm:$0x1]
    %v225 = vmul.f32 %v224, %v223
    %v226 = vperm.slane %v223, 0
    %v227 = vmul.f32 %v219, %v226
    %v228 = vmul.f32 %v221, %v226
    %v229 = vperm.slane %v225, 0
    %v230 = vmul.f32 %v156, %v229
    %v231 = vmul.f32 %v158, %v229
    %v232 = vsub.f32 %v227, %v230
    %v233 = vsub.f32 %v228, %v231
    %v234 = vand.u32 %v135, 15
    %v235 = vand.u32 %v136, 15
    %v236 = vand.u32 %v137, 15
    %v237 = vand.u32 %v138, 15
    %v238 = vand.u32 %v139, 15
    %v239 = vand.u32 %v140, 15
    %v240 = vand.u32 %v141, 15
    %v241 = vand.u32 %v142, 15
    %v242 = vand.u32 %v143, 15
    %v243 = vand.u32 %v144, 15
    %v244 = vand.u32 %v145, 15
    %v245 = vand.u32 %v146, 15
    %v246 = vand.u32 %v147, 15
    %v247 = vand.u32 %v148, 15
    %v248 = vand.u32 %v149, 15
    %v249 = vand.u32 %v150, 15
    %v250 = vcvt.s32.f32 %v234
    %v251 = vcvt.s32.f32 %v235
    %v252 = vcvt.s32.f32 %v236
    %v253 = vcvt.s32.f32 %v237
    %v254 = vcvt.s32.f32 %v238
    %v255 = vcvt.s32.f32 %v239
    %v256 = vcvt.s32.f32 %v240
    %v257 = vcvt.s32.f32 %v241
    %v258 = vcvt.s32.f32 %v242
    %v259 = vcvt.s32.f32 %v243
    %v260 = vcvt.s32.f32 %v244
    %v261 = vcvt.s32.f32 %v245
    %v262 = vcvt.s32.f32 %v246
    %v263 = vcvt.s32.f32 %v247
    %v264 = vcvt.s32.f32 %v248
    %v265 = vcvt.s32.f32 %v249
    %v266 = vpack.c.bf16 %v251, %v250
    %v267 = vpack.c.bf16 %v253, %v252
    %v268 = vpack.c.bf16 %v255, %v254
    %v269 = vpack.c.bf16 %v257, %v256
    %v270 = vpack.c.bf16 %v259, %v258
    %v271 = vpack.c.bf16 %v261, %v260
    %v272 = vpack.c.bf16 %v263, %v262
    %v273 = vpack.c.bf16 %v265, %v264
    %v274 = vunpack.c.h.b16 %v117
    %v275 = vunpack.c.h.b16 %v118
    %v276 = vpack.c.b16 %v275, %v274
    %278 = vmatpush.bf16.msra.mxu0 %v273
    %279 = vmatpush.bf16.msra.mxu0 %v272
    %280 = vmatpush.bf16.msra.mxu0 %v271
    %281 = vmatpush.bf16.msra.mxu0 %v270
    %282 = vmatpush.bf16.msra.mxu0 %v269
    %283 = vmatpush.bf16.msra.mxu0 %v268
    %284 = vmatpush.bf16.msra.mxu0 %v267
    %285 = vmatpush.bf16.msra.mxu0 %v266
    %286 = vmatmul.bf16.gmra.mxu0 %v276
    %v287 = vpop.f32.mrf.mxu0
    %v288 = vadd.f32 0.0, %v287
    %v289 = vpop.f32.mrf.mxu0
    %v290 = vadd.f32 0.0, %v289
    %291 = vdwg.mxu0
    %s292 = scalar_lea.vmem [#allocation8], 8
    %v293 = vld [vmem:[%s292] sm:$0x1]
    %s294 = scalar_lea.vmem [#allocation9], 8
    %v295 = vld [vmem:[%s294] sm:$0x1]
    %v296 = vmul.f32 %v295, %v293
    %v297 = vperm.slane %v293, 0
    %v298 = vmul.f32 %v288, %v297
    %v299 = vmul.f32 %v290, %v297
    %v300 = vperm.slane %v296, 0
    %v301 = vmul.f32 %v160, %v300
    %v302 = vmul.f32 %v162, %v300
    %v303 = vsub.f32 %v298, %v301
    %v304 = vsub.f32 %v299, %v302
    %v305 = vadd.f32 %v232, %v303
    %v306 = vadd.f32 %v233, %v304
    %v307 = vld [vmem:[#allocation2] sm:$0xff]
    %v308 = vld [vmem:[#allocation2 + $0x8] sm:$0xff]
    %v309 = vadd.f32 %v307, %v305
    %v310 = vadd.f32 %v308, %v306
    %311 = vst [vmem:[#allocation2] sm:$0xff] %v309
    %312 = vst [vmem:[#allocation2 + $0x8] sm:$0xff] %v310
    %v313 = vshra.s32 %v119, 4
    %v314 = vshra.s32 %v120, 4
    %v315 = vshra.s32 %v121, 4
    %v316 = vshra.s32 %v122, 4
    %v317 = vshra.s32 %v123, 4
    %v318 = vshra.s32 %v124, 4
    %v319 = vshra.s32 %v125, 4
    %v320 = vshra.s32 %v126, 4
    %v321 = vshra.s32 %v127, 4
    %v322 = vshra.s32 %v128, 4
    %v323 = vshra.s32 %v129, 4
    %v324 = vshra.s32 %v130, 4
    %v325 = vshra.s32 %v131, 4
    %v326 = vshra.s32 %v132, 4
    %v327 = vshra.s32 %v133, 4
    %v328 = vshra.s32 %v134, 4
    %v329 = vand.u32 %v313, 15
    %v330 = vand.u32 %v314, 15
    %v331 = vand.u32 %v315, 15
    %v332 = vand.u32 %v316, 15
    %v333 = vand.u32 %v317, 15
    %v334 = vand.u32 %v318, 15
    %v335 = vand.u32 %v319, 15
    %v336 = vand.u32 %v320, 15
    %v337 = vand.u32 %v321, 15
    %v338 = vand.u32 %v322, 15
    %v339 = vand.u32 %v323, 15
    %v340 = vand.u32 %v324, 15
    %v341 = vand.u32 %v325, 15
    %v342 = vand.u32 %v326, 15
    %v343 = vand.u32 %v327, 15
    %v344 = vand.u32 %v328, 15
    %v345 = vcvt.s32.f32 %v329
    %v346 = vcvt.s32.f32 %v330
    %v347 = vcvt.s32.f32 %v331
    %v348 = vcvt.s32.f32 %v332
    %v349 = vcvt.s32.f32 %v333
    %v350 = vcvt.s32.f32 %v334
    %v351 = vcvt.s32.f32 %v335
    %v352 = vcvt.s32.f32 %v336
    %v353 = vcvt.s32.f32 %v337
    %v354 = vcvt.s32.f32 %v338
    %v355 = vcvt.s32.f32 %v339
    %v356 = vcvt.s32.f32 %v340
    %v357 = vcvt.s32.f32 %v341
    %v358 = vcvt.s32.f32 %v342
    %v359 = vcvt.s32.f32 %v343
    %v360 = vcvt.s32.f32 %v344
    %v361 = vpack.c.bf16 %v346, %v345
    %v362 = vpack.c.bf16 %v348, %v347
    %v363 = vpack.c.bf16 %v350, %v349
    %v364 = vpack.c.bf16 %v352, %v351
    %v365 = vpack.c.bf16 %v354, %v353
    %v366 = vpack.c.bf16 %v356, %v355
    %v367 = vpack.c.bf16 %v358, %v357
    %v368 = vpack.c.bf16 %v360, %v359
    %369 = vmatpush.bf16.msra.mxu0 %v368
    %370 = vmatpush.bf16.msra.mxu0 %v367
    %371 = vmatpush.bf16.msra.mxu0 %v366
    %372 = vmatpush.bf16.msra.mxu0 %v365
    %373 = vmatpush.bf16.msra.mxu0 %v364
    %374 = vmatpush.bf16.msra.mxu0 %v363
    %375 = vmatpush.bf16.msra.mxu0 %v362
    %376 = vmatpush.bf16.msra.mxu0 %v361
    %377 = vmatmul.bf16.gmra.mxu0 %v207
    %v378 = vpop.f32.mrf.mxu0
    %v379 = vadd.f32 0.0, %v378
    %v380 = vpop.f32.mrf.mxu0
    %v381 = vadd.f32 0.0, %v380
    %382 = vdwg.mxu0
    %v383 = vld [vmem:[#allocation8 + $0x1] sm:$0x1]
    %v384 = vld [vmem:[#allocation9 + $0x1] sm:$0x1]
    %v385 = vmul.f32 %v384, %v383
    %v386 = vperm.slane %v383, 0
    %v387 = vmul.f32 %v379, %v386
    %v388 = vmul.f32 %v381, %v386
    %v389 = vperm.slane %v385, 0
    %v390 = vmul.f32 %v156, %v389
    %v391 = vmul.f32 %v158, %v389
    %v392 = vsub.f32 %v387, %v390
    %v393 = vsub.f32 %v388, %v391
    %v394 = vshra.s32 %v135, 4
    %v395 = vshra.s32 %v136, 4
    %v396 = vshra.s32 %v137, 4
    %v397 = vshra.s32 %v138, 4
    %v398 = vshra.s32 %v139, 4
    %v399 = vshra.s32 %v140, 4
    %v400 = vshra.s32 %v141, 4
    %v401 = vshra.s32 %v142, 4
    %v402 = vshra.s32 %v143, 4
    %v403 = vshra.s32 %v144, 4
    %v404 = vshra.s32 %v145, 4
    %v405 = vshra.s32 %v146, 4
    %v406 = vshra.s32 %v147, 4
    %v407 = vshra.s32 %v148, 4
    %v408 = vshra.s32 %v149, 4
    %v409 = vshra.s32 %v150, 4
    %v410 = vand.u32 %v394, 15
    %v411 = vand.u32 %v395, 15
    %v412 = vand.u32 %v396, 15
    %v413 = vand.u32 %v397, 15
    %v414 = vand.u32 %v398, 15
    %v415 = vand.u32 %v399, 15
    %v416 = vand.u32 %v400, 15
    %v417 = vand.u32 %v401, 15
    %v418 = vand.u32 %v402, 15
    %v419 = vand.u32 %v403, 15
    %v420 = vand.u32 %v404, 15
    %v421 = vand.u32 %v405, 15
    %v422 = vand.u32 %v406, 15
    %v423 = vand.u32 %v407, 15
    %v424 = vand.u32 %v408, 15
    %v425 = vand.u32 %v409, 15
    %v426 = vcvt.s32.f32 %v410
    %v427 = vcvt.s32.f32 %v411
    %v428 = vcvt.s32.f32 %v412
    %v429 = vcvt.s32.f32 %v413
    %v430 = vcvt.s32.f32 %v414
    %v431 = vcvt.s32.f32 %v415
    %v432 = vcvt.s32.f32 %v416
    %v433 = vcvt.s32.f32 %v417
    %v434 = vcvt.s32.f32 %v418
    %v435 = vcvt.s32.f32 %v419
    %v436 = vcvt.s32.f32 %v420
    %v437 = vcvt.s32.f32 %v421
    %v438 = vcvt.s32.f32 %v422
    %v439 = vcvt.s32.f32 %v423
    %v440 = vcvt.s32.f32 %v424
    %v441 = vcvt.s32.f32 %v425
    %v442 = vpack.c.bf16 %v427, %v426
    %v443 = vpack.c.bf16 %v429, %v428
    %v444 = vpack.c.bf16 %v431, %v430
    %v445 = vpack.c.bf16 %v433, %v432
    %v446 = vpack.c.bf16 %v435, %v434
    %v447 = vpack.c.bf16 %v437, %v436
    %v448 = vpack.c.bf16 %v439, %v438
    %v449 = vpack.c.bf16 %v441, %v440
    %450 = vmatpush.bf16.msra.mxu0 %v449
    %451 = vmatpush.bf16.msra.mxu0 %v448
    %452 = vmatpush.bf16.msra.mxu0 %v447
    %453 = vmatpush.bf16.msra.mxu0 %v446
    %454 = vmatpush.bf16.msra.mxu0 %v445
    %455 = vmatpush.bf16.msra.mxu0 %v444
    %456 = vmatpush.bf16.msra.mxu0 %v443
    %457 = vmatpush.bf16.msra.mxu0 %v442
    %458 = vmatmul.bf16.gmra.mxu0 %v276
    %v459 = vpop.f32.mrf.mxu0
    %v460 = vadd.f32 0.0, %v459
    %v461 = vpop.f32.mrf.mxu0
    %v462 = vadd.f32 0.0, %v461
    %463 = vdwg.mxu0
    %v464 = vld [vmem:[%s292 + $0x1] sm:$0x1]
    %v465 = vld [vmem:[%s294 + $0x1] sm:$0x1]
    %v466 = vmul.f32 %v465, %v464
    %v467 = vperm.slane %v464, 0
    %v468 = vmul.f32 %v460, %v467
    %v469 = vmul.f32 %v462, %v467
    %v470 = vperm.slane %v466, 0
    %v471 = vmul.f32 %v160, %v470
    %v472 = vmul.f32 %v162, %v470
    %v473 = vsub.f32 %v468, %v471
    %v474 = vsub.f32 %v469, %v472
    %v475 = vadd.f32 %v392, %v473
    %v476 = vadd.f32 %v393, %v474
    %s477 = scalar_lea.vmem [#allocation2], 16
    %v478 = vld [vmem:[%s477] sm:$0xff]
    %v479 = vld [vmem:[%s477 + $0x8] sm:$0xff]
    %v480 = vadd.f32 %v478, %v475
    %v481 = vadd.f32 %v479, %v476
    %482 = vst [vmem:[%s477] sm:$0xff] %v480
    %483 = vst [vmem:[%s477 + $0x8] sm:$0xff] %v481
    %v484 = vshra.s32 %v119, 8
    %v485 = vshra.s32 %v120, 8
    %v486 = vshra.s32 %v121, 8
    %v487 = vshra.s32 %v122, 8
    %v488 = vshra.s32 %v123, 8
    %v489 = vshra.s32 %v124, 8
    %v490 = vshra.s32 %v125, 8
    %v491 = vshra.s32 %v126, 8
    %v492 = vshra.s32 %v127, 8
    %v493 = vshra.s32 %v128, 8
    %v494 = vshra.s32 %v129, 8
    %v495 = vshra.s32 %v130, 8
    %v496 = vshra.s32 %v131, 8
    %v497 = vshra.s32 %v132, 8
    %v498 = vshra.s32 %v133, 8
    %v499 = vshra.s32 %v134, 8
    %v500 = vand.u32 %v484, 15
    %v501 = vand.u32 %v485, 15
    %v502 = vand.u32 %v486, 15
    %v503 = vand.u32 %v487, 15
    %v504 = vand.u32 %v488, 15
    %v505 = vand.u32 %v489, 15
    %v506 = vand.u32 %v490, 15
    %v507 = vand.u32 %v491, 15
    %v508 = vand.u32 %v492, 15
    %v509 = vand.u32 %v493, 15
    %v510 = vand.u32 %v494, 15
    %v511 = vand.u32 %v495, 15
    %v512 = vand.u32 %v496, 15
    %v513 = vand.u32 %v497, 15
    %v514 = vand.u32 %v498, 15
    %v515 = vand.u32 %v499, 15
    %v516 = vcvt.s32.f32 %v500
    %v517 = vcvt.s32.f32 %v501
    %v518 = vcvt.s32.f32 %v502
    %v519 = vcvt.s32.f32 %v503
    %v520 = vcvt.s32.f32 %v504
    %v521 = vcvt.s32.f32 %v505
    %v522 = vcvt.s32.f32 %v506
    %v523 = vcvt.s32.f32 %v507
    %v524 = vcvt.s32.f32 %v508
    %v525 = vcvt.s32.f32 %v509
    %v526 = vcvt.s32.f32 %v510
    %v527 = vcvt.s32.f32 %v511
    %v528 = vcvt.s32.f32 %v512
    %v529 = vcvt.s32.f32 %v513
    %v530 = vcvt.s32.f32 %v514
    %v531 = vcvt.s32.f32 %v515
    %v532 = vpack.c.bf16 %v517, %v516
    %v533 = vpack.c.bf16 %v519, %v518
    %v534 = vpack.c.bf16 %v521, %v520
    %v535 = vpack.c.bf16 %v523, %v522
    %v536 = vpack.c.bf16 %v525, %v524
    %v537 = vpack.c.bf16 %v527, %v526
    %v538 = vpack.c.bf16 %v529, %v528
    %v539 = vpack.c.bf16 %v531, %v530
    %540 = vmatpush.bf16.msra.mxu0 %v539
    %541 = vmatpush.bf16.msra.mxu0 %v538
    %542 = vmatpush.bf16.msra.mxu0 %v537
    %543 = vmatpush.bf16.msra.mxu0 %v536
    %544 = vmatpush.bf16.msra.mxu0 %v535
    %545 = vmatpush.bf16.msra.mxu0 %v534
    %546 = vmatpush.bf16.msra.mxu0 %v533
    %547 = vmatpush.bf16.msra.mxu0 %v532
    %548 = vmatmul.bf16.gmra.mxu0 %v207
    %v549 = vpop.f32.mrf.mxu0
    %v550 = vadd.f32 0.0, %v549
    %v551 = vpop.f32.mrf.mxu0
    %v552 = vadd.f32 0.0, %v551
    %553 = vdwg.mxu0
    %v554 = vld [vmem:[#allocation8 + $0x2] sm:$0x1]
    %v555 = vld [vmem:[#allocation9 + $0x2] sm:$0x1]
    %v556 = vmul.f32 %v555, %v554
    %v557 = vperm.slane %v554, 0
    %v558 = vmul.f32 %v550, %v557
    %v559 = vmul.f32 %v552, %v557
    %v560 = vperm.slane %v556, 0
    %v561 = vmul.f32 %v156, %v560
    %v562 = vmul.f32 %v158, %v560
    %v563 = vsub.f32 %v558, %v561
    %v564 = vsub.f32 %v559, %v562
    %v565 = vshra.s32 %v135, 8
    %v566 = vshra.s32 %v136, 8
    %v567 = vshra.s32 %v137, 8
    %v568 = vshra.s32 %v138, 8
    %v569 = vshra.s32 %v139, 8
    %v570 = vshra.s32 %v140, 8
    %v571 = vshra.s32 %v141, 8
    %v572 = vshra.s32 %v142, 8
    %v573 = vshra.s32 %v143, 8
    %v574 = vshra.s32 %v144, 8
    %v575 = vshra.s32 %v145, 8
    %v576 = vshra.s32 %v146, 8
    %v577 = vshra.s32 %v147, 8
    %v578 = vshra.s32 %v148, 8
    %v579 = vshra.s32 %v149, 8
    %v580 = vshra.s32 %v150, 8
    %v581 = vand.u32 %v565, 15
    %v582 = vand.u32 %v566, 15
    %v583 = vand.u32 %v567, 15
    %v584 = vand.u32 %v568, 15
    %v585 = vand.u32 %v569, 15
    %v586 = vand.u32 %v570, 15
    %v587 = vand.u32 %v571, 15
    %v588 = vand.u32 %v572, 15
    %v589 = vand.u32 %v573, 15
    %v590 = vand.u32 %v574, 15
    %v591 = vand.u32 %v575, 15
    %v592 = vand.u32 %v576, 15
    %v593 = vand.u32 %v577, 15
    %v594 = vand.u32 %v578, 15
    %v595 = vand.u32 %v579, 15
    %v596 = vand.u32 %v580, 15
    %v597 = vcvt.s32.f32 %v581
    %v598 = vcvt.s32.f32 %v582
    %v599 = vcvt.s32.f32 %v583
    %v600 = vcvt.s32.f32 %v584
    %v601 = vcvt.s32.f32 %v585
    %v602 = vcvt.s32.f32 %v586
    %v603 = vcvt.s32.f32 %v587
    %v604 = vcvt.s32.f32 %v588
    %v605 = vcvt.s32.f32 %v589
    %v606 = vcvt.s32.f32 %v590
    %v607 = vcvt.s32.f32 %v591
    %v608 = vcvt.s32.f32 %v592
    %v609 = vcvt.s32.f32 %v593
    %v610 = vcvt.s32.f32 %v594
    %v611 = vcvt.s32.f32 %v595
    %v612 = vcvt.s32.f32 %v596
    %v613 = vpack.c.bf16 %v598, %v597
    %v614 = vpack.c.bf16 %v600, %v599
    %v615 = vpack.c.bf16 %v602, %v601
    %v616 = vpack.c.bf16 %v604, %v603
    %v617 = vpack.c.bf16 %v606, %v605
    %v618 = vpack.c.bf16 %v608, %v607
    %v619 = vpack.c.bf16 %v610, %v609
    %v620 = vpack.c.bf16 %v612, %v611
    %621 = vmatpush.bf16.msra.mxu0 %v620
    %622 = vmatpush.bf16.msra.mxu0 %v619
    %623 = vmatpush.bf16.msra.mxu0 %v618
    %624 = vmatpush.bf16.msra.mxu0 %v617
    %625 = vmatpush.bf16.msra.mxu0 %v616
    %626 = vmatpush.bf16.msra.mxu0 %v615
    %627 = vmatpush.bf16.msra.mxu0 %v614
    %628 = vmatpush.bf16.msra.mxu0 %v613
    %629 = vmatmul.bf16.gmra.mxu0 %v276
    %v630 = vpop.f32.mrf.mxu0
    %v631 = vadd.f32 0.0, %v630
    %v632 = vpop.f32.mrf.mxu0
    %v633 = vadd.f32 0.0, %v632
    %634 = vdwg.mxu0
    %v635 = vld [vmem:[%s292 + $0x2] sm:$0x1]
    %v636 = vld [vmem:[%s294 + $0x2] sm:$0x1]
    %v637 = vmul.f32 %v636, %v635
    %v638 = vperm.slane %v635, 0
    %v639 = vmul.f32 %v631, %v638
    %v640 = vmul.f32 %v633, %v638
    %v641 = vperm.slane %v637, 0
    %v642 = vmul.f32 %v160, %v641
    %v643 = vmul.f32 %v162, %v641
    %v644 = vsub.f32 %v639, %v642
    %v645 = vsub.f32 %v640, %v643
    %v646 = vadd.f32 %v563, %v644
    %v647 = vadd.f32 %v564, %v645
    %s648 = scalar_lea.vmem [#allocation2], 32
    %v649 = vld [vmem:[%s648] sm:$0xff]
    %v650 = vld [vmem:[%s648 + $0x8] sm:$0xff]
    %v651 = vadd.f32 %v649, %v646
    %v652 = vadd.f32 %v650, %v647
    %653 = vst [vmem:[%s648] sm:$0xff] %v651
    %654 = vst [vmem:[%s648 + $0x8] sm:$0xff] %v652
    %v655 = vshra.s32 %v119, 12
    %v656 = vshra.s32 %v120, 12
    %v657 = vshra.s32 %v121, 12
    %v658 = vshra.s32 %v122, 12
    %v659 = vshra.s32 %v123, 12
    %v660 = vshra.s32 %v124, 12
    %v661 = vshra.s32 %v125, 12
    %v662 = vshra.s32 %v126, 12
    %v663 = vshra.s32 %v127, 12
    %v664 = vshra.s32 %v128, 12
    %v665 = vshra.s32 %v129, 12
    %v666 = vshra.s32 %v130, 12
    %v667 = vshra.s32 %v131, 12
    %v668 = vshra.s32 %v132, 12
    %v669 = vshra.s32 %v133, 12
    %v670 = vshra.s32 %v134, 12
    %v671 = vand.u32 %v655, 15
    %v672 = vand.u32 %v656, 15
    %v673 = vand.u32 %v657, 15
    %v674 = vand.u32 %v658, 15
    %v675 = vand.u32 %v659, 15
    %v676 = vand.u32 %v660, 15
    %v677 = vand.u32 %v661, 15
    %v678 = vand.u32 %v662, 15
    %v679 = vand.u32 %v663, 15
    %v680 = vand.u32 %v664, 15
    %v681 = vand.u32 %v665, 15
    %v682 = vand.u32 %v666, 15
    %v683 = vand.u32 %v667, 15
    %v684 = vand.u32 %v668, 15
    %v685 = vand.u32 %v669, 15
    %v686 = vand.u32 %v670, 15
    %v687 = vcvt.s32.f32 %v671
    %v688 = vcvt.s32.f32 %v672
    %v689 = vcvt.s32.f32 %v673
    %v690 = vcvt.s32.f32 %v674
    %v691 = vcvt.s32.f32 %v675
    %v692 = vcvt.s32.f32 %v676
    %v693 = vcvt.s32.f32 %v677
    %v694 = vcvt.s32.f32 %v678
    %v695 = vcvt.s32.f32 %v679
    %v696 = vcvt.s32.f32 %v680
    %v697 = vcvt.s32.f32 %v681
    %v698 = vcvt.s32.f32 %v682
    %v699 = vcvt.s32.f32 %v683
    %v700 = vcvt.s32.f32 %v684
    %v701 = vcvt.s32.f32 %v685
    %v702 = vcvt.s32.f32 %v686
    %v703 = vpack.c.bf16 %v688, %v687
    %v704 = vpack.c.bf16 %v690, %v689
    %v705 = vpack.c.bf16 %v692, %v691
    %v706 = vpack.c.bf16 %v694, %v693
    %v707 = vpack.c.bf16 %v696, %v695
    %v708 = vpack.c.bf16 %v698, %v697
    %v709 = vpack.c.bf16 %v700, %v699
    %v710 = vpack.c.bf16 %v702, %v701
    %711 = vmatpush.bf16.msra.mxu0 %v710
    %712 = vmatpush.bf16.msra.mxu0 %v709
    %713 = vmatpush.bf16.msra.mxu0 %v708
    %714 = vmatpush.bf16.msra.mxu0 %v707
    %715 = vmatpush.bf16.msra.mxu0 %v706
    %716 = vmatpush.bf16.msra.mxu0 %v705
    %717 = vmatpush.bf16.msra.mxu0 %v704
    %718 = vmatpush.bf16.msra.mxu0 %v703
    %719 = vmatmul.bf16.gmra.mxu0 %v207
    %v720 = vpop.f32.mrf.mxu0
    %v721 = vadd.f32 0.0, %v720
    %v722 = vpop.f32.mrf.mxu0
    %v723 = vadd.f32 0.0, %v722
    %724 = vdwg.mxu0
    %v725 = vld [vmem:[#allocation8 + $0x3] sm:$0x1]
    %v726 = vld [vmem:[#allocation9 + $0x3] sm:$0x1]
    %v727 = vmul.f32 %v726, %v725
    %v728 = vperm.slane %v725, 0
    %v729 = vmul.f32 %v721, %v728
    %v730 = vmul.f32 %v723, %v728
    %v731 = vperm.slane %v727, 0
    %v732 = vmul.f32 %v156, %v731
    %v733 = vmul.f32 %v158, %v731
    %v734 = vsub.f32 %v729, %v732
    %v735 = vsub.f32 %v730, %v733
    %v736 = vshra.s32 %v135, 12
    %v737 = vshra.s32 %v136, 12
    %v738 = vshra.s32 %v137, 12
    %v739 = vshra.s32 %v138, 12
    %v740 = vshra.s32 %v139, 12
    %v741 = vshra.s32 %v140, 12
    %v742 = vshra.s32 %v141, 12
    %v743 = vshra.s32 %v142, 12
    %v744 = vshra.s32 %v143, 12
    %v745 = vshra.s32 %v144, 12
    %v746 = vshra.s32 %v145, 12
    %v747 = vshra.s32 %v146, 12
    %v748 = vshra.s32 %v147, 12
    %v749 = vshra.s32 %v148, 12
    %v750 = vshra.s32 %v149, 12
    %v751 = vshra.s32 %v150, 12
    %v752 = vand.u32 %v736, 15
    %v753 = vand.u32 %v737, 15
    %v754 = vand.u32 %v738, 15
    %v755 = vand.u32 %v739, 15
    %v756 = vand.u32 %v740, 15
    %v757 = vand.u32 %v741, 15
    %v758 = vand.u32 %v742, 15
    %v759 = vand.u32 %v743, 15
    %v760 = vand.u32 %v744, 15
    %v761 = vand.u32 %v745, 15
    %v762 = vand.u32 %v746, 15
    %v763 = vand.u32 %v747, 15
    %v764 = vand.u32 %v748, 15
    %v765 = vand.u32 %v749, 15
    %v766 = vand.u32 %v750, 15
    %v767 = vand.u32 %v751, 15
    %v768 = vcvt.s32.f32 %v752
    %v769 = vcvt.s32.f32 %v753
    %v770 = vcvt.s32.f32 %v754
    %v771 = vcvt.s32.f32 %v755
    %v772 = vcvt.s32.f32 %v756
    %v773 = vcvt.s32.f32 %v757
    %v774 = vcvt.s32.f32 %v758
    %v775 = vcvt.s32.f32 %v759
    %v776 = vcvt.s32.f32 %v760
    %v777 = vcvt.s32.f32 %v761
    %v778 = vcvt.s32.f32 %v762
    %v779 = vcvt.s32.f32 %v763
    %v780 = vcvt.s32.f32 %v764
    %v781 = vcvt.s32.f32 %v765
    %v782 = vcvt.s32.f32 %v766
    %v783 = vcvt.s32.f32 %v767
    %v784 = vpack.c.bf16 %v769, %v768
    %v785 = vpack.c.bf16 %v771, %v770
    %v786 = vpack.c.bf16 %v773, %v772
    %v787 = vpack.c.bf16 %v775, %v774
    %v788 = vpack.c.bf16 %v777, %v776
    %v789 = vpack.c.bf16 %v779, %v778
    %v790 = vpack.c.bf16 %v781, %v780
    %v791 = vpack.c.bf16 %v783, %v782
    %792 = vmatpush.bf16.msra.mxu0 %v791
    %793 = vmatpush.bf16.msra.mxu0 %v790
    %794 = vmatpush.bf16.msra.mxu0 %v789
    %795 = vmatpush.bf16.msra.mxu0 %v788
    %796 = vmatpush.bf16.msra.mxu0 %v787
    %797 = vmatpush.bf16.msra.mxu0 %v786
    %798 = vmatpush.bf16.msra.mxu0 %v785
    %799 = vmatpush.bf16.msra.mxu0 %v784
    %800 = vmatmul.bf16.gmra.mxu0 %v276
    %v801 = vpop.f32.mrf.mxu0
    %v802 = vadd.f32 0.0, %v801
    %v803 = vpop.f32.mrf.mxu0
    %v804 = vadd.f32 0.0, %v803
    %805 = vdwg.mxu0
    %v806 = vld [vmem:[%s292 + $0x3] sm:$0x1]
    %v807 = vld [vmem:[%s294 + $0x3] sm:$0x1]
    %v808 = vmul.f32 %v807, %v806
    %v809 = vperm.slane %v806, 0
    %v810 = vmul.f32 %v802, %v809
    %v811 = vmul.f32 %v804, %v809
    %v812 = vperm.slane %v808, 0
    %v813 = vmul.f32 %v160, %v812
    %v814 = vmul.f32 %v162, %v812
    %v815 = vsub.f32 %v810, %v813
    %v816 = vsub.f32 %v811, %v814
    %v817 = vadd.f32 %v734, %v815
    %v818 = vadd.f32 %v735, %v816
    %s819 = scalar_lea.vmem [#allocation2], 48
    %v820 = vld [vmem:[%s819] sm:$0xff]
    %v821 = vld [vmem:[%s819 + $0x8] sm:$0xff]
    %v822 = vadd.f32 %v820, %v817
    %v823 = vadd.f32 %v821, %v818
    %824 = vst [vmem:[%s819] sm:$0xff] %v822
    %825 = vst [vmem:[%s819 + $0x8] sm:$0xff] %v823
    %v826 = vshra.s32 %v119, 16
    %v827 = vshra.s32 %v120, 16
    %v828 = vshra.s32 %v121, 16
    %v829 = vshra.s32 %v122, 16
    %v830 = vshra.s32 %v123, 16
    %v831 = vshra.s32 %v124, 16
    %v832 = vshra.s32 %v125, 16
    %v833 = vshra.s32 %v126, 16
    %v834 = vshra.s32 %v127, 16
    %v835 = vshra.s32 %v128, 16
    %v836 = vshra.s32 %v129, 16
    %v837 = vshra.s32 %v130, 16
    %v838 = vshra.s32 %v131, 16
    %v839 = vshra.s32 %v132, 16
    %v840 = vshra.s32 %v133, 16
    %v841 = vshra.s32 %v134, 16
    %v842 = vand.u32 %v826, 15
    %v843 = vand.u32 %v827, 15
    %v844 = vand.u32 %v828, 15
    %v845 = vand.u32 %v829, 15
    %v846 = vand.u32 %v830, 15
    %v847 = vand.u32 %v831, 15
    %v848 = vand.u32 %v832, 15
    %v849 = vand.u32 %v833, 15
    %v850 = vand.u32 %v834, 15
    %v851 = vand.u32 %v835, 15
    %v852 = vand.u32 %v836, 15
    %v853 = vand.u32 %v837, 15
    %v854 = vand.u32 %v838, 15
    %v855 = vand.u32 %v839, 15
    %v856 = vand.u32 %v840, 15
    %v857 = vand.u32 %v841, 15
    %v858 = vcvt.s32.f32 %v842
    %v859 = vcvt.s32.f32 %v843
    %v860 = vcvt.s32.f32 %v844
    %v861 = vcvt.s32.f32 %v845
    %v862 = vcvt.s32.f32 %v846
    %v863 = vcvt.s32.f32 %v847
    %v864 = vcvt.s32.f32 %v848
    %v865 = vcvt.s32.f32 %v849
    %v866 = vcvt.s32.f32 %v850
    %v867 = vcvt.s32.f32 %v851
    %v868 = vcvt.s32.f32 %v852
    %v869 = vcvt.s32.f32 %v853
    %v870 = vcvt.s32.f32 %v854
    %v871 = vcvt.s32.f32 %v855
    %v872 = vcvt.s32.f32 %v856
    %v873 = vcvt.s32.f32 %v857
    %v874 = vpack.c.bf16 %v859, %v858
    %v875 = vpack.c.bf16 %v861, %v860
    %v876 = vpack.c.bf16 %v863, %v862
    %v877 = vpack.c.bf16 %v865, %v864
    %v878 = vpack.c.bf16 %v867, %v866
    %v879 = vpack.c.bf16 %v869, %v868
    %v880 = vpack.c.bf16 %v871, %v870
    %v881 = vpack.c.bf16 %v873, %v872
    %882 = vmatpush.bf16.msra.mxu0 %v881
    %883 = vmatpush.bf16.msra.mxu0 %v880
    %884 = vmatpush.bf16.msra.mxu0 %v879
    %885 = vmatpush.bf16.msra.mxu0 %v878
    %886 = vmatpush.bf16.msra.mxu0 %v877
    %887 = vmatpush.bf16.msra.mxu0 %v876
    %888 = vmatpush.bf16.msra.mxu0 %v875
    %889 = vmatpush.bf16.msra.mxu0 %v874
    %890 = vmatmul.bf16.gmra.mxu0 %v207
    %v891 = vpop.f32.mrf.mxu0
    %v892 = vadd.f32 0.0, %v891
    %v893 = vpop.f32.mrf.mxu0
    %v894 = vadd.f32 0.0, %v893
    %895 = vdwg.mxu0
    %v896 = vld [vmem:[#allocation8 + $0x4] sm:$0x1]
    %v897 = vld [vmem:[#allocation9 + $0x4] sm:$0x1]
    %v898 = vmul.f32 %v897, %v896
    %v899 = vperm.slane %v896, 0
    %v900 = vmul.f32 %v892, %v899
    %v901 = vmul.f32 %v894, %v899
    %v902 = vperm.slane %v898, 0
    %v903 = vmul.f32 %v156, %v902
    %v904 = vmul.f32 %v158, %v902
    %v905 = vsub.f32 %v900, %v903
    %v906 = vsub.f32 %v901, %v904
    %v907 = vshra.s32 %v135, 16
    %v908 = vshra.s32 %v136, 16
    %v909 = vshra.s32 %v137, 16
    %v910 = vshra.s32 %v138, 16
    %v911 = vshra.s32 %v139, 16
    %v912 = vshra.s32 %v140, 16
    %v913 = vshra.s32 %v141, 16
    %v914 = vshra.s32 %v142, 16
    %v915 = vshra.s32 %v143, 16
    %v916 = vshra.s32 %v144, 16
    %v917 = vshra.s32 %v145, 16
    %v918 = vshra.s32 %v146, 16
    %v919 = vshra.s32 %v147, 16
    %v920 = vshra.s32 %v148, 16
    %v921 = vshra.s32 %v149, 16
    %v922 = vshra.s32 %v150, 16
    %v923 = vand.u32 %v907, 15
    %v924 = vand.u32 %v908, 15
    %v925 = vand.u32 %v909, 15
    %v926 = vand.u32 %v910, 15
    %v927 = vand.u32 %v911, 15
    %v928 = vand.u32 %v912, 15
    %v929 = vand.u32 %v913, 15
    %v930 = vand.u32 %v914, 15
    %v931 = vand.u32 %v915, 15
    %v932 = vand.u32 %v916, 15
    %v933 = vand.u32 %v917, 15
    %v934 = vand.u32 %v918, 15
    %v935 = vand.u32 %v919, 15
    %v936 = vand.u32 %v920, 15
    %v937 = vand.u32 %v921, 15
    %v938 = vand.u32 %v922, 15
    %v939 = vcvt.s32.f32 %v923
    %v940 = vcvt.s32.f32 %v924
    %v941 = vcvt.s32.f32 %v925
    %v942 = vcvt.s32.f32 %v926
    %v943 = vcvt.s32.f32 %v927
    %v944 = vcvt.s32.f32 %v928
    %v945 = vcvt.s32.f32 %v929
    %v946 = vcvt.s32.f32 %v930
    %v947 = vcvt.s32.f32 %v931
    %v948 = vcvt.s32.f32 %v932
    %v949 = vcvt.s32.f32 %v933
    %v950 = vcvt.s32.f32 %v934
    %v951 = vcvt.s32.f32 %v935
    %v952 = vcvt.s32.f32 %v936
    %v953 = vcvt.s32.f32 %v937
    %v954 = vcvt.s32.f32 %v938
    %v955 = vpack.c.bf16 %v940, %v939
    %v956 = vpack.c.bf16 %v942, %v941
    %v957 = vpack.c.bf16 %v944, %v943
    %v958 = vpack.c.bf16 %v946, %v945
    %v959 = vpack.c.bf16 %v948, %v947
    %v960 = vpack.c.bf16 %v950, %v949
    %v961 = vpack.c.bf16 %v952, %v951
    %v962 = vpack.c.bf16 %v954, %v953
    %963 = vmatpush.bf16.msra.mxu0 %v962
    %964 = vmatpush.bf16.msra.mxu0 %v961
    %965 = vmatpush.bf16.msra.mxu0 %v960
    %966 = vmatpush.bf16.msra.mxu0 %v959
    %967 = vmatpush.bf16.msra.mxu0 %v958
    %968 = vmatpush.bf16.msra.mxu0 %v957
    %969 = vmatpush.bf16.msra.mxu0 %v956
    %970 = vmatpush.bf16.msra.mxu0 %v955
    %971 = vmatmul.bf16.gmra.mxu0 %v276
    %v972 = vpop.f32.mrf.mxu0
    %v973 = vadd.f32 0.0, %v972
    %v974 = vpop.f32.mrf.mxu0
    %v975 = vadd.f32 0.0, %v974
    %976 = vdwg.mxu0
    %v977 = vld [vmem:[%s292 + $0x4] sm:$0x1]
    %v978 = vld [vmem:[%s294 + $0x4] sm:$0x1]
    %v979 = vmul.f32 %v978, %v977
    %v980 = vperm.slane %v977, 0
    %v981 = vmul.f32 %v973, %v980
    %v982 = vmul.f32 %v975, %v980
    %v983 = vperm.slane %v979, 0
    %v984 = vmul.f32 %v160, %v983
    %v985 = vmul.f32 %v162, %v983
    %v986 = vsub.f32 %v981, %v984
    %v987 = vsub.f32 %v982, %v985
    %v988 = vadd.f32 %v905, %v986
    %v989 = vadd.f32 %v906, %v987
    %s990 = scalar_lea.vmem [#allocation2], 64
    %v991 = vld [vmem:[%s990] sm:$0xff]
    %v992 = vld [vmem:[%s990 + $0x8] sm:$0xff]
    %v993 = vadd.f32 %v991, %v988
    %v994 = vadd.f32 %v992, %v989
    %995 = vst [vmem:[%s990] sm:$0xff] %v993
    %996 = vst [vmem:[%s990 + $0x8] sm:$0xff] %v994
    %v997 = vshra.s32 %v119, 20
    %v998 = vshra.s32 %v120, 20
    %v999 = vshra.s32 %v121, 20
    %v1000 = vshra.s32 %v122, 20
    %v1001 = vshra.s32 %v123, 20
    %v1002 = vshra.s32 %v124, 20
    %v1003 = vshra.s32 %v125, 20
    %v1004 = vshra.s32 %v126, 20
    %v1005 = vshra.s32 %v127, 20
    %v1006 = vshra.s32 %v128, 20
    %v1007 = vshra.s32 %v129, 20
    %v1008 = vshra.s32 %v130, 20
    %v1009 = vshra.s32 %v131, 20
    %v1010 = vshra.s32 %v132, 20
    %v1011 = vshra.s32 %v133, 20
    %v1012 = vshra.s32 %v134, 20
    %v1013 = vand.u32 %v997, 15
    %v1014 = vand.u32 %v998, 15
    %v1015 = vand.u32 %v999, 15
    %v1016 = vand.u32 %v1000, 15
    %v1017 = vand.u32 %v1001, 15
    %v1018 = vand.u32 %v1002, 15
    %v1019 = vand.u32 %v1003, 15
    %v1020 = vand.u32 %v1004, 15
    %v1021 = vand.u32 %v1005, 15
    %v1022 = vand.u32 %v1006, 15
    %v1023 = vand.u32 %v1007, 15
    %v1024 = vand.u32 %v1008, 15
    %v1025 = vand.u32 %v1009, 15
    %v1026 = vand.u32 %v1010, 15
    %v1027 = vand.u32 %v1011, 15
    %v1028 = vand.u32 %v1012, 15
    %v1029 = vcvt.s32.f32 %v1013
    %v1030 = vcvt.s32.f32 %v1014
    %v1031 = vcvt.s32.f32 %v1015
    %v1032 = vcvt.s32.f32 %v1016
    %v1033 = vcvt.s32.f32 %v1017
    %v1034 = vcvt.s32.f32 %v1018
    %v1035 = vcvt.s32.f32 %v1019
    %v1036 = vcvt.s32.f32 %v1020
    %v1037 = vcvt.s32.f32 %v1021
    %v1038 = vcvt.s32.f32 %v1022
    %v1039 = vcvt.s32.f32 %v1023
    %v1040 = vcvt.s32.f32 %v1024
    %v1041 = vcvt.s32.f32 %v1025
    %v1042 = vcvt.s32.f32 %v1026
    %v1043 = vcvt.s32.f32 %v1027
    %v1044 = vcvt.s32.f32 %v1028
    %v1045 = vpack.c.bf16 %v1030, %v1029
    %v1046 = vpack.c.bf16 %v1032, %v1031
    %v1047 = vpack.c.bf16 %v1034, %v1033
    %v1048 = vpack.c.bf16 %v1036, %v1035
    %v1049 = vpack.c.bf16 %v1038, %v1037
    %v1050 = vpack.c.bf16 %v1040, %v1039
    %v1051 = vpack.c.bf16 %v1042, %v1041
    %v1052 = vpack.c.bf16 %v1044, %v1043
    %1053 = vmatpush.bf16.msra.mxu0 %v1052
    %1054 = vmatpush.bf16.msra.mxu0 %v1051
    %1055 = vmatpush.bf16.msra.mxu0 %v1050
    %1056 = vmatpush.bf16.msra.mxu0 %v1049
    %1057 = vmatpush.bf16.msra.mxu0 %v1048
    %1058 = vmatpush.bf16.msra.mxu0 %v1047
    %1059 = vmatpush.bf16.msra.mxu0 %v1046
    %1060 = vmatpush.bf16.msra.mxu0 %v1045
    %1061 = vmatmul.bf16.gmra.mxu0 %v207
    %v1062 = vpop.f32.mrf.mxu0
    %v1063 = vadd.f32 0.0, %v1062
    %v1064 = vpop.f32.mrf.mxu0
    %v1065 = vadd.f32 0.0, %v1064
    %1066 = vdwg.mxu0
    %v1067 = vld [vmem:[#allocation8 + $0x5] sm:$0x1]
    %v1068 = vld [vmem:[#allocation9 + $0x5] sm:$0x1]
    %v1069 = vmul.f32 %v1068, %v1067
    %v1070 = vperm.slane %v1067, 0
    %v1071 = vmul.f32 %v1063, %v1070
    %v1072 = vmul.f32 %v1065, %v1070
    %v1073 = vperm.slane %v1069, 0
    %v1074 = vmul.f32 %v156, %v1073
    %v1075 = vmul.f32 %v158, %v1073
    %v1076 = vsub.f32 %v1071, %v1074
    %v1077 = vsub.f32 %v1072, %v1075
    %v1078 = vshra.s32 %v135, 20
    %v1079 = vshra.s32 %v136, 20
    %v1080 = vshra.s32 %v137, 20
    %v1081 = vshra.s32 %v138, 20
    %v1082 = vshra.s32 %v139, 20
    %v1083 = vshra.s32 %v140, 20
    %v1084 = vshra.s32 %v141, 20
    %v1085 = vshra.s32 %v142, 20
    %v1086 = vshra.s32 %v143, 20
    %v1087 = vshra.s32 %v144, 20
    %v1088 = vshra.s32 %v145, 20
    %v1089 = vshra.s32 %v146, 20
    %v1090 = vshra.s32 %v147, 20
    %v1091 = vshra.s32 %v148, 20
    %v1092 = vshra.s32 %v149, 20
    %v1093 = vshra.s32 %v150, 20
    %v1094 = vand.u32 %v1078, 15
    %v1095 = vand.u32 %v1079, 15
    %v1096 = vand.u32 %v1080, 15
    %v1097 = vand.u32 %v1081, 15
    %v1098 = vand.u32 %v1082, 15
    %v1099 = vand.u32 %v1083, 15
    %v1100 = vand.u32 %v1084, 15
    %v1101 = vand.u32 %v1085, 15
    %v1102 = vand.u32 %v1086, 15
    %v1103 = vand.u32 %v1087, 15
    %v1104 = vand.u32 %v1088, 15
    %v1105 = vand.u32 %v1089, 15
    %v1106 = vand.u32 %v1090, 15
    %v1107 = vand.u32 %v1091, 15
    %v1108 = vand.u32 %v1092, 15
    %v1109 = vand.u32 %v1093, 15
    %v1110 = vcvt.s32.f32 %v1094
    %v1111 = vcvt.s32.f32 %v1095
    %v1112 = vcvt.s32.f32 %v1096
    %v1113 = vcvt.s32.f32 %v1097
    %v1114 = vcvt.s32.f32 %v1098
    %v1115 = vcvt.s32.f32 %v1099
    %v1116 = vcvt.s32.f32 %v1100
    %v1117 = vcvt.s32.f32 %v1101
    %v1118 = vcvt.s32.f32 %v1102
    %v1119 = vcvt.s32.f32 %v1103
    %v1120 = vcvt.s32.f32 %v1104
    %v1121 = vcvt.s32.f32 %v1105
    %v1122 = vcvt.s32.f32 %v1106
    %v1123 = vcvt.s32.f32 %v1107
    %v1124 = vcvt.s32.f32 %v1108
    %v1125 = vcvt.s32.f32 %v1109
    %v1126 = vpack.c.bf16 %v1111, %v1110
    %v1127 = vpack.c.bf16 %v1113, %v1112
    %v1128 = vpack.c.bf16 %v1115, %v1114
    %v1129 = vpack.c.bf16 %v1117, %v1116
    %v1130 = vpack.c.bf16 %v1119, %v1118
    %v1131 = vpack.c.bf16 %v1121, %v1120
    %v1132 = vpack.c.bf16 %v1123, %v1122
    %v1133 = vpack.c.bf16 %v1125, %v1124
    %1134 = vmatpush.bf16.msra.mxu0 %v1133
    %1135 = vmatpush.bf16.msra.mxu0 %v1132
    %1136 = vmatpush.bf16.msra.mxu0 %v1131
    %1137 = vmatpush.bf16.msra.mxu0 %v1130
    %1138 = vmatpush.bf16.msra.mxu0 %v1129
    %1139 = vmatpush.bf16.msra.mxu0 %v1128
    %1140 = vmatpush.bf16.msra.mxu0 %v1127
    %1141 = vmatpush.bf16.msra.mxu0 %v1126
    %1142 = vmatmul.bf16.gmra.mxu0 %v276
    %v1143 = vpop.f32.mrf.mxu0
    %v1144 = vadd.f32 0.0, %v1143
    %v1145 = vpop.f32.mrf.mxu0
    %v1146 = vadd.f32 0.0, %v1145
    %1147 = vdwg.mxu0
    %v1148 = vld [vmem:[%s292 + $0x5] sm:$0x1]
    %v1149 = vld [vmem:[%s294 + $0x5] sm:$0x1]
    %v1150 = vmul.f32 %v1149, %v1148
    %v1151 = vperm.slane %v1148, 0
    %v1152 = vmul.f32 %v1144, %v1151
    %v1153 = vmul.f32 %v1146, %v1151
    %v1154 = vperm.slane %v1150, 0
    %v1155 = vmul.f32 %v160, %v1154
    %v1156 = vmul.f32 %v162, %v1154
    %v1157 = vsub.f32 %v1152, %v1155
    %v1158 = vsub.f32 %v1153, %v1156
    %v1159 = vadd.f32 %v1076, %v1157
    %v1160 = vadd.f32 %v1077, %v1158
    %s1161 = scalar_lea.vmem [#allocation2], 80
    %v1162 = vld [vmem:[%s1161] sm:$0xff]
    %v1163 = vld [vmem:[%s1161 + $0x8] sm:$0xff]
    %v1164 = vadd.f32 %v1162, %v1159
    %v1165 = vadd.f32 %v1163, %v1160
    %1166 = vst [vmem:[%s1161] sm:$0xff] %v1164
    %1167 = vst [vmem:[%s1161 + $0x8] sm:$0xff] %v1165
    %v1168 = vshra.s32 %v119, 24
    %v1169 = vshra.s32 %v120, 24
    %v1170 = vshra.s32 %v121, 24
    %v1171 = vshra.s32 %v122, 24
    %v1172 = vshra.s32 %v123, 24
    %v1173 = vshra.s32 %v124, 24
    %v1174 = vshra.s32 %v125, 24
    %v1175 = vshra.s32 %v126, 24
    %v1176 = vshra.s32 %v127, 24
    %v1177 = vshra.s32 %v128, 24
    %v1178 = vshra.s32 %v129, 24
    %v1179 = vshra.s32 %v130, 24
    %v1180 = vshra.s32 %v131, 24
    %v1181 = vshra.s32 %v132, 24
    %v1182 = vshra.s32 %v133, 24
    %v1183 = vshra.s32 %v134, 24
    %v1184 = vand.u32 %v1168, 15
    %v1185 = vand.u32 %v1169, 15
    %v1186 = vand.u32 %v1170, 15
    %v1187 = vand.u32 %v1171, 15
    %v1188 = vand.u32 %v1172, 15
    %v1189 = vand.u32 %v1173, 15
    %v1190 = vand.u32 %v1174, 15
    %v1191 = vand.u32 %v1175, 15
    %v1192 = vand.u32 %v1176, 15
    %v1193 = vand.u32 %v1177, 15
    %v1194 = vand.u32 %v1178, 15
    %v1195 = vand.u32 %v1179, 15
    %v1196 = vand.u32 %v1180, 15
    %v1197 = vand.u32 %v1181, 15
    %v1198 = vand.u32 %v1182, 15
    %v1199 = vand.u32 %v1183, 15
    %v1200 = vcvt.s32.f32 %v1184
    %v1201 = vcvt.s32.f32 %v1185
    %v1202 = vcvt.s32.f32 %v1186
    %v1203 = vcvt.s32.f32 %v1187
    %v1204 = vcvt.s32.f32 %v1188
    %v1205 = vcvt.s32.f32 %v1189
    %v1206 = vcvt.s32.f32 %v1190
    %v1207 = vcvt.s32.f32 %v1191
    %v1208 = vcvt.s32.f32 %v1192
    %v1209 = vcvt.s32.f32 %v1193
    %v1210 = vcvt.s32.f32 %v1194
    %v1211 = vcvt.s32.f32 %v1195
    %v1212 = vcvt.s32.f32 %v1196
    %v1213 = vcvt.s32.f32 %v1197
    %v1214 = vcvt.s32.f32 %v1198
    %v1215 = vcvt.s32.f32 %v1199
    %v1216 = vpack.c.bf16 %v1201, %v1200
    %v1217 = vpack.c.bf16 %v1203, %v1202
    %v1218 = vpack.c.bf16 %v1205, %v1204
    %v1219 = vpack.c.bf16 %v1207, %v1206
    %v1220 = vpack.c.bf16 %v1209, %v1208
    %v1221 = vpack.c.bf16 %v1211, %v1210
    %v1222 = vpack.c.bf16 %v1213, %v1212
    %v1223 = vpack.c.bf16 %v1215, %v1214
    %1224 = vmatpush.bf16.msra.mxu0 %v1223
    %1225 = vmatpush.bf16.msra.mxu0 %v1222
    %1226 = vmatpush.bf16.msra.mxu0 %v1221
    %1227 = vmatpush.bf16.msra.mxu0 %v1220
    %1228 = vmatpush.bf16.msra.mxu0 %v1219
    %1229 = vmatpush.bf16.msra.mxu0 %v1218
    %1230 = vmatpush.bf16.msra.mxu0 %v1217
    %1231 = vmatpush.bf16.msra.mxu0 %v1216
    %1232 = vmatmul.bf16.gmra.mxu0 %v207
    %v1233 = vpop.f32.mrf.mxu0
    %v1234 = vadd.f32 0.0, %v1233
    %v1235 = vpop.f32.mrf.mxu0
    %v1236 = vadd.f32 0.0, %v1235
    %1237 = vdwg.mxu0
    %v1238 = vld [vmem:[#allocation8 + $0x6] sm:$0x1]
    %v1239 = vld [vmem:[#allocation9 + $0x6] sm:$0x1]
    %v1240 = vmul.f32 %v1239, %v1238
    %v1241 = vperm.slane %v1238, 0
    %v1242 = vmul.f32 %v1234, %v1241
    %v1243 = vmul.f32 %v1236, %v1241
    %v1244 = vperm.slane %v1240, 0
    %v1245 = vmul.f32 %v156, %v1244
    %v1246 = vmul.f32 %v158, %v1244
    %v1247 = vsub.f32 %v1242, %v1245
    %v1248 = vsub.f32 %v1243, %v1246
    %v1249 = vshra.s32 %v135, 24
    %v1250 = vshra.s32 %v136, 24
    %v1251 = vshra.s32 %v137, 24
    %v1252 = vshra.s32 %v138, 24
    %v1253 = vshra.s32 %v139, 24
    %v1254 = vshra.s32 %v140, 24
    %v1255 = vshra.s32 %v141, 24
    %v1256 = vshra.s32 %v142, 24
    %v1257 = vshra.s32 %v143, 24
    %v1258 = vshra.s32 %v144, 24
    %v1259 = vshra.s32 %v145, 24
    %v1260 = vshra.s32 %v146, 24
    %v1261 = vshra.s32 %v147, 24
    %v1262 = vshra.s32 %v148, 24
    %v1263 = vshra.s32 %v149, 24
    %v1264 = vshra.s32 %v150, 24
    %v1265 = vand.u32 %v1249, 15
    %v1266 = vand.u32 %v1250, 15
    %v1267 = vand.u32 %v1251, 15
    %v1268 = vand.u32 %v1252, 15
    %v1269 = vand.u32 %v1253, 15
    %v1270 = vand.u32 %v1254, 15
    %v1271 = vand.u32 %v1255, 15
    %v1272 = vand.u32 %v1256, 15
    %v1273 = vand.u32 %v1257, 15
    %v1274 = vand.u32 %v1258, 15
    %v1275 = vand.u32 %v1259, 15
    %v1276 = vand.u32 %v1260, 15
    %v1277 = vand.u32 %v1261, 15
    %v1278 = vand.u32 %v1262, 15
    %v1279 = vand.u32 %v1263, 15
    %v1280 = vand.u32 %v1264, 15
    %v1281 = vcvt.s32.f32 %v1265
    %v1282 = vcvt.s32.f32 %v1266
    %v1283 = vcvt.s32.f32 %v1267
    %v1284 = vcvt.s32.f32 %v1268
    %v1285 = vcvt.s32.f32 %v1269
    %v1286 = vcvt.s32.f32 %v1270
    %v1287 = vcvt.s32.f32 %v1271
    %v1288 = vcvt.s32.f32 %v1272
    %v1289 = vcvt.s32.f32 %v1273
    %v1290 = vcvt.s32.f32 %v1274
    %v1291 = vcvt.s32.f32 %v1275
    %v1292 = vcvt.s32.f32 %v1276
    %v1293 = vcvt.s32.f32 %v1277
    %v1294 = vcvt.s32.f32 %v1278
    %v1295 = vcvt.s32.f32 %v1279
    %v1296 = vcvt.s32.f32 %v1280
    %v1297 = vpack.c.bf16 %v1282, %v1281
    %v1298 = vpack.c.bf16 %v1284, %v1283
    %v1299 = vpack.c.bf16 %v1286, %v1285
    %v1300 = vpack.c.bf16 %v1288, %v1287
    %v1301 = vpack.c.bf16 %v1290, %v1289
    %v1302 = vpack.c.bf16 %v1292, %v1291
    %v1303 = vpack.c.bf16 %v1294, %v1293
    %v1304 = vpack.c.bf16 %v1296, %v1295
    %1305 = vmatpush.bf16.msra.mxu0 %v1304
    %1306 = vmatpush.bf16.msra.mxu0 %v1303
    %1307 = vmatpush.bf16.msra.mxu0 %v1302
    %1308 = vmatpush.bf16.msra.mxu0 %v1301
    %1309 = vmatpush.bf16.msra.mxu0 %v1300
    %1310 = vmatpush.bf16.msra.mxu0 %v1299
    %1311 = vmatpush.bf16.msra.mxu0 %v1298
    %1312 = vmatpush.bf16.msra.mxu0 %v1297
    %1313 = vmatmul.bf16.gmra.mxu0 %v276
    %v1314 = vpop.f32.mrf.mxu0
    %v1315 = vadd.f32 0.0, %v1314
    %v1316 = vpop.f32.mrf.mxu0
    %v1317 = vadd.f32 0.0, %v1316
    %1318 = vdwg.mxu0
    %v1319 = vld [vmem:[%s292 + $0x6] sm:$0x1]
    %v1320 = vld [vmem:[%s294 + $0x6] sm:$0x1]
    %v1321 = vmul.f32 %v1320, %v1319
    %v1322 = vperm.slane %v1319, 0
    %v1323 = vmul.f32 %v1315, %v1322
    %v1324 = vmul.f32 %v1317, %v1322
    %v1325 = vperm.slane %v1321, 0
    %v1326 = vmul.f32 %v160, %v1325
    %v1327 = vmul.f32 %v162, %v1325
    %v1328 = vsub.f32 %v1323, %v1326
    %v1329 = vsub.f32 %v1324, %v1327
    %v1330 = vadd.f32 %v1247, %v1328
    %v1331 = vadd.f32 %v1248, %v1329
    %s1332 = scalar_lea.vmem [#allocation2], 96
    %v1333 = vld [vmem:[%s1332] sm:$0xff]
    %v1334 = vld [vmem:[%s1332 + $0x8] sm:$0xff]
    %v1335 = vadd.f32 %v1333, %v1330
    %v1336 = vadd.f32 %v1334, %v1331
    %1337 = vst [vmem:[%s1332] sm:$0xff] %v1335
    %1338 = vst [vmem:[%s1332 + $0x8] sm:$0xff] %v1336
    %v1339 = vshra.s32 %v119, 28
    %v1340 = vshra.s32 %v120, 28
    %v1341 = vshra.s32 %v121, 28
    %v1342 = vshra.s32 %v122, 28
    %v1343 = vshra.s32 %v123, 28
    %v1344 = vshra.s32 %v124, 28
    %v1345 = vshra.s32 %v125, 28
    %v1346 = vshra.s32 %v126, 28
    %v1347 = vshra.s32 %v127, 28
    %v1348 = vshra.s32 %v128, 28
    %v1349 = vshra.s32 %v129, 28
    %v1350 = vshra.s32 %v130, 28
    %v1351 = vshra.s32 %v131, 28
    %v1352 = vshra.s32 %v132, 28
    %v1353 = vshra.s32 %v133, 28
    %v1354 = vshra.s32 %v134, 28
    %v1355 = vand.u32 %v1339, 15
    %v1356 = vand.u32 %v1340, 15
    %v1357 = vand.u32 %v1341, 15
    %v1358 = vand.u32 %v1342, 15
    %v1359 = vand.u32 %v1343, 15
    %v1360 = vand.u32 %v1344, 15
    %v1361 = vand.u32 %v1345, 15
    %v1362 = vand.u32 %v1346, 15
    %v1363 = vand.u32 %v1347, 15
    %v1364 = vand.u32 %v1348, 15
    %v1365 = vand.u32 %v1349, 15
    %v1366 = vand.u32 %v1350, 15
    %v1367 = vand.u32 %v1351, 15
    %v1368 = vand.u32 %v1352, 15
    %v1369 = vand.u32 %v1353, 15
    %v1370 = vand.u32 %v1354, 15
    %v1371 = vcvt.s32.f32 %v1355
    %v1372 = vcvt.s32.f32 %v1356
    %v1373 = vcvt.s32.f32 %v1357
    %v1374 = vcvt.s32.f32 %v1358
    %v1375 = vcvt.s32.f32 %v1359
    %v1376 = vcvt.s32.f32 %v1360
    %v1377 = vcvt.s32.f32 %v1361
    %v1378 = vcvt.s32.f32 %v1362
    %v1379 = vcvt.s32.f32 %v1363
    %v1380 = vcvt.s32.f32 %v1364
    %v1381 = vcvt.s32.f32 %v1365
    %v1382 = vcvt.s32.f32 %v1366
    %v1383 = vcvt.s32.f32 %v1367
    %v1384 = vcvt.s32.f32 %v1368
    %v1385 = vcvt.s32.f32 %v1369
    %v1386 = vcvt.s32.f32 %v1370
    %v1387 = vpack.c.bf16 %v1372, %v1371
    %v1388 = vpack.c.bf16 %v1374, %v1373
    %v1389 = vpack.c.bf16 %v1376, %v1375
    %v1390 = vpack.c.bf16 %v1378, %v1377
    %v1391 = vpack.c.bf16 %v1380, %v1379
    %v1392 = vpack.c.bf16 %v1382, %v1381
    %v1393 = vpack.c.bf16 %v1384, %v1383
    %v1394 = vpack.c.bf16 %v1386, %v1385
    %1395 = vmatpush.bf16.msra.mxu0 %v1394
    %1396 = vmatpush.bf16.msra.mxu0 %v1393
    %1397 = vmatpush.bf16.msra.mxu0 %v1392
    %1398 = vmatpush.bf16.msra.mxu0 %v1391
    %1399 = vmatpush.bf16.msra.mxu0 %v1390
    %1400 = vmatpush.bf16.msra.mxu0 %v1389
    %1401 = vmatpush.bf16.msra.mxu0 %v1388
    %1402 = vmatpush.bf16.msra.mxu0 %v1387
    %1403 = vmatmul.bf16.gmra.mxu0 %v207
    %v1404 = vpop.f32.mrf.mxu0
    %v1405 = vadd.f32 0.0, %v1404
    %v1406 = vpop.f32.mrf.mxu0
    %v1407 = vadd.f32 0.0, %v1406
    %1408 = vdwg.mxu0
    %v1409 = vld [vmem:[#allocation8 + $0x7] sm:$0x1]
    %v1410 = vld [vmem:[#allocation9 + $0x7] sm:$0x1]
    %v1411 = vmul.f32 %v1410, %v1409
    %v1412 = vperm.slane %v1409, 0
    %v1413 = vmul.f32 %v1405, %v1412
    %v1414 = vmul.f32 %v1407, %v1412
    %v1415 = vperm.slane %v1411, 0
    %v1416 = vmul.f32 %v156, %v1415
    %v1417 = vmul.f32 %v158, %v1415
    %v1418 = vsub.f32 %v1413, %v1416
    %v1419 = vsub.f32 %v1414, %v1417
    %v1420 = vshra.s32 %v135, 28
    %v1421 = vshra.s32 %v136, 28
    %v1422 = vshra.s32 %v137, 28
    %v1423 = vshra.s32 %v138, 28
    %v1424 = vshra.s32 %v139, 28
    %v1425 = vshra.s32 %v140, 28
    %v1426 = vshra.s32 %v141, 28
    %v1427 = vshra.s32 %v142, 28
    %v1428 = vshra.s32 %v143, 28
    %v1429 = vshra.s32 %v144, 28
    %v1430 = vshra.s32 %v145, 28
    %v1431 = vshra.s32 %v146, 28
    %v1432 = vshra.s32 %v147, 28
    %v1433 = vshra.s32 %v148, 28
    %v1434 = vshra.s32 %v149, 28
    %v1435 = vshra.s32 %v150, 28
    %v1436 = vand.u32 %v1420, 15
    %v1437 = vand.u32 %v1421, 15
    %v1438 = vand.u32 %v1422, 15
    %v1439 = vand.u32 %v1423, 15
    %v1440 = vand.u32 %v1424, 15
    %v1441 = vand.u32 %v1425, 15
    %v1442 = vand.u32 %v1426, 15
    %v1443 = vand.u32 %v1427, 15
    %v1444 = vand.u32 %v1428, 15
    %v1445 = vand.u32 %v1429, 15
    %v1446 = vand.u32 %v1430, 15
    %v1447 = vand.u32 %v1431, 15
    %v1448 = vand.u32 %v1432, 15
    %v1449 = vand.u32 %v1433, 15
    %v1450 = vand.u32 %v1434, 15
    %v1451 = vand.u32 %v1435, 15
    %v1452 = vcvt.s32.f32 %v1436
    %v1453 = vcvt.s32.f32 %v1437
    %v1454 = vcvt.s32.f32 %v1438
    %v1455 = vcvt.s32.f32 %v1439
    %v1456 = vcvt.s32.f32 %v1440
    %v1457 = vcvt.s32.f32 %v1441
    %v1458 = vcvt.s32.f32 %v1442
    %v1459 = vcvt.s32.f32 %v1443
    %v1460 = vcvt.s32.f32 %v1444
    %v1461 = vcvt.s32.f32 %v1445
    %v1462 = vcvt.s32.f32 %v1446
    %v1463 = vcvt.s32.f32 %v1447
    %v1464 = vcvt.s32.f32 %v1448
    %v1465 = vcvt.s32.f32 %v1449
    %v1466 = vcvt.s32.f32 %v1450
    %v1467 = vcvt.s32.f32 %v1451
    %v1468 = vpack.c.bf16 %v1453, %v1452
    %v1469 = vpack.c.bf16 %v1455, %v1454
    %v1470 = vpack.c.bf16 %v1457, %v1456
    %v1471 = vpack.c.bf16 %v1459, %v1458
    %v1472 = vpack.c.bf16 %v1461, %v1460
    %v1473 = vpack.c.bf16 %v1463, %v1462
    %v1474 = vpack.c.bf16 %v1465, %v1464
    %v1475 = vpack.c.bf16 %v1467, %v1466
    %1476 = vmatpush.bf16.msra.mxu0 %v1475
    %1477 = vmatpush.bf16.msra.mxu0 %v1474
    %1478 = vmatpush.bf16.msra.mxu0 %v1473
    %1479 = vmatpush.bf16.msra.mxu0 %v1472
    %1480 = vmatpush.bf16.msra.mxu0 %v1471
    %1481 = vmatpush.bf16.msra.mxu0 %v1470
    %1482 = vmatpush.bf16.msra.mxu0 %v1469
    %1483 = vmatpush.bf16.msra.mxu0 %v1468
    %1484 = vmatmul.bf16.gmra.mxu0 %v276
    %v1485 = vpop.f32.mrf.mxu0
    %v1486 = vadd.f32 0.0, %v1485
    %v1487 = vpop.f32.mrf.mxu0
    %v1488 = vadd.f32 0.0, %v1487
    %1489 = vdwg.mxu0
    %v1490 = vld [vmem:[%s292 + $0x7] sm:$0x1]
    %v1491 = vld [vmem:[%s294 + $0x7] sm:$0x1]
    %v1492 = vmul.f32 %v1491, %v1490
    %v1493 = vperm.slane %v1490, 0
    %v1494 = vmul.f32 %v1486, %v1493
    %v1495 = vmul.f32 %v1488, %v1493
    %v1496 = vperm.slane %v1492, 0
    %v1497 = vmul.f32 %v160, %v1496
    %v1498 = vmul.f32 %v162, %v1496
    %v1499 = vsub.f32 %v1494, %v1497
    %v1500 = vsub.f32 %v1495, %v1498
    %v1501 = vadd.f32 %v1418, %v1499
    %v1502 = vadd.f32 %v1419, %v1500
    %s1503 = scalar_lea.vmem [#allocation2], 112
    %v1504 = vld [vmem:[%s1503] sm:$0xff]
    %v1505 = vld [vmem:[%s1503 + $0x8] sm:$0xff]
    %v1506 = vadd.f32 %v1504, %v1501
    %v1507 = vadd.f32 %v1505, %v1502
    %1508 = vst [vmem:[%s1503] sm:$0xff] %v1506
    %1509 = vst [vmem:[%s1503 + $0x8] sm:$0xff] %v1507
    // Predicated region
    $region46: #{tpu_custom_call.1} parent=1 // pred_check
      %p1510 = pneg %p97
    $region47: #{tpu_custom_call.1} parent=1 // pred_check_branch
      %1512 = sbr.rel (%p1510) target = $region49
    $region48: #{tpu_custom_call.1} parent=1 // pred_region
      %v1513 = vld [vmem:[#allocation2] sm:$0xff]
      %v1514 = vld [vmem:[#allocation2 + $0x8] sm:$0xff]
      %v1515 = vld [vmem:[#allocation11] sm:$0x1]
      %v1516 = vperm.slane %v1515, 0
      %v1517 = vadd.f32 %v1513, %v1516
      %v1518 = vadd.f32 %v1514, %v1516
      %v1519 = vpack.c.bf16 %v1517, %v1517
      %v1520 = vpack.c.bf16 %v1518, %v1518
      %v1523 = vrot.slane %v1519, 3
      %v1524 = vrot.slane %v1520, 3
      %vm1525 = vcmask 1040384
      %v1528 = vsel %vm1525, %v1519, %v1523
      %vm1530 = vcmask 1041409
      %v1531 = vsel %vm1530, %v1519, %v1523
      %v1533 = vrot.slane %v1531, 1
      %vm1534 = vcmask 1042434
      %v1535 = vsel %vm1534, %v1519, %v1523
      %v1537 = vrot.slane %v1535, 2
      %vm1538 = vcmask 1043459
      %v1539 = vsel %vm1538, %v1519, %v1523
      %v1541 = vrot.slane %v1539, 3
      %v1544 = vsel %vm1525, %v1520, %v1524
      %v1546 = vsel %vm1530, %v1520, %v1524
      %v1548 = vrot.slane %v1546, 1
      %v1549 = vsel %vm1534, %v1520, %v1524
      %v1551 = vrot.slane %v1549, 2
      %v1552 = vsel %vm1538, %v1520, %v1524
      %v1554 = vrot.slane %v1552, 3
      %v1555 = vunpack.i.l.s16 %v1528
      %v1556 = vunpack.i.h.s16 %v1528
      %v1557 = vunpack.i.l.s16 %v1533
      %v1558 = vunpack.i.h.s16 %v1533
      %v1559 = vunpack.i.l.s16 %v1537
      %v1560 = vunpack.i.h.s16 %v1537
      %v1561 = vunpack.i.l.s16 %v1541
      %v1562 = vunpack.i.h.s16 %v1541
      %v1563 = vunpack.i.l.s16 %v1544
      %v1564 = vunpack.i.h.s16 %v1544
      %v1565 = vunpack.i.l.s16 %v1548
      %v1566 = vunpack.i.h.s16 %v1548
      %v1567 = vunpack.i.l.s16 %v1551
      %v1568 = vunpack.i.h.s16 %v1551
      %v1569 = vunpack.i.l.s16 %v1554
      %v1570 = vunpack.i.h.s16 %v1554
      %v1571 = vpack.i.b16 %v1555, %v1555
      %v1572 = vpack.i.b16 %v1556, %v1556
      %v1573 = vpack.i.b16 %v1557, %v1557
      %v1574 = vpack.i.b16 %v1558, %v1558
      %v1575 = vpack.i.b16 %v1559, %v1559
      %v1576 = vpack.i.b16 %v1560, %v1560
      %v1577 = vpack.i.b16 %v1561, %v1561
      %v1578 = vpack.i.b16 %v1562, %v1562
      %v1579 = vpack.i.b16 %v1563, %v1563
      %v1580 = vpack.i.b16 %v1564, %v1564
      %v1581 = vpack.i.b16 %v1565, %v1565
      %v1582 = vpack.i.b16 %v1566, %v1566
      %v1583 = vpack.i.b16 %v1567, %v1567
      %v1584 = vpack.i.b16 %v1568, %v1568
      %v1585 = vpack.i.b16 %v1569, %v1569
      %v1586 = vpack.i.b16 %v1570, %v1570
      %v1588 = vunpack.c.l.s4 286326784
      %v1589 = vunpack.c.0.s8 %v1588
      %v1590 = vperm.slane %v1571, %v1589
      %v1592 = vunpack.c.l.s4 286326784
      %v1593 = vunpack.c.0.s8 %v1592
      %v1594 = vperm.slane %v1572, %v1593
      %v1596 = vunpack.c.l.s4 286326784
      %v1597 = vunpack.c.0.s8 %v1596
      %v1598 = vperm.slane %v1573, %v1597
      %v1600 = vunpack.c.l.s4 286326784
      %v1601 = vunpack.c.0.s8 %v1600
      %v1602 = vperm.slane %v1574, %v1601
      %v1604 = vunpack.c.l.s4 286326784
      %v1605 = vunpack.c.0.s8 %v1604
      %v1606 = vperm.slane %v1575, %v1605
      %v1608 = vunpack.c.l.s4 286326784
      %v1609 = vunpack.c.0.s8 %v1608
      %v1610 = vperm.slane %v1576, %v1609
      %v1612 = vunpack.c.l.s4 286326784
      %v1613 = vunpack.c.0.s8 %v1612
      %v1614 = vperm.slane %v1577, %v1613
      %v1616 = vunpack.c.l.s4 286326784
      %v1617 = vunpack.c.0.s8 %v1616
      %v1618 = vperm.slane %v1578, %v1617
      %v1620 = vunpack.c.l.s4 286326784
      %v1621 = vunpack.c.0.s8 %v1620
      %v1622 = vperm.slane %v1579, %v1621
      %v1624 = vunpack.c.l.s4 286326784
      %v1625 = vunpack.c.0.s8 %v1624
      %v1626 = vperm.slane %v1580, %v1625
      %v1628 = vunpack.c.l.s4 286326784
      %v1629 = vunpack.c.0.s8 %v1628
      %v1630 = vperm.slane %v1581, %v1629
      %v1632 = vunpack.c.l.s4 286326784
      %v1633 = vunpack.c.0.s8 %v1632
      %v1634 = vperm.slane %v1582, %v1633
      %v1636 = vunpack.c.l.s4 286326784
      %v1637 = vunpack.c.0.s8 %v1636
      %v1638 = vperm.slane %v1583, %v1637
      %v1640 = vunpack.c.l.s4 286326784
      %v1641 = vunpack.c.0.s8 %v1640
      %v1642 = vperm.slane %v1584, %v1641
      %v1644 = vunpack.c.l.s4 286326784
      %v1645 = vunpack.c.0.s8 %v1644
      %v1646 = vperm.slane %v1585, %v1645
      %v1648 = vunpack.c.l.s4 286326784
      %v1649 = vunpack.c.0.s8 %v1648
      %v1650 = vperm.slane %v1586, %v1649
      %vm1667 = vcmask 1040384
      %vm1668 = vsmask.f32 256
      %vm1669 = vmand %vm1667, %vm1668
      %v1670 = vld [vmem:[#allocation12] sm:$0x1]
      %v1671 = vsel %vm1669, %v1590, %v1670
      %1672 = vst [vmem:[#allocation12] sm:$0x1] %v1671
      %v1673 = vld [vmem:[#allocation12 + $0x4] sm:$0x1]
      %v1674 = vsel %vm1669, %v1594, %v1673
      %1675 = vst [vmem:[#allocation12 + $0x4] sm:$0x1] %v1674
      %v1676 = vld [vmem:[#allocation12 + $0x8] sm:$0x1]
      %v1677 = vsel %vm1669, %v1598, %v1676
      %1678 = vst [vmem:[#allocation12 + $0x8] sm:$0x1] %v1677
      %v1679 = vld [vmem:[#allocation12 + $0xc] sm:$0x1]
      %v1680 = vsel %vm1669, %v1602, %v1679
      %1681 = vst [vmem:[#allocation12 + $0xc] sm:$0x1] %v1680
      %v1682 = vld [vmem:[#allocation12 + $0x10] sm:$0x1]
      %v1683 = vsel %vm1669, %v1606, %v1682
      %1684 = vst [vmem:[#allocation12 + $0x10] sm:$0x1] %v1683
      %v1685 = vld [vmem:[#allocation12 + $0x14] sm:$0x1]
      %v1686 = vsel %vm1669, %v1610, %v1685
      %1687 = vst [vmem:[#allocation12 + $0x14] sm:$0x1] %v1686
      %v1688 = vld [vmem:[#allocation12 + $0x18] sm:$0x1]
      %v1689 = vsel %vm1669, %v1614, %v1688
      %1690 = vst [vmem:[#allocation12 + $0x18] sm:$0x1] %v1689
      %v1691 = vld [vmem:[#allocation12 + $0x1c] sm:$0x1]
      %v1692 = vsel %vm1669, %v1618, %v1691
      %1693 = vst [vmem:[#allocation12 + $0x1c] sm:$0x1] %v1692
      %v1694 = vld [vmem:[#allocation12 + $0x20] sm:$0x1]
      %v1695 = vsel %vm1669, %v1622, %v1694
      %1696 = vst [vmem:[#allocation12 + $0x20] sm:$0x1] %v1695
      %v1697 = vld [vmem:[#allocation12 + $0x24] sm:$0x1]
      %v1698 = vsel %vm1669, %v1626, %v1697
      %1699 = vst [vmem:[#allocation12 + $0x24] sm:$0x1] %v1698
      %v1700 = vld [vmem:[#allocation12 + $0x28] sm:$0x1]
      %v1701 = vsel %vm1669, %v1630, %v1700
      %1702 = vst [vmem:[#allocation12 + $0x28] sm:$0x1] %v1701
      %v1703 = vld [vmem:[#allocation12 + $0x2c] sm:$0x1]
      %v1704 = vsel %vm1669, %v1634, %v1703
      %1705 = vst [vmem:[#allocation12 + $0x2c] sm:$0x1] %v1704
      %v1706 = vld [vmem:[#allocation12 + $0x30] sm:$0x1]
      %v1707 = vsel %vm1669, %v1638, %v1706
      %1708 = vst [vmem:[#allocation12 + $0x30] sm:$0x1] %v1707
      %v1709 = vld [vmem:[#allocation12 + $0x34] sm:$0x1]
      %v1710 = vsel %vm1669, %v1642, %v1709
      %1711 = vst [vmem:[#allocation12 + $0x34] sm:$0x1] %v1710
      %v1712 = vld [vmem:[#allocation12 + $0x38] sm:$0x1]
      %v1713 = vsel %vm1669, %v1646, %v1712
      %1714 = vst [vmem:[#allocation12 + $0x38] sm:$0x1] %v1713
      %v1715 = vld [vmem:[#allocation12 + $0x3c] sm:$0x1]
      %v1716 = vsel %vm1669, %v1650, %v1715
      %1717 = vst [vmem:[#allocation12 + $0x3c] sm:$0x1] %v1716
      %v1718 = vld [vmem:[%s477] sm:$0xff]
      %v1719 = vld [vmem:[%s477 + $0x8] sm:$0xff]
      %v1720 = vld [vmem:[#allocation11 + $0x1] sm:$0x1]
      %v1721 = vperm.slane %v1720, 0
      %v1722 = vadd.f32 %v1718, %v1721
      %v1723 = vadd.f32 %v1719, %v1721
      %v1724 = vpack.c.bf16 %v1722, %v1722
      %v1725 = vpack.c.bf16 %v1723, %v1723
      %v1728 = vrot.slane %v1724, 3
      %v1729 = vrot.slane %v1725, 3
      %v1732 = vsel %vm1525, %v1724, %v1728
      %v1734 = vsel %vm1530, %v1724, %v1728
      %v1736 = vrot.slane %v1734, 1
      %v1737 = vsel %vm1534, %v1724, %v1728
      %v1739 = vrot.slane %v1737, 2
      %v1740 = vsel %vm1538, %v1724, %v1728
      %v1742 = vrot.slane %v1740, 3
      %v1745 = vsel %vm1525, %v1725, %v1729
      %v1747 = vsel %vm1530, %v1725, %v1729
      %v1749 = vrot.slane %v1747, 1
      %v1750 = vsel %vm1534, %v1725, %v1729
      %v1752 = vrot.slane %v1750, 2
      %v1753 = vsel %vm1538, %v1725, %v1729
      %v1755 = vrot.slane %v1753, 3
      %v1756 = vunpack.i.l.s16 %v1732
      %v1757 = vunpack.i.h.s16 %v1732
      %v1758 = vunpack.i.l.s16 %v1736
      %v1759 = vunpack.i.h.s16 %v1736
      %v1760 = vunpack.i.l.s16 %v1739
      %v1761 = vunpack.i.h.s16 %v1739
      %v1762 = vunpack.i.l.s16 %v1742
      %v1763 = vunpack.i.h.s16 %v1742
      %v1764 = vunpack.i.l.s16 %v1745
      %v1765 = vunpack.i.h.s16 %v1745
      %v1766 = vunpack.i.l.s16 %v1749
      %v1767 = vunpack.i.h.s16 %v1749
      %v1768 = vunpack.i.l.s16 %v1752
      %v1769 = vunpack.i.h.s16 %v1752
      %v1770 = vunpack.i.l.s16 %v1755
      %v1771 = vunpack.i.h.s16 %v1755
      %v1772 = vpack.i.b16 %v1756, %v1756
      %v1773 = vpack.i.b16 %v1757, %v1757
      %v1774 = vpack.i.b16 %v1758, %v1758
      %v1775 = vpack.i.b16 %v1759, %v1759
      %v1776 = vpack.i.b16 %v1760, %v1760
      %v1777 = vpack.i.b16 %v1761, %v1761
      %v1778 = vpack.i.b16 %v1762, %v1762
      %v1779 = vpack.i.b16 %v1763, %v1763
      %v1780 = vpack.i.b16 %v1764, %v1764
      %v1781 = vpack.i.b16 %v1765, %v1765
      %v1782 = vpack.i.b16 %v1766, %v1766
      %v1783 = vpack.i.b16 %v1767, %v1767
      %v1784 = vpack.i.b16 %v1768, %v1768
      %v1785 = vpack.i.b16 %v1769, %v1769
      %v1786 = vpack.i.b16 %v1770, %v1770
      %v1787 = vpack.i.b16 %v1771, %v1771
      %v1789 = vunpack.c.l.s4 286326784
      %v1790 = vunpack.c.0.s8 %v1789
      %v1791 = vperm.slane %v1772, %v1790
      %v1793 = vunpack.c.l.s4 286326784
      %v1794 = vunpack.c.0.s8 %v1793
      %v1795 = vperm.slane %v1773, %v1794
      %v1797 = vunpack.c.l.s4 286326784
      %v1798 = vunpack.c.0.s8 %v1797
      %v1799 = vperm.slane %v1774, %v1798
      %v1801 = vunpack.c.l.s4 286326784
      %v1802 = vunpack.c.0.s8 %v1801
      %v1803 = vperm.slane %v1775, %v1802
      %v1805 = vunpack.c.l.s4 286326784
      %v1806 = vunpack.c.0.s8 %v1805
      %v1807 = vperm.slane %v1776, %v1806
      %v1809 = vunpack.c.l.s4 286326784
      %v1810 = vunpack.c.0.s8 %v1809
      %v1811 = vperm.slane %v1777, %v1810
      %v1813 = vunpack.c.l.s4 286326784
      %v1814 = vunpack.c.0.s8 %v1813
      %v1815 = vperm.slane %v1778, %v1814
      %v1817 = vunpack.c.l.s4 286326784
      %v1818 = vunpack.c.0.s8 %v1817
      %v1819 = vperm.slane %v1779, %v1818
      %v1821 = vunpack.c.l.s4 286326784
      %v1822 = vunpack.c.0.s8 %v1821
      %v1823 = vperm.slane %v1780, %v1822
      %v1825 = vunpack.c.l.s4 286326784
      %v1826 = vunpack.c.0.s8 %v1825
      %v1827 = vperm.slane %v1781, %v1826
      %v1829 = vunpack.c.l.s4 286326784
      %v1830 = vunpack.c.0.s8 %v1829
      %v1831 = vperm.slane %v1782, %v1830
      %v1833 = vunpack.c.l.s4 286326784
      %v1834 = vunpack.c.0.s8 %v1833
      %v1835 = vperm.slane %v1783, %v1834
      %v1837 = vunpack.c.l.s4 286326784
      %v1838 = vunpack.c.0.s8 %v1837
      %v1839 = vperm.slane %v1784, %v1838
      %v1841 = vunpack.c.l.s4 286326784
      %v1842 = vunpack.c.0.s8 %v1841
      %v1843 = vperm.slane %v1785, %v1842
      %v1845 = vunpack.c.l.s4 286326784
      %v1846 = vunpack.c.0.s8 %v1845
      %v1847 = vperm.slane %v1786, %v1846
      %v1849 = vunpack.c.l.s4 286326784
      %v1850 = vunpack.c.0.s8 %v1849
      %v1851 = vperm.slane %v1787, %v1850
      %vm1868 = vsmask.f32 7938
      %vm1869 = vmand %vm1667, %vm1868
      %v1870 = vld [vmem:[#allocation12] sm:$0x1]
      %v1871 = vsel %vm1869, %v1791, %v1870
      %1872 = vst [vmem:[#allocation12] sm:$0x1] %v1871
      %v1873 = vld [vmem:[#allocation12 + $0x4] sm:$0x1]
      %v1874 = vsel %vm1869, %v1795, %v1873
      %1875 = vst [vmem:[#allocation12 + $0x4] sm:$0x1] %v1874
      %v1876 = vld [vmem:[#allocation12 + $0x8] sm:$0x1]
      %v1877 = vsel %vm1869, %v1799, %v1876
      %1878 = vst [vmem:[#allocation12 + $0x8] sm:$0x1] %v1877
      %v1879 = vld [vmem:[#allocation12 + $0xc] sm:$0x1]
      %v1880 = vsel %vm1869, %v1803, %v1879
      %1881 = vst [vmem:[#allocation12 + $0xc] sm:$0x1] %v1880
      %v1882 = vld [vmem:[#allocation12 + $0x10] sm:$0x1]
      %v1883 = vsel %vm1869, %v1807, %v1882
      %1884 = vst [vmem:[#allocation12 + $0x10] sm:$0x1] %v1883
      %v1885 = vld [vmem:[#allocation12 + $0x14] sm:$0x1]
      %v1886 = vsel %vm1869, %v1811, %v1885
      %1887 = vst [vmem:[#allocation12 + $0x14] sm:$0x1] %v1886
      %v1888 = vld [vmem:[#allocation12 + $0x18] sm:$0x1]
      %v1889 = vsel %vm1869, %v1815, %v1888
      %1890 = vst [vmem:[#allocation12 + $0x18] sm:$0x1] %v1889
      %v1891 = vld [vmem:[#allocation12 + $0x1c] sm:$0x1]
      %v1892 = vsel %vm1869, %v1819, %v1891
      %1893 = vst [vmem:[#allocation12 + $0x1c] sm:$0x1] %v1892
      %v1894 = vld [vmem:[#allocation12 + $0x20] sm:$0x1]
      %v1895 = vsel %vm1869, %v1823, %v1894
      %1896 = vst [vmem:[#allocation12 + $0x20] sm:$0x1] %v1895
      %v1897 = vld [vmem:[#allocation12 + $0x24] sm:$0x1]
      %v1898 = vsel %vm1869, %v1827, %v1897
      %1899 = vst [vmem:[#allocation12 + $0x24] sm:$0x1] %v1898
      %v1900 = vld [vmem:[#allocation12 + $0x28] sm:$0x1]
      %v1901 = vsel %vm1869, %v1831, %v1900
      %1902 = vst [vmem:[#allocation12 + $0x28] sm:$0x1] %v1901
      %v1903 = vld [vmem:[#allocation12 + $0x2c] sm:$0x1]
      %v1904 = vsel %vm1869, %v1835, %v1903
      %1905 = vst [vmem:[#allocation12 + $0x2c] sm:$0x1] %v1904
      %v1906 = vld [vmem:[#allocation12 + $0x30] sm:$0x1]
      %v1907 = vsel %vm1869, %v1839, %v1906
      %1908 = vst [vmem:[#allocation12 + $0x30] sm:$0x1] %v1907
      %v1909 = vld [vmem:[#allocation12 + $0x34] sm:$0x1]
      %v1910 = vsel %vm1869, %v1843, %v1909
      %1911 = vst [vmem:[#allocation12 + $0x34] sm:$0x1] %v1910
      %v1912 = vld [vmem:[#allocation12 + $0x38] sm:$0x1]
      %v1913 = vsel %vm1869, %v1847, %v1912
      %1914 = vst [vmem:[#allocation12 + $0x38] sm:$0x1] %v1913
      %v1915 = vld [vmem:[#allocation12 + $0x3c] sm:$0x1]
      %v1916 = vsel %vm1869, %v1851, %v1915
      %1917 = vst [vmem:[#allocation12 + $0x3c] sm:$0x1] %v1916
      %v1918 = vld [vmem:[%s648] sm:$0xff]
      %v1919 = vld [vmem:[%s648 + $0x8] sm:$0xff]
      %v1920 = vld [vmem:[#allocation11 + $0x2] sm:$0x1]
      %v1921 = vperm.slane %v1920, 0
      %v1922 = vadd.f32 %v1918, %v1921
      %v1923 = vadd.f32 %v1919, %v1921
      %v1924 = vpack.c.bf16 %v1922, %v1922
      %v1925 = vpack.c.bf16 %v1923, %v1923
      %v1928 = vrot.slane %v1924, 3
      %v1929 = vrot.slane %v1925, 3
      %v1932 = vsel %vm1525, %v1924, %v1928
      %v1934 = vsel %vm1530, %v1924, %v1928
      %v1936 = vrot.slane %v1934, 1
      %v1937 = vsel %vm1534, %v1924, %v1928
      %v1939 = vrot.slane %v1937, 2
      %v1940 = vsel %vm1538, %v1924, %v1928
      %v1942 = vrot.slane %v1940, 3
      %v1945 = vsel %vm1525, %v1925, %v1929
      %v1947 = vsel %vm1530, %v1925, %v1929
      %v1949 = vrot.slane %v1947, 1
      %v1950 = vsel %vm1534, %v1925, %v1929
      %v1952 = vrot.slane %v1950, 2
      %v1953 = vsel %vm1538, %v1925, %v1929
      %v1955 = vrot.slane %v1953, 3
      %v1956 = vunpack.i.l.s16 %v1932
      %v1957 = vunpack.i.h.s16 %v1932
      %v1958 = vunpack.i.l.s16 %v1936
      %v1959 = vunpack.i.h.s16 %v1936
      %v1960 = vunpack.i.l.s16 %v1939
      %v1961 = vunpack.i.h.s16 %v1939
      %v1962 = vunpack.i.l.s16 %v1942
      %v1963 = vunpack.i.h.s16 %v1942
      %v1964 = vunpack.i.l.s16 %v1945
      %v1965 = vunpack.i.h.s16 %v1945
      %v1966 = vunpack.i.l.s16 %v1949
      %v1967 = vunpack.i.h.s16 %v1949
      %v1968 = vunpack.i.l.s16 %v1952
      %v1969 = vunpack.i.h.s16 %v1952
      %v1970 = vunpack.i.l.s16 %v1955
      %v1971 = vunpack.i.h.s16 %v1955
      %v1972 = vpack.i.b16 %v1956, %v1956
      %v1973 = vpack.i.b16 %v1957, %v1957
      %v1974 = vpack.i.b16 %v1958, %v1958
      %v1975 = vpack.i.b16 %v1959, %v1959
      %v1976 = vpack.i.b16 %v1960, %v1960
      %v1977 = vpack.i.b16 %v1961, %v1961
      %v1978 = vpack.i.b16 %v1962, %v1962
      %v1979 = vpack.i.b16 %v1963, %v1963
      %v1980 = vpack.i.b16 %v1964, %v1964
      %v1981 = vpack.i.b16 %v1965, %v1965
      %v1982 = vpack.i.b16 %v1966, %v1966
      %v1983 = vpack.i.b16 %v1967, %v1967
      %v1984 = vpack.i.b16 %v1968, %v1968
      %v1985 = vpack.i.b16 %v1969, %v1969
      %v1986 = vpack.i.b16 %v1970, %v1970
      %v1987 = vpack.i.b16 %v1971, %v1971
      %v1989 = vunpack.c.l.s4 286326784
      %v1990 = vunpack.c.0.s8 %v1989
      %v1991 = vperm.slane %v1972, %v1990
      %v1993 = vunpack.c.l.s4 286326784
      %v1994 = vunpack.c.0.s8 %v1993
      %v1995 = vperm.slane %v1973, %v1994
      %v1997 = vunpack.c.l.s4 286326784
      %v1998 = vunpack.c.0.s8 %v1997
      %v1999 = vperm.slane %v1974, %v1998
      %v2001 = vunpack.c.l.s4 286326784
      %v2002 = vunpack.c.0.s8 %v2001
      %v2003 = vperm.slane %v1975, %v2002
      %v2005 = vunpack.c.l.s4 286326784
      %v2006 = vunpack.c.0.s8 %v2005
      %v2007 = vperm.slane %v1976, %v2006
      %v2009 = vunpack.c.l.s4 286326784
      %v2010 = vunpack.c.0.s8 %v2009
      %v2011 = vperm.slane %v1977, %v2010
      %v2013 = vunpack.c.l.s4 286326784
      %v2014 = vunpack.c.0.s8 %v2013
      %v2015 = vperm.slane %v1978, %v2014
      %v2017 = vunpack.c.l.s4 286326784
      %v2018 = vunpack.c.0.s8 %v2017
      %v2019 = vperm.slane %v1979, %v2018
      %v2021 = vunpack.c.l.s4 286326784
      %v2022 = vunpack.c.0.s8 %v2021
      %v2023 = vperm.slane %v1980, %v2022
      %v2025 = vunpack.c.l.s4 286326784
      %v2026 = vunpack.c.0.s8 %v2025
      %v2027 = vperm.slane %v1981, %v2026
      %v2029 = vunpack.c.l.s4 286326784
      %v2030 = vunpack.c.0.s8 %v2029
      %v2031 = vperm.slane %v1982, %v2030
      %v2033 = vunpack.c.l.s4 286326784
      %v2034 = vunpack.c.0.s8 %v2033
      %v2035 = vperm.slane %v1983, %v2034
      %v2037 = vunpack.c.l.s4 286326784
      %v2038 = vunpack.c.0.s8 %v2037
      %v2039 = vperm.slane %v1984, %v2038
      %v2041 = vunpack.c.l.s4 286326784
      %v2042 = vunpack.c.0.s8 %v2041
      %v2043 = vperm.slane %v1985, %v2042
      %v2045 = vunpack.c.l.s4 286326784
      %v2046 = vunpack.c.0.s8 %v2045
      %v2047 = vperm.slane %v1986, %v2046
      %v2049 = vunpack.c.l.s4 286326784
      %v2050 = vunpack.c.0.s8 %v2049
      %v2051 = vperm.slane %v1987, %v2050
      %vm2068 = vcmask 1041409
      %vm2069 = vsmask.f32 1280
      %vm2070 = vmand %vm2068, %vm2069
      %v2071 = vld [vmem:[#allocation12] sm:$0x2]
      %v2072 = vsel %vm2070, %v1991, %v2071
      %2073 = vst [vmem:[#allocation12] sm:$0x2] %v2072
      %v2074 = vld [vmem:[#allocation12 + $0x4] sm:$0x2]
      %v2075 = vsel %vm2070, %v1995, %v2074
      %2076 = vst [vmem:[#allocation12 + $0x4] sm:$0x2] %v2075
      %v2077 = vld [vmem:[#allocation12 + $0x8] sm:$0x2]
      %v2078 = vsel %vm2070, %v1999, %v2077
      %2079 = vst [vmem:[#allocation12 + $0x8] sm:$0x2] %v2078
      %v2080 = vld [vmem:[#allocation12 + $0xc] sm:$0x2]
      %v2081 = vsel %vm2070, %v2003, %v2080
      %2082 = vst [vmem:[#allocation12 + $0xc] sm:$0x2] %v2081
      %v2083 = vld [vmem:[#allocation12 + $0x10] sm:$0x2]
      %v2084 = vsel %vm2070, %v2007, %v2083
      %2085 = vst [vmem:[#allocation12 + $0x10] sm:$0x2] %v2084
      %v2086 = vld [vmem:[#allocation12 + $0x14] sm:$0x2]
      %v2087 = vsel %vm2070, %v2011, %v2086
      %2088 = vst [vmem:[#allocation12 + $0x14] sm:$0x2] %v2087
      %v2089 = vld [vmem:[#allocation12 + $0x18] sm:$0x2]
      %v2090 = vsel %vm2070, %v2015, %v2089
      %2091 = vst [vmem:[#allocation12 + $0x18] sm:$0x2] %v2090
      %v2092 = vld [vmem:[#allocation12 + $0x1c] sm:$0x2]
      %v2093 = vsel %vm2070, %v2019, %v2092
      %2094 = vst [vmem:[#allocation12 + $0x1c] sm:$0x2] %v2093
      %v2095 = vld [vmem:[#allocation12 + $0x20] sm:$0x2]
      %v2096 = vsel %vm2070, %v2023, %v2095
      %2097 = vst [vmem:[#allocation12 + $0x20] sm:$0x2] %v2096
      %v2098 = vld [vmem:[#allocation12 + $0x24] sm:$0x2]
      %v2099 = vsel %vm2070, %v2027, %v2098
      %2100 = vst [vmem:[#allocation12 + $0x24] sm:$0x2] %v2099
      %v2101 = vld [vmem:[#allocation12 + $0x28] sm:$0x2]
      %v2102 = vsel %vm2070, %v2031, %v2101
      %2103 = vst [vmem:[#allocation12 + $0x28] sm:$0x2] %v2102
      %v2104 = vld [vmem:[#allocation12 + $0x2c] sm:$0x2]
      %v2105 = vsel %vm2070, %v2035, %v2104
      %2106 = vst [vmem:[#allocation12 + $0x2c] sm:$0x2] %v2105
      %v2107 = vld [vmem:[#allocation12 + $0x30] sm:$0x2]
      %v2108 = vsel %vm2070, %v2039, %v2107
      %2109 = vst [vmem:[#allocation12 + $0x30] sm:$0x2] %v2108
      %v2110 = vld [vmem:[#allocation12 + $0x34] sm:$0x2]
      %v2111 = vsel %vm2070, %v2043, %v2110
      %2112 = vst [vmem:[#allocation12 + $0x34] sm:$0x2] %v2111
      %v2113 = vld [vmem:[#allocation12 + $0x38] sm:$0x2]
      %v2114 = vsel %vm2070, %v2047, %v2113
      %2115 = vst [vmem:[#allocation12 + $0x38] sm:$0x2] %v2114
      %v2116 = vld [vmem:[#allocation12 + $0x3c] sm:$0x2]
      %v2117 = vsel %vm2070, %v2051, %v2116
      %2118 = vst [vmem:[#allocation12 + $0x3c] sm:$0x2] %v2117
      %v2119 = vld [vmem:[%s819] sm:$0xff]
      %v2120 = vld [vmem:[%s819 + $0x8] sm:$0xff]
      %v2121 = vld [vmem:[#allocation11 + $0x3] sm:$0x1]
      %v2122 = vperm.slane %v2121, 0
      %v2123 = vadd.f32 %v2119, %v2122
      %v2124 = vadd.f32 %v2120, %v2122
      %v2125 = vpack.c.bf16 %v2123, %v2123
      %v2126 = vpack.c.bf16 %v2124, %v2124
      %v2129 = vrot.slane %v2125, 3
      %v2130 = vrot.slane %v2126, 3
      %v2133 = vsel %vm1525, %v2125, %v2129
      %v2135 = vsel %vm1530, %v2125, %v2129
      %v2137 = vrot.slane %v2135, 1
      %v2138 = vsel %vm1534, %v2125, %v2129
      %v2140 = vrot.slane %v2138, 2
      %v2141 = vsel %vm1538, %v2125, %v2129
      %v2143 = vrot.slane %v2141, 3
      %v2146 = vsel %vm1525, %v2126, %v2130
      %v2148 = vsel %vm1530, %v2126, %v2130
      %v2150 = vrot.slane %v2148, 1
      %v2151 = vsel %vm1534, %v2126, %v2130
      %v2153 = vrot.slane %v2151, 2
      %v2154 = vsel %vm1538, %v2126, %v2130
      %v2156 = vrot.slane %v2154, 3
      %v2157 = vunpack.i.l.s16 %v2133
      %v2158 = vunpack.i.h.s16 %v2133
      %v2159 = vunpack.i.l.s16 %v2137
      %v2160 = vunpack.i.h.s16 %v2137
      %v2161 = vunpack.i.l.s16 %v2140
      %v2162 = vunpack.i.h.s16 %v2140
      %v2163 = vunpack.i.l.s16 %v2143
      %v2164 = vunpack.i.h.s16 %v2143
      %v2165 = vunpack.i.l.s16 %v2146
      %v2166 = vunpack.i.h.s16 %v2146
      %v2167 = vunpack.i.l.s16 %v2150
      %v2168 = vunpack.i.h.s16 %v2150
      %v2169 = vunpack.i.l.s16 %v2153
      %v2170 = vunpack.i.h.s16 %v2153
      %v2171 = vunpack.i.l.s16 %v2156
      %v2172 = vunpack.i.h.s16 %v2156
      %v2173 = vpack.i.b16 %v2157, %v2157
      %v2174 = vpack.i.b16 %v2158, %v2158
      %v2175 = vpack.i.b16 %v2159, %v2159
      %v2176 = vpack.i.b16 %v2160, %v2160
      %v2177 = vpack.i.b16 %v2161, %v2161
      %v2178 = vpack.i.b16 %v2162, %v2162
      %v2179 = vpack.i.b16 %v2163, %v2163
      %v2180 = vpack.i.b16 %v2164, %v2164
      %v2181 = vpack.i.b16 %v2165, %v2165
      %v2182 = vpack.i.b16 %v2166, %v2166
      %v2183 = vpack.i.b16 %v2167, %v2167
      %v2184 = vpack.i.b16 %v2168, %v2168
      %v2185 = vpack.i.b16 %v2169, %v2169
      %v2186 = vpack.i.b16 %v2170, %v2170
      %v2187 = vpack.i.b16 %v2171, %v2171
      %v2188 = vpack.i.b16 %v2172, %v2172
      %v2190 = vunpack.c.l.s4 286326784
      %v2191 = vunpack.c.0.s8 %v2190
      %v2192 = vperm.slane %v2173, %v2191
      %v2194 = vunpack.c.l.s4 286326784
      %v2195 = vunpack.c.0.s8 %v2194
      %v2196 = vperm.slane %v2174, %v2195
      %v2198 = vunpack.c.l.s4 286326784
      %v2199 = vunpack.c.0.s8 %v2198
      %v2200 = vperm.slane %v2175, %v2199
      %v2202 = vunpack.c.l.s4 286326784
      %v2203 = vunpack.c.0.s8 %v2202
      %v2204 = vperm.slane %v2176, %v2203
      %v2206 = vunpack.c.l.s4 286326784
      %v2207 = vunpack.c.0.s8 %v2206
      %v2208 = vperm.slane %v2177, %v2207
      %v2210 = vunpack.c.l.s4 286326784
      %v2211 = vunpack.c.0.s8 %v2210
      %v2212 = vperm.slane %v2178, %v2211
      %v2214 = vunpack.c.l.s4 286326784
      %v2215 = vunpack.c.0.s8 %v2214
      %v2216 = vperm.slane %v2179, %v2215
      %v2218 = vunpack.c.l.s4 286326784
      %v2219 = vunpack.c.0.s8 %v2218
      %v2220 = vperm.slane %v2180, %v2219
      %v2222 = vunpack.c.l.s4 286326784
      %v2223 = vunpack.c.0.s8 %v2222
      %v2224 = vperm.slane %v2181, %v2223
      %v2226 = vunpack.c.l.s4 286326784
      %v2227 = vunpack.c.0.s8 %v2226
      %v2228 = vperm.slane %v2182, %v2227
      %v2230 = vunpack.c.l.s4 286326784
      %v2231 = vunpack.c.0.s8 %v2230
      %v2232 = vperm.slane %v2183, %v2231
      %v2234 = vunpack.c.l.s4 286326784
      %v2235 = vunpack.c.0.s8 %v2234
      %v2236 = vperm.slane %v2184, %v2235
      %v2238 = vunpack.c.l.s4 286326784
      %v2239 = vunpack.c.0.s8 %v2238
      %v2240 = vperm.slane %v2185, %v2239
      %v2242 = vunpack.c.l.s4 286326784
      %v2243 = vunpack.c.0.s8 %v2242
      %v2244 = vperm.slane %v2186, %v2243
      %v2246 = vunpack.c.l.s4 286326784
      %v2247 = vunpack.c.0.s8 %v2246
      %v2248 = vperm.slane %v2187, %v2247
      %v2250 = vunpack.c.l.s4 286326784
      %v2251 = vunpack.c.0.s8 %v2250
      %v2252 = vperm.slane %v2188, %v2251
      %vm2269 = vsmask.f32 7942
      %vm2270 = vmand %vm2068, %vm2269
      %v2271 = vld [vmem:[#allocation12] sm:$0x2]
      %v2272 = vsel %vm2270, %v2192, %v2271
      %2273 = vst [vmem:[#allocation12] sm:$0x2] %v2272
      %v2274 = vld [vmem:[#allocation12 + $0x4] sm:$0x2]
      %v2275 = vsel %vm2270, %v2196, %v2274
      %2276 = vst [vmem:[#allocation12 + $0x4] sm:$0x2] %v2275
      %v2277 = vld [vmem:[#allocation12 + $0x8] sm:$0x2]
      %v2278 = vsel %vm2270, %v2200, %v2277
      %2279 = vst [vmem:[#allocation12 + $0x8] sm:$0x2] %v2278
      %v2280 = vld [vmem:[#allocation12 + $0xc] sm:$0x2]
      %v2281 = vsel %vm2270, %v2204, %v2280
      %2282 = vst [vmem:[#allocation12 + $0xc] sm:$0x2] %v2281
      %v2283 = vld [vmem:[#allocation12 + $0x10] sm:$0x2]
      %v2284 = vsel %vm2270, %v2208, %v2283
      %2285 = vst [vmem:[#allocation12 + $0x10] sm:$0x2] %v2284
      %v2286 = vld [vmem:[#allocation12 + $0x14] sm:$0x2]
      %v2287 = vsel %vm2270, %v2212, %v2286
      %2288 = vst [vmem:[#allocation12 + $0x14] sm:$0x2] %v2287
      %v2289 = vld [vmem:[#allocation12 + $0x18] sm:$0x2]
      %v2290 = vsel %vm2270, %v2216, %v2289
      %2291 = vst [vmem:[#allocation12 + $0x18] sm:$0x2] %v2290
      %v2292 = vld [vmem:[#allocation12 + $0x1c] sm:$0x2]
      %v2293 = vsel %vm2270, %v2220, %v2292
      %2294 = vst [vmem:[#allocation12 + $0x1c] sm:$0x2] %v2293
      %v2295 = vld [vmem:[#allocation12 + $0x20] sm:$0x2]
      %v2296 = vsel %vm2270, %v2224, %v2295
      %2297 = vst [vmem:[#allocation12 + $0x20] sm:$0x2] %v2296
      %v2298 = vld [vmem:[#allocation12 + $0x24] sm:$0x2]
      %v2299 = vsel %vm2270, %v2228, %v2298
      %2300 = vst [vmem:[#allocation12 + $0x24] sm:$0x2] %v2299
      %v2301 = vld [vmem:[#allocation12 + $0x28] sm:$0x2]
      %v2302 = vsel %vm2270, %v2232, %v2301
      %2303 = vst [vmem:[#allocation12 + $0x28] sm:$0x2] %v2302
      %v2304 = vld [vmem:[#allocation12 + $0x2c] sm:$0x2]
      %v2305 = vsel %vm2270, %v2236, %v2304
      %2306 = vst [vmem:[#allocation12 + $0x2c] sm:$0x2] %v2305
      %v2307 = vld [vmem:[#allocation12 + $0x30] sm:$0x2]
      %v2308 = vsel %vm2270, %v2240, %v2307
      %2309 = vst [vmem:[#allocation12 + $0x30] sm:$0x2] %v2308
      %v2310 = vld [vmem:[#allocation12 + $0x34] sm:$0x2]
      %v2311 = vsel %vm2270, %v2244, %v2310
      %2312 = vst [vmem:[#allocation12 + $0x34] sm:$0x2] %v2311
      %v2313 = vld [vmem:[#allocation12 + $0x38] sm:$0x2]
      %v2314 = vsel %vm2270, %v2248, %v2313
      %2315 = vst [vmem:[#allocation12 + $0x38] sm:$0x2] %v2314
      %v2316 = vld [vmem:[#allocation12 + $0x3c] sm:$0x2]
      %v2317 = vsel %vm2270, %v2252, %v2316
      %2318 = vst [vmem:[#allocation12 + $0x3c] sm:$0x2] %v2317
      %v2319 = vld [vmem:[%s990] sm:$0xff]
      %v2320 = vld [vmem:[%s990 + $0x8] sm:$0xff]
      %v2321 = vld [vmem:[#allocation11 + $0x4] sm:$0x1]
      %v2322 = vperm.slane %v2321, 0
      %v2323 = vadd.f32 %v2319, %v2322
      %v2324 = vadd.f32 %v2320, %v2322
      %v2325 = vpack.c.bf16 %v2323, %v2323
      %v2326 = vpack.c.bf16 %v2324, %v2324
      %v2329 = vrot.slane %v2325, 3
      %v2330 = vrot.slane %v2326, 3
      %v2333 = vsel %vm1525, %v2325, %v2329
      %v2335 = vsel %vm1530, %v2325, %v2329
      %v2337 = vrot.slane %v2335, 1
      %v2338 = vsel %vm1534, %v2325, %v2329
      %v2340 = vrot.slane %v2338, 2
      %v2341 = vsel %vm1538, %v2325, %v2329
      %v2343 = vrot.slane %v2341, 3
      %v2346 = vsel %vm1525, %v2326, %v2330
      %v2348 = vsel %vm1530, %v2326, %v2330
      %v2350 = vrot.slane %v2348, 1
      %v2351 = vsel %vm1534, %v2326, %v2330
      %v2353 = vrot.slane %v2351, 2
      %v2354 = vsel %vm1538, %v2326, %v2330
      %v2356 = vrot.slane %v2354, 3
      %v2357 = vunpack.i.l.s16 %v2333
      %v2358 = vunpack.i.h.s16 %v2333
      %v2359 = vunpack.i.l.s16 %v2337
      %v2360 = vunpack.i.h.s16 %v2337
      %v2361 = vunpack.i.l.s16 %v2340
      %v2362 = vunpack.i.h.s16 %v2340
      %v2363 = vunpack.i.l.s16 %v2343
      %v2364 = vunpack.i.h.s16 %v2343
      %v2365 = vunpack.i.l.s16 %v2346
      %v2366 = vunpack.i.h.s16 %v2346
      %v2367 = vunpack.i.l.s16 %v2350
      %v2368 = vunpack.i.h.s16 %v2350
      %v2369 = vunpack.i.l.s16 %v2353
      %v2370 = vunpack.i.h.s16 %v2353
      %v2371 = vunpack.i.l.s16 %v2356
      %v2372 = vunpack.i.h.s16 %v2356
      %v2373 = vpack.i.b16 %v2357, %v2357
      %v2374 = vpack.i.b16 %v2358, %v2358
      %v2375 = vpack.i.b16 %v2359, %v2359
      %v2376 = vpack.i.b16 %v2360, %v2360
      %v2377 = vpack.i.b16 %v2361, %v2361
      %v2378 = vpack.i.b16 %v2362, %v2362
      %v2379 = vpack.i.b16 %v2363, %v2363
      %v2380 = vpack.i.b16 %v2364, %v2364
      %v2381 = vpack.i.b16 %v2365, %v2365
      %v2382 = vpack.i.b16 %v2366, %v2366
      %v2383 = vpack.i.b16 %v2367, %v2367
      %v2384 = vpack.i.b16 %v2368, %v2368
      %v2385 = vpack.i.b16 %v2369, %v2369
      %v2386 = vpack.i.b16 %v2370, %v2370
      %v2387 = vpack.i.b16 %v2371, %v2371
      %v2388 = vpack.i.b16 %v2372, %v2372
      %v2390 = vunpack.c.l.s4 286326784
      %v2391 = vunpack.c.0.s8 %v2390
      %v2392 = vperm.slane %v2373, %v2391
      %v2394 = vunpack.c.l.s4 286326784
      %v2395 = vunpack.c.0.s8 %v2394
      %v2396 = vperm.slane %v2374, %v2395
      %v2398 = vunpack.c.l.s4 286326784
      %v2399 = vunpack.c.0.s8 %v2398
      %v2400 = vperm.slane %v2375, %v2399
      %v2402 = vunpack.c.l.s4 286326784
      %v2403 = vunpack.c.0.s8 %v2402
      %v2404 = vperm.slane %v2376, %v2403
      %v2406 = vunpack.c.l.s4 286326784
      %v2407 = vunpack.c.0.s8 %v2406
      %v2408 = vperm.slane %v2377, %v2407
      %v2410 = vunpack.c.l.s4 286326784
      %v2411 = vunpack.c.0.s8 %v2410
      %v2412 = vperm.slane %v2378, %v2411
      %v2414 = vunpack.c.l.s4 286326784
      %v2415 = vunpack.c.0.s8 %v2414
      %v2416 = vperm.slane %v2379, %v2415
      %v2418 = vunpack.c.l.s4 286326784
      %v2419 = vunpack.c.0.s8 %v2418
      %v2420 = vperm.slane %v2380, %v2419
      %v2422 = vunpack.c.l.s4 286326784
      %v2423 = vunpack.c.0.s8 %v2422
      %v2424 = vperm.slane %v2381, %v2423
      %v2426 = vunpack.c.l.s4 286326784
      %v2427 = vunpack.c.0.s8 %v2426
      %v2428 = vperm.slane %v2382, %v2427
      %v2430 = vunpack.c.l.s4 286326784
      %v2431 = vunpack.c.0.s8 %v2430
      %v2432 = vperm.slane %v2383, %v2431
      %v2434 = vunpack.c.l.s4 286326784
      %v2435 = vunpack.c.0.s8 %v2434
      %v2436 = vperm.slane %v2384, %v2435
      %v2438 = vunpack.c.l.s4 286326784
      %v2439 = vunpack.c.0.s8 %v2438
      %v2440 = vperm.slane %v2385, %v2439
      %v2442 = vunpack.c.l.s4 286326784
      %v2443 = vunpack.c.0.s8 %v2442
      %v2444 = vperm.slane %v2386, %v2443
      %v2446 = vunpack.c.l.s4 286326784
      %v2447 = vunpack.c.0.s8 %v2446
      %v2448 = vperm.slane %v2387, %v2447
      %v2450 = vunpack.c.l.s4 286326784
      %v2451 = vunpack.c.0.s8 %v2450
      %v2452 = vperm.slane %v2388, %v2451
      %vm2469 = vcmask 1042434
      %vm2470 = vsmask.f32 2304
      %vm2471 = vmand %vm2469, %vm2470
      %v2472 = vld [vmem:[#allocation12] sm:$0x4]
      %v2473 = vsel %vm2471, %v2392, %v2472
      %2474 = vst [vmem:[#allocation12] sm:$0x4] %v2473
      %v2475 = vld [vmem:[#allocation12 + $0x4] sm:$0x4]
      %v2476 = vsel %vm2471, %v2396, %v2475
      %2477 = vst [vmem:[#allocation12 + $0x4] sm:$0x4] %v2476
      %v2478 = vld [vmem:[#allocation12 + $0x8] sm:$0x4]
      %v2479 = vsel %vm2471, %v2400, %v2478
      %2480 = vst [vmem:[#allocation12 + $0x8] sm:$0x4] %v2479
      %v2481 = vld [vmem:[#allocation12 + $0xc] sm:$0x4]
      %v2482 = vsel %vm2471, %v2404, %v2481
      %2483 = vst [vmem:[#allocation12 + $0xc] sm:$0x4] %v2482
      %v2484 = vld [vmem:[#allocation12 + $0x10] sm:$0x4]
      %v2485 = vsel %vm2471, %v2408, %v2484
      %2486 = vst [vmem:[#allocation12 + $0x10] sm:$0x4] %v2485
      %v2487 = vld [vmem:[#allocation12 + $0x14] sm:$0x4]
      %v2488 = vsel %vm2471, %v2412, %v2487
      %2489 = vst [vmem:[#allocation12 + $0x14] sm:$0x4] %v2488
      %v2490 = vld [vmem:[#allocation12 + $0x18] sm:$0x4]
      %v2491 = vsel %vm2471, %v2416, %v2490
      %2492 = vst [vmem:[#allocation12 + $0x18] sm:$0x4] %v2491
      %v2493 = vld [vmem:[#allocation12 + $0x1c] sm:$0x4]
      %v2494 = vsel %vm2471, %v2420, %v2493
      %2495 = vst [vmem:[#allocation12 + $0x1c] sm:$0x4] %v2494
      %v2496 = vld [vmem:[#allocation12 + $0x20] sm:$0x4]
      %v2497 = vsel %vm2471, %v2424, %v2496
      %2498 = vst [vmem:[#allocation12 + $0x20] sm:$0x4] %v2497
      %v2499 = vld [vmem:[#allocation12 + $0x24] sm:$0x4]
      %v2500 = vsel %vm2471, %v2428, %v2499
      %2501 = vst [vmem:[#allocation12 + $0x24] sm:$0x4] %v2500
      %v2502 = vld [vmem:[#allocation12 + $0x28] sm:$0x4]
      %v2503 = vsel %vm2471, %v2432, %v2502
      %2504 = vst [vmem:[#allocation12 + $0x28] sm:$0x4] %v2503
      %v2505 = vld [vmem:[#allocation12 + $0x2c] sm:$0x4]
      %v2506 = vsel %vm2471, %v2436, %v2505
      %2507 = vst [vmem:[#allocation12 + $0x2c] sm:$0x4] %v2506
      %v2508 = vld [vmem:[#allocation12 + $0x30] sm:$0x4]
      %v2509 = vsel %vm2471, %v2440, %v2508
      %2510 = vst [vmem:[#allocation12 + $0x30] sm:$0x4] %v2509
      %v2511 = vld [vmem:[#allocation12 + $0x34] sm:$0x4]
      %v2512 = vsel %vm2471, %v2444, %v2511
      %2513 = vst [vmem:[#allocation12 + $0x34] sm:$0x4] %v2512
      %v2514 = vld [vmem:[#allocation12 + $0x38] sm:$0x4]
      %v2515 = vsel %vm2471, %v2448, %v2514
      %2516 = vst [vmem:[#allocation12 + $0x38] sm:$0x4] %v2515
      %v2517 = vld [vmem:[#allocation12 + $0x3c] sm:$0x4]
      %v2518 = vsel %vm2471, %v2452, %v2517
      %2519 = vst [vmem:[#allocation12 + $0x3c] sm:$0x4] %v2518
      %v2520 = vld [vmem:[%s1161] sm:$0xff]
      %v2521 = vld [vmem:[%s1161 + $0x8] sm:$0xff]
      %v2522 = vld [vmem:[#allocation11 + $0x5] sm:$0x1]
      %v2523 = vperm.slane %v2522, 0
      %v2524 = vadd.f32 %v2520, %v2523
      %v2525 = vadd.f32 %v2521, %v2523
      %v2526 = vpack.c.bf16 %v2524, %v2524
      %v2527 = vpack.c.bf16 %v2525, %v2525
      %v2530 = vrot.slane %v2526, 3
      %v2531 = vrot.slane %v2527, 3
      %v2534 = vsel %vm1525, %v2526, %v2530
      %v2536 = vsel %vm1530, %v2526, %v2530
      %v2538 = vrot.slane %v2536, 1
      %v2539 = vsel %vm1534, %v2526, %v2530
      %v2541 = vrot.slane %v2539, 2
      %v2542 = vsel %vm1538, %v2526, %v2530
      %v2544 = vrot.slane %v2542, 3
      %v2547 = vsel %vm1525, %v2527, %v2531
      %v2549 = vsel %vm1530, %v2527, %v2531
      %v2551 = vrot.slane %v2549, 1
      %v2552 = vsel %vm1534, %v2527, %v2531
      %v2554 = vrot.slane %v2552, 2
      %v2555 = vsel %vm1538, %v2527, %v2531
      %v2557 = vrot.slane %v2555, 3
      %v2558 = vunpack.i.l.s16 %v2534
      %v2559 = vunpack.i.h.s16 %v2534
      %v2560 = vunpack.i.l.s16 %v2538
      %v2561 = vunpack.i.h.s16 %v2538
      %v2562 = vunpack.i.l.s16 %v2541
      %v2563 = vunpack.i.h.s16 %v2541
      %v2564 = vunpack.i.l.s16 %v2544
      %v2565 = vunpack.i.h.s16 %v2544
      %v2566 = vunpack.i.l.s16 %v2547
      %v2567 = vunpack.i.h.s16 %v2547
      %v2568 = vunpack.i.l.s16 %v2551
      %v2569 = vunpack.i.h.s16 %v2551
      %v2570 = vunpack.i.l.s16 %v2554
      %v2571 = vunpack.i.h.s16 %v2554
      %v2572 = vunpack.i.l.s16 %v2557
      %v2573 = vunpack.i.h.s16 %v2557
      %v2574 = vpack.i.b16 %v2558, %v2558
      %v2575 = vpack.i.b16 %v2559, %v2559
      %v2576 = vpack.i.b16 %v2560, %v2560
      %v2577 = vpack.i.b16 %v2561, %v2561
      %v2578 = vpack.i.b16 %v2562, %v2562
      %v2579 = vpack.i.b16 %v2563, %v2563
      %v2580 = vpack.i.b16 %v2564, %v2564
      %v2581 = vpack.i.b16 %v2565, %v2565
      %v2582 = vpack.i.b16 %v2566, %v2566
      %v2583 = vpack.i.b16 %v2567, %v2567
      %v2584 = vpack.i.b16 %v2568, %v2568
      %v2585 = vpack.i.b16 %v2569, %v2569
      %v2586 = vpack.i.b16 %v2570, %v2570
      %v2587 = vpack.i.b16 %v2571, %v2571
      %v2588 = vpack.i.b16 %v2572, %v2572
      %v2589 = vpack.i.b16 %v2573, %v2573
      %v2591 = vunpack.c.l.s4 286326784
      %v2592 = vunpack.c.0.s8 %v2591
      %v2593 = vperm.slane %v2574, %v2592
      %v2595 = vunpack.c.l.s4 286326784
      %v2596 = vunpack.c.0.s8 %v2595
      %v2597 = vperm.slane %v2575, %v2596
      %v2599 = vunpack.c.l.s4 286326784
      %v2600 = vunpack.c.0.s8 %v2599
      %v2601 = vperm.slane %v2576, %v2600
      %v2603 = vunpack.c.l.s4 286326784
      %v2604 = vunpack.c.0.s8 %v2603
      %v2605 = vperm.slane %v2577, %v2604
      %v2607 = vunpack.c.l.s4 286326784
      %v2608 = vunpack.c.0.s8 %v2607
      %v2609 = vperm.slane %v2578, %v2608
      %v2611 = vunpack.c.l.s4 286326784
      %v2612 = vunpack.c.0.s8 %v2611
      %v2613 = vperm.slane %v2579, %v2612
      %v2615 = vunpack.c.l.s4 286326784
      %v2616 = vunpack.c.0.s8 %v2615
      %v2617 = vperm.slane %v2580, %v2616
      %v2619 = vunpack.c.l.s4 286326784
      %v2620 = vunpack.c.0.s8 %v2619
      %v2621 = vperm.slane %v2581, %v2620
      %v2623 = vunpack.c.l.s4 286326784
      %v2624 = vunpack.c.0.s8 %v2623
      %v2625 = vperm.slane %v2582, %v2624
      %v2627 = vunpack.c.l.s4 286326784
      %v2628 = vunpack.c.0.s8 %v2627
      %v2629 = vperm.slane %v2583, %v2628
      %v2631 = vunpack.c.l.s4 286326784
      %v2632 = vunpack.c.0.s8 %v2631
      %v2633 = vperm.slane %v2584, %v2632
      %v2635 = vunpack.c.l.s4 286326784
      %v2636 = vunpack.c.0.s8 %v2635
      %v2637 = vperm.slane %v2585, %v2636
      %v2639 = vunpack.c.l.s4 286326784
      %v2640 = vunpack.c.0.s8 %v2639
      %v2641 = vperm.slane %v2586, %v2640
      %v2643 = vunpack.c.l.s4 286326784
      %v2644 = vunpack.c.0.s8 %v2643
      %v2645 = vperm.slane %v2587, %v2644
      %v2647 = vunpack.c.l.s4 286326784
      %v2648 = vunpack.c.0.s8 %v2647
      %v2649 = vperm.slane %v2588, %v2648
      %v2651 = vunpack.c.l.s4 286326784
      %v2652 = vunpack.c.0.s8 %v2651
      %v2653 = vperm.slane %v2589, %v2652
      %vm2670 = vsmask.f32 7946
      %vm2671 = vmand %vm2469, %vm2670
      %v2672 = vld [vmem:[#allocation12] sm:$0x4]
      %v2673 = vsel %vm2671, %v2593, %v2672
      %2674 = vst [vmem:[#allocation12] sm:$0x4] %v2673
      %v2675 = vld [vmem:[#allocation12 + $0x4] sm:$0x4]
      %v2676 = vsel %vm2671, %v2597, %v2675
      %2677 = vst [vmem:[#allocation12 + $0x4] sm:$0x4] %v2676
      %v2678 = vld [vmem:[#allocation12 + $0x8] sm:$0x4]
      %v2679 = vsel %vm2671, %v2601, %v2678
      %2680 = vst [vmem:[#allocation12 + $0x8] sm:$0x4] %v2679
      %v2681 = vld [vmem:[#allocation12 + $0xc] sm:$0x4]
      %v2682 = vsel %vm2671, %v2605, %v2681
      %2683 = vst [vmem:[#allocation12 + $0xc] sm:$0x4] %v2682
      %v2684 = vld [vmem:[#allocation12 + $0x10] sm:$0x4]
      %v2685 = vsel %vm2671, %v2609, %v2684
      %2686 = vst [vmem:[#allocation12 + $0x10] sm:$0x4] %v2685
      %v2687 = vld [vmem:[#allocation12 + $0x14] sm:$0x4]
      %v2688 = vsel %vm2671, %v2613, %v2687
      %2689 = vst [vmem:[#allocation12 + $0x14] sm:$0x4] %v2688
      %v2690 = vld [vmem:[#allocation12 + $0x18] sm:$0x4]
      %v2691 = vsel %vm2671, %v2617, %v2690
      %2692 = vst [vmem:[#allocation12 + $0x18] sm:$0x4] %v2691
      %v2693 = vld [vmem:[#allocation12 + $0x1c] sm:$0x4]
      %v2694 = vsel %vm2671, %v2621, %v2693
      %2695 = vst [vmem:[#allocation12 + $0x1c] sm:$0x4] %v2694
      %v2696 = vld [vmem:[#allocation12 + $0x20] sm:$0x4]
      %v2697 = vsel %vm2671, %v2625, %v2696
      %2698 = vst [vmem:[#allocation12 + $0x20] sm:$0x4] %v2697
      %v2699 = vld [vmem:[#allocation12 + $0x24] sm:$0x4]
      %v2700 = vsel %vm2671, %v2629, %v2699
      %2701 = vst [vmem:[#allocation12 + $0x24] sm:$0x4] %v2700
      %v2702 = vld [vmem:[#allocation12 + $0x28] sm:$0x4]
      %v2703 = vsel %vm2671, %v2633, %v2702
      %2704 = vst [vmem:[#allocation12 + $0x28] sm:$0x4] %v2703
      %v2705 = vld [vmem:[#allocation12 + $0x2c] sm:$0x4]
      %v2706 = vsel %vm2671, %v2637, %v2705
      %2707 = vst [vmem:[#allocation12 + $0x2c] sm:$0x4] %v2706
      %v2708 = vld [vmem:[#allocation12 + $0x30] sm:$0x4]
      %v2709 = vsel %vm2671, %v2641, %v2708
      %2710 = vst [vmem:[#allocation12 + $0x30] sm:$0x4] %v2709
      %v2711 = vld [vmem:[#allocation12 + $0x34] sm:$0x4]
      %v2712 = vsel %vm2671, %v2645, %v2711
      %2713 = vst [vmem:[#allocation12 + $0x34] sm:$0x4] %v2712
      %v2714 = vld [vmem:[#allocation12 + $0x38] sm:$0x4]
      %v2715 = vsel %vm2671, %v2649, %v2714
      %2716 = vst [vmem:[#allocation12 + $0x38] sm:$0x4] %v2715
      %v2717 = vld [vmem:[#allocation12 + $0x3c] sm:$0x4]
      %v2718 = vsel %vm2671, %v2653, %v2717
      %2719 = vst [vmem:[#allocation12 + $0x3c] sm:$0x4] %v2718
      %v2720 = vld [vmem:[%s1332] sm:$0xff]
      %v2721 = vld [vmem:[%s1332 + $0x8] sm:$0xff]
      %v2722 = vld [vmem:[#allocation11 + $0x6] sm:$0x1]
      %v2723 = vperm.slane %v2722, 0
      %v2724 = vadd.f32 %v2720, %v2723
      %v2725 = vadd.f32 %v2721, %v2723
      %v2726 = vpack.c.bf16 %v2724, %v2724
      %v2727 = vpack.c.bf16 %v2725, %v2725
      %v2730 = vrot.slane %v2726, 3
      %v2731 = vrot.slane %v2727, 3
      %v2734 = vsel %vm1525, %v2726, %v2730
      %v2736 = vsel %vm1530, %v2726, %v2730
      %v2738 = vrot.slane %v2736, 1
      %v2739 = vsel %vm1534, %v2726, %v2730
      %v2741 = vrot.slane %v2739, 2
      %v2742 = vsel %vm1538, %v2726, %v2730
      %v2744 = vrot.slane %v2742, 3
      %v2747 = vsel %vm1525, %v2727, %v2731
      %v2749 = vsel %vm1530, %v2727, %v2731
      %v2751 = vrot.slane %v2749, 1
      %v2752 = vsel %vm1534, %v2727, %v2731
      %v2754 = vrot.slane %v2752, 2
      %v2755 = vsel %vm1538, %v2727, %v2731
      %v2757 = vrot.slane %v2755, 3
      %v2758 = vunpack.i.l.s16 %v2734
      %v2759 = vunpack.i.h.s16 %v2734
      %v2760 = vunpack.i.l.s16 %v2738
      %v2761 = vunpack.i.h.s16 %v2738
      %v2762 = vunpack.i.l.s16 %v2741
      %v2763 = vunpack.i.h.s16 %v2741
      %v2764 = vunpack.i.l.s16 %v2744
      %v2765 = vunpack.i.h.s16 %v2744
      %v2766 = vunpack.i.l.s16 %v2747
      %v2767 = vunpack.i.h.s16 %v2747
      %v2768 = vunpack.i.l.s16 %v2751
      %v2769 = vunpack.i.h.s16 %v2751
      %v2770 = vunpack.i.l.s16 %v2754
      %v2771 = vunpack.i.h.s16 %v2754
      %v2772 = vunpack.i.l.s16 %v2757
      %v2773 = vunpack.i.h.s16 %v2757
      %v2774 = vpack.i.b16 %v2758, %v2758
      %v2775 = vpack.i.b16 %v2759, %v2759
      %v2776 = vpack.i.b16 %v2760, %v2760
      %v2777 = vpack.i.b16 %v2761, %v2761
      %v2778 = vpack.i.b16 %v2762, %v2762
      %v2779 = vpack.i.b16 %v2763, %v2763
      %v2780 = vpack.i.b16 %v2764, %v2764
      %v2781 = vpack.i.b16 %v2765, %v2765
      %v2782 = vpack.i.b16 %v2766, %v2766
      %v2783 = vpack.i.b16 %v2767, %v2767
      %v2784 = vpack.i.b16 %v2768, %v2768
      %v2785 = vpack.i.b16 %v2769, %v2769
      %v2786 = vpack.i.b16 %v2770, %v2770
      %v2787 = vpack.i.b16 %v2771, %v2771
      %v2788 = vpack.i.b16 %v2772, %v2772
      %v2789 = vpack.i.b16 %v2773, %v2773
      %v2791 = vunpack.c.l.s4 286326784
      %v2792 = vunpack.c.0.s8 %v2791
      %v2793 = vperm.slane %v2774, %v2792
      %v2795 = vunpack.c.l.s4 286326784
      %v2796 = vunpack.c.0.s8 %v2795
      %v2797 = vperm.slane %v2775, %v2796
      %v2799 = vunpack.c.l.s4 286326784
      %v2800 = vunpack.c.0.s8 %v2799
      %v2801 = vperm.slane %v2776, %v2800
      %v2803 = vunpack.c.l.s4 286326784
      %v2804 = vunpack.c.0.s8 %v2803
      %v2805 = vperm.slane %v2777, %v2804
      %v2807 = vunpack.c.l.s4 286326784
      %v2808 = vunpack.c.0.s8 %v2807
      %v2809 = vperm.slane %v2778, %v2808
      %v2811 = vunpack.c.l.s4 286326784
      %v2812 = vunpack.c.0.s8 %v2811
      %v2813 = vperm.slane %v2779, %v2812
      %v2815 = vunpack.c.l.s4 286326784
      %v2816 = vunpack.c.0.s8 %v2815
      %v2817 = vperm.slane %v2780, %v2816
      %v2819 = vunpack.c.l.s4 286326784
      %v2820 = vunpack.c.0.s8 %v2819
      %v2821 = vperm.slane %v2781, %v2820
      %v2823 = vunpack.c.l.s4 286326784
      %v2824 = vunpack.c.0.s8 %v2823
      %v2825 = vperm.slane %v2782, %v2824
      %v2827 = vunpack.c.l.s4 286326784
      %v2828 = vunpack.c.0.s8 %v2827
      %v2829 = vperm.slane %v2783, %v2828
      %v2831 = vunpack.c.l.s4 286326784
      %v2832 = vunpack.c.0.s8 %v2831
      %v2833 = vperm.slane %v2784, %v2832
      %v2835 = vunpack.c.l.s4 286326784
      %v2836 = vunpack.c.0.s8 %v2835
      %v2837 = vperm.slane %v2785, %v2836
      %v2839 = vunpack.c.l.s4 286326784
      %v2840 = vunpack.c.0.s8 %v2839
      %v2841 = vperm.slane %v2786, %v2840
      %v2843 = vunpack.c.l.s4 286326784
      %v2844 = vunpack.c.0.s8 %v2843
      %v2845 = vperm.slane %v2787, %v2844
      %v2847 = vunpack.c.l.s4 286326784
      %v2848 = vunpack.c.0.s8 %v2847
      %v2849 = vperm.slane %v2788, %v2848
      %v2851 = vunpack.c.l.s4 286326784
      %v2852 = vunpack.c.0.s8 %v2851
      %v2853 = vperm.slane %v2789, %v2852
      %vm2870 = vcmask 1043459
      %vm2871 = vsmask.f32 3328
      %vm2872 = vmand %vm2870, %vm2871
      %v2873 = vld [vmem:[#allocation12] sm:$0x8]
      %v2874 = vsel %vm2872, %v2793, %v2873
      %2875 = vst [vmem:[#allocation12] sm:$0x8] %v2874
      %v2876 = vld [vmem:[#allocation12 + $0x4] sm:$0x8]
      %v2877 = vsel %vm2872, %v2797, %v2876
      %2878 = vst [vmem:[#allocation12 + $0x4] sm:$0x8] %v2877
      %v2879 = vld [vmem:[#allocation12 + $0x8] sm:$0x8]
      %v2880 = vsel %vm2872, %v2801, %v2879
      %2881 = vst [vmem:[#allocation12 + $0x8] sm:$0x8] %v2880
      %v2882 = vld [vmem:[#allocation12 + $0xc] sm:$0x8]
      %v2883 = vsel %vm2872, %v2805, %v2882
      %2884 = vst [vmem:[#allocation12 + $0xc] sm:$0x8] %v2883
      %v2885 = vld [vmem:[#allocation12 + $0x10] sm:$0x8]
      %v2886 = vsel %vm2872, %v2809, %v2885
      %2887 = vst [vmem:[#allocation12 + $0x10] sm:$0x8] %v2886
      %v2888 = vld [vmem:[#allocation12 + $0x14] sm:$0x8]
      %v2889 = vsel %vm2872, %v2813, %v2888
      %2890 = vst [vmem:[#allocation12 + $0x14] sm:$0x8] %v2889
      %v2891 = vld [vmem:[#allocation12 + $0x18] sm:$0x8]
      %v2892 = vsel %vm2872, %v2817, %v2891
      %2893 = vst [vmem:[#allocation12 + $0x18] sm:$0x8] %v2892
      %v2894 = vld [vmem:[#allocation12 + $0x1c] sm:$0x8]
      %v2895 = vsel %vm2872, %v2821, %v2894
      %2896 = vst [vmem:[#allocation12 + $0x1c] sm:$0x8] %v2895
      %v2897 = vld [vmem:[#allocation12 + $0x20] sm:$0x8]
      %v2898 = vsel %vm2872, %v2825, %v2897
      %2899 = vst [vmem:[#allocation12 + $0x20] sm:$0x8] %v2898
      %v2900 = vld [vmem:[#allocation12 + $0x24] sm:$0x8]
      %v2901 = vsel %vm2872, %v2829, %v2900
      %2902 = vst [vmem:[#allocation12 + $0x24] sm:$0x8] %v2901
      %v2903 = vld [vmem:[#allocation12 + $0x28] sm:$0x8]
      %v2904 = vsel %vm2872, %v2833, %v2903
      %2905 = vst [vmem:[#allocation12 + $0x28] sm:$0x8] %v2904
      %v2906 = vld [vmem:[#allocation12 + $0x2c] sm:$0x8]
      %v2907 = vsel %vm2872, %v2837, %v2906
      %2908 = vst [vmem:[#allocation12 + $0x2c] sm:$0x8] %v2907
      %v2909 = vld [vmem:[#allocation12 + $0x30] sm:$0x8]
      %v2910 = vsel %vm2872, %v2841, %v2909
      %2911 = vst [vmem:[#allocation12 + $0x30] sm:$0x8] %v2910
      %v2912 = vld [vmem:[#allocation12 + $0x34] sm:$0x8]
      %v2913 = vsel %vm2872, %v2845, %v2912
      %2914 = vst [vmem:[#allocation12 + $0x34] sm:$0x8] %v2913
      %v2915 = vld [vmem:[#allocation12 + $0x38] sm:$0x8]
      %v2916 = vsel %vm2872, %v2849, %v2915
      %2917 = vst [vmem:[#allocation12 + $0x38] sm:$0x8] %v2916
      %v2918 = vld [vmem:[#allocation12 + $0x3c] sm:$0x8]
      %v2919 = vsel %vm2872, %v2853, %v2918
      %2920 = vst [vmem:[#allocation12 + $0x3c] sm:$0x8] %v2919
      %v2921 = vld [vmem:[%s1503] sm:$0xff]
      %v2922 = vld [vmem:[%s1503 + $0x8] sm:$0xff]
      %v2923 = vld [vmem:[#allocation11 + $0x7] sm:$0x1]
      %v2924 = vperm.slane %v2923, 0
      %v2925 = vadd.f32 %v2921, %v2924
      %v2926 = vadd.f32 %v2922, %v2924
      %v2927 = vpack.c.bf16 %v2925, %v2925
      %v2928 = vpack.c.bf16 %v2926, %v2926
      %v2931 = vrot.slane %v2927, 3
      %v2932 = vrot.slane %v2928, 3
      %v2935 = vsel %vm1525, %v2927, %v2931
      %v2937 = vsel %vm1530, %v2927, %v2931
      %v2939 = vrot.slane %v2937, 1
      %v2940 = vsel %vm1534, %v2927, %v2931
      %v2942 = vrot.slane %v2940, 2
      %v2943 = vsel %vm1538, %v2927, %v2931
      %v2945 = vrot.slane %v2943, 3
      %v2948 = vsel %vm1525, %v2928, %v2932
      %v2950 = vsel %vm1530, %v2928, %v2932
      %v2952 = vrot.slane %v2950, 1
      %v2953 = vsel %vm1534, %v2928, %v2932
      %v2955 = vrot.slane %v2953, 2
      %v2956 = vsel %vm1538, %v2928, %v2932
      %v2958 = vrot.slane %v2956, 3
      %v2959 = vunpack.i.l.s16 %v2935
      %v2960 = vunpack.i.h.s16 %v2935
      %v2961 = vunpack.i.l.s16 %v2939
      %v2962 = vunpack.i.h.s16 %v2939
      %v2963 = vunpack.i.l.s16 %v2942
      %v2964 = vunpack.i.h.s16 %v2942
      %v2965 = vunpack.i.l.s16 %v2945
      %v2966 = vunpack.i.h.s16 %v2945
      %v2967 = vunpack.i.l.s16 %v2948
      %v2968 = vunpack.i.h.s16 %v2948
      %v2969 = vunpack.i.l.s16 %v2952
      %v2970 = vunpack.i.h.s16 %v2952
      %v2971 = vunpack.i.l.s16 %v2955
      %v2972 = vunpack.i.h.s16 %v2955
      %v2973 = vunpack.i.l.s16 %v2958
      %v2974 = vunpack.i.h.s16 %v2958
      %v2975 = vpack.i.b16 %v2959, %v2959
      %v2976 = vpack.i.b16 %v2960, %v2960
      %v2977 = vpack.i.b16 %v2961, %v2961
      %v2978 = vpack.i.b16 %v2962, %v2962
      %v2979 = vpack.i.b16 %v2963, %v2963
      %v2980 = vpack.i.b16 %v2964, %v2964
      %v2981 = vpack.i.b16 %v2965, %v2965
      %v2982 = vpack.i.b16 %v2966, %v2966
      %v2983 = vpack.i.b16 %v2967, %v2967
      %v2984 = vpack.i.b16 %v2968, %v2968
      %v2985 = vpack.i.b16 %v2969, %v2969
      %v2986 = vpack.i.b16 %v2970, %v2970
      %v2987 = vpack.i.b16 %v2971, %v2971
      %v2988 = vpack.i.b16 %v2972, %v2972
      %v2989 = vpack.i.b16 %v2973, %v2973
      %v2990 = vpack.i.b16 %v2974, %v2974
      %v2992 = vunpack.c.l.s4 286326784
      %v2993 = vunpack.c.0.s8 %v2992
      %v2994 = vperm.slane %v2975, %v2993
      %v2996 = vunpack.c.l.s4 286326784
      %v2997 = vunpack.c.0.s8 %v2996
      %v2998 = vperm.slane %v2976, %v2997
      %v3000 = vunpack.c.l.s4 286326784
      %v3001 = vunpack.c.0.s8 %v3000
      %v3002 = vperm.slane %v2977, %v3001
      %v3004 = vunpack.c.l.s4 286326784
      %v3005 = vunpack.c.0.s8 %v3004
      %v3006 = vperm.slane %v2978, %v3005
      %v3008 = vunpack.c.l.s4 286326784
      %v3009 = vunpack.c.0.s8 %v3008
      %v3010 = vperm.slane %v2979, %v3009
      %v3012 = vunpack.c.l.s4 286326784
      %v3013 = vunpack.c.0.s8 %v3012
      %v3014 = vperm.slane %v2980, %v3013
      %v3016 = vunpack.c.l.s4 286326784
      %v3017 = vunpack.c.0.s8 %v3016
      %v3018 = vperm.slane %v2981, %v3017
      %v3020 = vunpack.c.l.s4 286326784
      %v3021 = vunpack.c.0.s8 %v3020
      %v3022 = vperm.slane %v2982, %v3021
      %v3024 = vunpack.c.l.s4 286326784
      %v3025 = vunpack.c.0.s8 %v3024
      %v3026 = vperm.slane %v2983, %v3025
      %v3028 = vunpack.c.l.s4 286326784
      %v3029 = vunpack.c.0.s8 %v3028
      %v3030 = vperm.slane %v2984, %v3029
      %v3032 = vunpack.c.l.s4 286326784
      %v3033 = vunpack.c.0.s8 %v3032
      %v3034 = vperm.slane %v2985, %v3033
      %v3036 = vunpack.c.l.s4 286326784
      %v3037 = vunpack.c.0.s8 %v3036
      %v3038 = vperm.slane %v2986, %v3037
      %v3040 = vunpack.c.l.s4 286326784
      %v3041 = vunpack.c.0.s8 %v3040
      %v3042 = vperm.slane %v2987, %v3041
      %v3044 = vunpack.c.l.s4 286326784
      %v3045 = vunpack.c.0.s8 %v3044
      %v3046 = vperm.slane %v2988, %v3045
      %v3048 = vunpack.c.l.s4 286326784
      %v3049 = vunpack.c.0.s8 %v3048
      %v3050 = vperm.slane %v2989, %v3049
      %v3052 = vunpack.c.l.s4 286326784
      %v3053 = vunpack.c.0.s8 %v3052
      %v3054 = vperm.slane %v2990, %v3053
      %vm3071 = vsmask.f32 7950
      %vm3072 = vmand %vm2870, %vm3071
      %v3073 = vld [vmem:[#allocation12] sm:$0x8]
      %v3074 = vsel %vm3072, %v2994, %v3073
      %3075 = vst [vmem:[#allocation12] sm:$0x8] %v3074
      %v3076 = vld [vmem:[#allocation12 + $0x4] sm:$0x8]
      %v3077 = vsel %vm3072, %v2998, %v3076
      %3078 = vst [vmem:[#allocation12 + $0x4] sm:$0x8] %v3077
      %v3079 = vld [vmem:[#allocation12 + $0x8] sm:$0x8]
      %v3080 = vsel %vm3072, %v3002, %v3079
      %3081 = vst [vmem:[#allocation12 + $0x8] sm:$0x8] %v3080
      %v3082 = vld [vmem:[#allocation12 + $0xc] sm:$0x8]
      %v3083 = vsel %vm3072, %v3006, %v3082
      %3084 = vst [vmem:[#allocation12 + $0xc] sm:$0x8] %v3083
      %v3085 = vld [vmem:[#allocation12 + $0x10] sm:$0x8]
      %v3086 = vsel %vm3072, %v3010, %v3085
      %3087 = vst [vmem:[#allocation12 + $0x10] sm:$0x8] %v3086
      %v3088 = vld [vmem:[#allocation12 + $0x14] sm:$0x8]
      %v3089 = vsel %vm3072, %v3014, %v3088
      %3090 = vst [vmem:[#allocation12 + $0x14] sm:$0x8] %v3089
      %v3091 = vld [vmem:[#allocation12 + $0x18] sm:$0x8]
      %v3092 = vsel %vm3072, %v3018, %v3091
      %3093 = vst [vmem:[#allocation12 + $0x18] sm:$0x8] %v3092
      %v3094 = vld [vmem:[#allocation12 + $0x1c] sm:$0x8]
      %v3095 = vsel %vm3072, %v3022, %v3094
      %3096 = vst [vmem:[#allocation12 + $0x1c] sm:$0x8] %v3095
      %v3097 = vld [vmem:[#allocation12 + $0x20] sm:$0x8]
      %v3098 = vsel %vm3072, %v3026, %v3097
      %3099 = vst [vmem:[#allocation12 + $0x20] sm:$0x8] %v3098
      %v3100 = vld [vmem:[#allocation12 + $0x24] sm:$0x8]
      %v3101 = vsel %vm3072, %v3030, %v3100
      %3102 = vst [vmem:[#allocation12 + $0x24] sm:$0x8] %v3101
      %v3103 = vld [vmem:[#allocation12 + $0x28] sm:$0x8]
      %v3104 = vsel %vm3072, %v3034, %v3103
      %3105 = vst [vmem:[#allocation12 + $0x28] sm:$0x8] %v3104
      %v3106 = vld [vmem:[#allocation12 + $0x2c] sm:$0x8]
      %v3107 = vsel %vm3072, %v3038, %v3106
      %3108 = vst [vmem:[#allocation12 + $0x2c] sm:$0x8] %v3107
      %v3109 = vld [vmem:[#allocation12 + $0x30] sm:$0x8]
      %v3110 = vsel %vm3072, %v3042, %v3109
      %3111 = vst [vmem:[#allocation12 + $0x30] sm:$0x8] %v3110
      %v3112 = vld [vmem:[#allocation12 + $0x34] sm:$0x8]
      %v3113 = vsel %vm3072, %v3046, %v3112
      %3114 = vst [vmem:[#allocation12 + $0x34] sm:$0x8] %v3113
      %v3115 = vld [vmem:[#allocation12 + $0x38] sm:$0x8]
      %v3116 = vsel %vm3072, %v3050, %v3115
      %3117 = vst [vmem:[#allocation12 + $0x38] sm:$0x8] %v3116
      %v3118 = vld [vmem:[#allocation12 + $0x3c] sm:$0x8]
      %v3119 = vsel %vm3072, %v3054, %v3118
      %3120 = vst [vmem:[#allocation12 + $0x3c] sm:$0x8] %v3119
    $region49: #{tpu_custom_call.1} parent=1 // pred_fallthru
      _
    // Predicated region
    $region50: #{tpu_custom_call.1} parent=1 // pred_check
      _
    $region51: #{tpu_custom_call.1} parent=1 // pred_check_branch
      %3122 = sbr.rel (0) target = $region53
    $region52: #{tpu_custom_call.1} parent=1 // pred_region
      %3124 = vsyncadd [#allocation5], 0
      %s3125 = sshll.u32 [#allocation12], 4
      %s3126 = int_to_ptr.vmem [resolvable:$true] %s3125
      %s3127 = sshll.u32 %s5, 4
      %s3128 = int_to_ptr.hbm [resolvable:$true] %s3127
      %3133 = dma.vmem_to_hbm [thread:$0]  %s3126, 1024, %s3128, [#allocation5], 64, 64, 4
    $region53: #{tpu_custom_call.1} parent=1 // pred_fallthru
      _
    // Predicated region
    $region54: #{tpu_custom_call.1} parent=1 // pred_check
      _
    $region55: #{tpu_custom_call.1} parent=1 // pred_check_branch
      %3135 = sbr.rel (0) target = $region57
    $region56: #{tpu_custom_call.1} parent=1 // pred_region
      %3137 = dma.done [#allocation5], 1024
    $region57: #{tpu_custom_call.1} parent=1 // pred_fallthru
      _
    %3138 = vsyncpa [#allocation4], 1
    %3139 = vsyncpa [#allocation7], 1
    %3140 = vsyncpa [#allocation10], 1
    %3141 = vsyncpa [#allocation5], 1

</llo_original>
